<compile_context>
chip_gen: v6e
topology: v6e:2x2x1
jax: 0.10.0
libtpu: 0.0.40
codegen_flags: <defaults>
</compile_context>

<pallas_src>
import functools

import jax
import jax.numpy as jnp
from jax.experimental import pallas as pl
from jax.experimental.pallas import tpu as pltpu

BN_EPS = 1e-5

_PARALLEL_1D = pltpu.CompilerParams(dimension_semantics=("parallel",))
_PARALLEL_2D = pltpu.CompilerParams(dimension_semantics=("parallel", "parallel"))


def _pick_row_cap():
    """Row-tile cap per TPU generation: 1024 on 128-MiB-VMEM chips, 512 otherwise."""
    try:
        info = pltpu.get_tpu_info()
        vmem = getattr(info, "vmem_capacity_bytes", 0)
        if vmem and vmem >= (100 << 20):
            return 1024
    except Exception:
        pass
    return 512


_ROW_TILE_CAP = _pick_row_cap()


def _row_tiles(m, cap=None):
    """Pick a row tile (full extent if small, else cap) and grid size."""
    cap = _ROW_TILE_CAP if cap is None else cap
    if m <= cap:
        return m, 1
    return cap, pl.cdiv(m, cap)


# ----------------------------- Pallas kernels ------------------------------

def _matmul_bias_relu_kernel(x_ref, w_ref, b_ref, o_ref):
    # conv0 + folded norm0 + relu0:  relu(x @ W' + b), f32 accumulate, bf16 store.
    y = jnp.dot(x_ref[...], w_ref[...], preferred_element_type=jnp.float32)
    o_ref[...] = jnp.maximum(y + b_ref[...], 0.0).astype(o_ref.dtype)


def pallas_matmul_bias_relu(x_bf16, w_bf16, bias_f32):
    M, K = x_bf16.shape
    _, N = w_bf16.shape
    tm, gm = _row_tiles(M)
    return pl.pallas_call(
        _matmul_bias_relu_kernel,
        out_shape=jax.ShapeDtypeStruct((M, N), jnp.bfloat16),
        grid=(gm,),
        in_specs=[pl.BlockSpec((tm, K), lambda i: (i, 0)),
                  pl.BlockSpec((K, N), lambda i: (0, 0)),
                  pl.BlockSpec((1, N), lambda i: (0, 0))],
        out_specs=pl.BlockSpec((tm, N), lambda i: (i, 0)),
        compiler_params=_PARALLEL_1D,
    )(x_bf16, w_bf16, bias_f32)


def _maxpool3x3s2_kernel(a_ref, b_ref, c_ref, d_ref, o_ref):
    # MaxPool2d(3, stride=2, padding=1) on a zero-padded, post-ReLU map.  Inputs are the
    # four (row, col) parities of the padded map, so every window tap is a unit-stride
    # slice (no strided loads needed):
    #   window(h, w) = {A[h,w], B[h,w], A[h,w+1],
    #                   C[h,w], D[h,w], C[h,w+1],
    #                   A[h+1,w], B[h+1,w], A[h+1,w+1]}
    hm, wm = o_ref.shape[1], o_ref.shape[2]
    a = a_ref[0]
    b = b_ref[0]
    c = c_ref[0]
    d = d_ref[0]
    r = jnp.maximum(a[:hm, :wm, :], b[:hm, :, :])
    r = jnp.maximum(r, a[:hm, 1:, :])
    r = jnp.maximum(r, c[:, :wm, :])
    r = jnp.maximum(r, d)
    r = jnp.maximum(r, c[:, 1:, :])
    r = jnp.maximum(r, a[1:, :wm, :])
    r = jnp.maximum(r, b[1:, :, :])
    r = jnp.maximum(r, a[1:, 1:, :])
    o_ref[0] = r


def pallas_maxpool3x3s2(a, b, c, d, Hm, Wm):
    """a:(N,Hm+1,Wm+1,C) b:(N,Hm+1,Wm,C) c:(N,Hm,Wm+1,C) d:(N,Hm,Wm,C) -> (N,Hm,Wm,C)."""
    N = a.shape[0]
    C = a.shape[-1]
    return pl.pallas_call(
        _maxpool3x3s2_kernel,
        out_shape=jax.ShapeDtypeStruct((N, Hm, Wm, C), jnp.bfloat16),
        grid=(N,),
        in_specs=[pl.BlockSpec((1, Hm + 1, Wm + 1, C), lambda n: (n, 0, 0, 0)),
                  pl.BlockSpec((1, Hm + 1, Wm, C), lambda n: (n, 0, 0, 0)),
                  pl.BlockSpec((1, Hm, Wm + 1, C), lambda n: (n, 0, 0, 0)),
                  pl.BlockSpec((1, Hm, Wm, C), lambda n: (n, 0, 0, 0))],
        out_specs=pl.BlockSpec((1, Hm, Wm, C), lambda n: (n, 0, 0, 0)),
        compiler_params=_PARALLEL_1D,
    )(a, b, c, d)


def _bneck_kernel(x_ref, c_ref, w_ref, b_ref, o_ref):
    # norm1 + relu1 + conv1(1x1) + norm2 + relu2, with all BN scales folded into W:
    #   relu( relu(x + shift1) @ W' + bias2 )
    h = jnp.maximum(x_ref[...].astype(jnp.float32) + c_ref[...], 0.0)
    y = jnp.dot(h.astype(jnp.bfloat16), w_ref[...], preferred_element_type=jnp.float32)
    o_ref[...] = jnp.maximum(y + b_ref[...], 0.0).astype(o_ref.dtype)


def pallas_dense_bottleneck(x_bf16, pre_shift, w_bf16, bias_f32):
    M, K = x_bf16.shape
    _, B = w_bf16.shape
    tm, gm = _row_tiles(M)
    return pl.pallas_call(
        _bneck_kernel,
        out_shape=jax.ShapeDtypeStruct((M, B), jnp.bfloat16),
        grid=(gm,),
        in_specs=[pl.BlockSpec((tm, K), lambda i: (i, 0)),
                  pl.BlockSpec((1, K), lambda i: (0, 0)),
                  pl.BlockSpec((K, B), lambda i: (0, 0)),
                  pl.BlockSpec((1, B), lambda i: (0, 0))],
        out_specs=pl.BlockSpec((tm, B), lambda i: (i, 0)),
        compiler_params=_PARALLEL_1D,
    )(x_bf16, pre_shift, w_bf16, bias_f32)


def _conv3x3_kernel(x_ref, w_ref, o_ref, *, Wp, L, G):
    # 3x3 conv (pad 1) on the zero-padded, spatially flattened feature map.  The three
    # kw taps of each kh row are grouped into one (Cb, 3*G) matmul; the column blocks
    # are then combined with sublane-shifted adds.  Rows r = h*Wp + w with w >= W are
    # garbage and are sliced away by the caller.
    acc = jnp.zeros((L + 2, 3 * G), jnp.float32)
    for dh in range(3):
        acc = acc + jnp.dot(x_ref[0, dh * Wp:dh * Wp + L + 2, :], w_ref[dh],
                            preferred_element_type=jnp.float32)
    y = acc[0:L, 0:G] + acc[1:L + 1, G:2 * G] + acc[2:L + 2, 2 * G:3 * G]
    o_ref[0] = y.astype(o_ref.dtype)


def pallas_conv3x3(hp_flat_bf16, w3_bf16, H, W):
    """hp_flat: (N, (H+3)*(W+2), Cb) zero-padded flattened rows; w3: (3, Cb, 3*G)."""
    N, Lp, Cb = hp_flat_bf16.shape
    Wp = W + 2
    L = H * Wp
    G3 = w3_bf16.shape[-1]
    G = G3 // 3
    kernel = functools.partial(_conv3x3_kernel, Wp=Wp, L=L, G=G)
    return pl.pallas_call(
        kernel,
        out_shape=jax.ShapeDtypeStruct((N, L, G), jnp.bfloat16),
        grid=(N,),
        in_specs=[pl.BlockSpec((1, Lp, Cb), lambda n: (n, 0, 0)),
                  pl.BlockSpec((3, Cb, G3), lambda n: (0, 0, 0))],
        out_specs=pl.BlockSpec((1, L, G), lambda n: (n, 0, 0)),
        compiler_params=_PARALLEL_1D,
    )(hp_flat_bf16, w3_bf16)


def _transition_kernel(ee_ref, eo_ref, oe_ref, oo_ref, c_ref, w_ref, o_ref):
    # norm + relu + AvgPool2d(2,2) + 1x1 conv, fused.  The 2x2 average is applied to the
    # relu'd activation BEFORE the 1x1 conv (pooling commutes with a pointwise linear
    # map), so the matmul runs on Q = HW/4 rows and no pool matrix is needed.
    s = c_ref[...]
    a = (jnp.maximum(ee_ref[0].astype(jnp.float32) + s, 0.0)
         + jnp.maximum(eo_ref[0].astype(jnp.float32) + s, 0.0)
         + jnp.maximum(oe_ref[0].astype(jnp.float32) + s, 0.0)
         + jnp.maximum(oo_ref[0].astype(jnp.float32) + s, 0.0)) * 0.25
    y = jnp.dot(a.astype(jnp.bfloat16), w_ref[...], preferred_element_type=jnp.float32)
    o_ref[0] = y.astype(o_ref.dtype)


def pallas_transition(ee, eo, oe, oo, shift, w_bf16):
    """Parity views ee/eo/oe/oo: (N, Q, C) -> (N, Q, Cout)."""
    N, Q, C = ee.shape
    Cout = w_bf16.shape[-1]
    tq, gq = _row_tiles(Q)
    par_spec = pl.BlockSpec((1, tq, C), lambda n, q: (n, q, 0))
    return pl.pallas_call(
        _transition_kernel,
        out_shape=jax.ShapeDtypeStruct((N, Q, Cout), jnp.bfloat16),
        grid=(N, gq),
        in_specs=[par_spec, par_spec, par_spec, par_spec,
                  pl.BlockSpec((1, C), lambda n, q: (0, 0)),
                  pl.BlockSpec((C, Cout), lambda n, q: (0, 0))],
        out_specs=pl.BlockSpec((1, tq, Cout), lambda n, q: (n, q, 0)),
        compiler_params=_PARALLEL_2D,
    )(ee, eo, oe, oo, shift, w_bf16)


def _head_kernel(x_ref, c_ref, w_ref, b_ref, o_ref):
    # norm5 + relu + adaptive_avg_pool2d((1,1)) + flatten + [relu: no-op on a mean of
    # non-negative values, dropped] + both Linear heads as one lane-dense matmul.
    h = jnp.maximum(x_ref[0].astype(jnp.float32) + c_ref[0], 0.0)    # (HW, C)
    pooled = jnp.mean(h, axis=0, keepdims=True)                      # (1, C)
    o_ref[0] = jnp.dot(pooled.astype(jnp.bfloat16), w_ref[...],
                       preferred_element_type=jnp.float32) + b_ref[...]


def pallas_head(feats, shift5, w_comb, b_comb):
    N, HW, C = feats.shape
    P = w_comb.shape[1]
    out = pl.pallas_call(
        _head_kernel,
        out_shape=jax.ShapeDtypeStruct((N, 1, P), jnp.float32),
        grid=(N,),
        in_specs=[pl.BlockSpec((1, HW, C), lambda n: (n, 0, 0)),
                  pl.BlockSpec((1, 1, C), lambda n: (0, 0, 0)),
                  pl.BlockSpec((C, P), lambda n: (0, 0)),
                  pl.BlockSpec((1, P), lambda n: (0, 0))],
        out_specs=pl.BlockSpec((1, 1, P), lambda n: (n, 0, 0)),
        compiler_params=_PARALLEL_1D,
    )(feats, shift5, w_comb, b_comb)
    return out.reshape(N, P)


# ------------------------------- JAX glue ----------------------------------

def im2col(x, k, stride, pad):
    """x: (N,H,W,C) NHWC -> patches (N,Ho,Wo,k*k*C) ordered (kh, kw, cin)."""
    N, H, W, C = x.shape
    xp = jnp.pad(x, ((0, 0), (pad, pad), (pad, pad), (0, 0)))
    Ho = (H + 2 * pad - k) // stride + 1
    Wo = (W + 2 * pad - k) // stride + 1
    cols = []
    for di in range(k):
        for dj in range(k):
            cols.append(xp[:, di:di + stride * (Ho - 1) + 1:stride,
                           dj:dj + stride * (Wo - 1) + 1:stride, :])
    return jnp.concatenate(cols, axis=-1), Ho, Wo


def kaiming_normal(key, shape, fan_in):
    return jax.random.normal(key, shape, jnp.float32) * jnp.sqrt(2.0 / fan_in)


def bn_affine(c):
    # eval-mode BN folded to affine: gamma=1, beta=0, running_mean=0, running_var=1
    scale = jnp.full((1, c), 1.0 / jnp.sqrt(1.0 + BN_EPS), jnp.float32)
    shift = jnp.zeros((1, c), jnp.float32)
    return scale, shift


def init_params(key, growth_rate, block_config, num_init_features, bn_size, num_classes):
    keys = iter(jax.random.split(key, 256))
    params = {}

    # conv0: 7x7 s2 p3 (no bias) followed by norm0+relu0; fold BN0 into W columns + bias.
    w0 = kaiming_normal(next(keys), (7 * 7 * 3, num_init_features), fan_in=3 * 7 * 7)
    s0, b0 = bn_affine(num_init_features)
    params["conv0_w"] = (w0 * s0).astype(jnp.bfloat16)
    params["conv0_b"] = b0

    num_features = num_init_features
    blocks = []
    for bi, num_layers in enumerate(block_config):
        layers = []
        for li in range(num_layers):
            cin = num_features + li * growth_rate
            bneck = bn_size * growth_rate
            s1, b1 = bn_affine(cin)
            s2, b2 = bn_affine(bneck)
            w1 = kaiming_normal(next(keys), (cin, bneck), fan_in=cin)  # 1x1 conv
            # relu(s1*x+b1)@W1 == relu(x + b1/s1) @ (diag(s1) W1)  (s1 > 0),
            # then fold norm2 (post-conv affine) into columns + bias.
            # 3x3 conv weights grouped per kh row: (3, Cb, 3*G) with kw-major columns.
            w9 = kaiming_normal(next(keys), (3, 3, bneck, growth_rate), fan_in=9 * bneck)
            w2 = jnp.transpose(w9, (0, 2, 1, 3)).reshape(3, bneck, 3 * growth_rate)
            layers.append({
                "pre_shift": b1 / s1,
                "w1": (w1 * s1.reshape(-1, 1) * s2).astype(jnp.bfloat16),
                "bias": b2,
                "w2": w2.astype(jnp.bfloat16),
            })
        num_features += num_layers * growth_rate
        block = {"layers": layers}
        if bi != len(block_config) - 1:
            st, bt = bn_affine(num_features)
            wt = kaiming_normal(next(keys), (num_features, num_features // 2),
                                fan_in=num_features)
            block["trans_shift"] = bt / st
            block["trans_w"] = (wt * st.reshape(-1, 1)).astype(jnp.bfloat16)
            num_features //= 2
        blocks.append(block)
    params["blocks"] = blocks

    # norm5 + relu + GAP + two Linear heads -> one lane-dense (C, 128)-padded matmul.
    # TODO(synk): head Linear init uses normal/sqrt(C) rather than PyTorch's
    # kaiming_uniform; biases are 0 as in the module's init loop.
    s5, b5 = bn_affine(num_features)
    params["head_shift"] = (b5 / s5).reshape(1, 1, num_features)
    cls_w = jax.random.normal(next(keys), (num_features, num_classes),
                              jnp.float32) / jnp.sqrt(num_features)
    aux_w = jax.random.normal(next(keys), (num_features, num_classes),
                              jnp.float32) / jnp.sqrt(num_features)
    w_comb = jnp.concatenate([cls_w, aux_w], axis=1) * s5.reshape(-1, 1)
    pad_cols = (-2 * num_classes) % 128
    params["head_w"] = jnp.pad(w_comb, ((0, 0), (0, pad_cols))).astype(jnp.bfloat16)
    params["head_b"] = jnp.zeros((1, 2 * num_classes + pad_cols), jnp.float32)
    return params


@functools.partial(jax.jit, static_argnames=("num_classes",))
def forward(params, x_nchw, num_classes):
    # NCHW -> NHWC, bf16 before im2col so the inflated patch matrix is half-width in HBM.
    x = jnp.transpose(x_nchw, (0, 2, 3, 1)).astype(jnp.bfloat16)
    N = x.shape[0]

    # conv0 (7x7, s2, p3) + norm0 + relu0 in one fused matmul kernel.
    patches, Ho, Wo = im2col(x, 7, 2, 3)
    y = pallas_matmul_bias_relu(patches.reshape(N * Ho * Wo, -1),
                                params["conv0_w"], params["conv0_b"])
    C0 = y.shape[-1]
    y = y.reshape(N, Ho, Wo, C0)

    # pool0: MaxPool2d(3, stride=2, padding=1).  Zero padding is exact because the map
    # is post-ReLU (>= 0) and every window holds at least one valid pixel.  The four
    # parities of the padded map are cheap XLA views; the kernel fuses the 9-tap max.
    Hm = (Ho - 1) // 2 + 1
    Wm = (Wo - 1) // 2 + 1
    yp = jnp.pad(y, ((0, 0), (1, 1), (1, 1), (0, 0)))
    pa = yp[:, 0::2, 0::2, :][:, :Hm + 1, :Wm + 1, :]
    pb = yp[:, 0::2, 1::2, :][:, :Hm + 1, :Wm, :]
    pc = yp[:, 1::2, 0::2, :][:, :Hm, :Wm + 1, :]
    pd = yp[:, 1::2, 1::2, :][:, :Hm, :Wm, :]
    y = pallas_maxpool3x3s2(pa, pb, pc, pd, Hm, Wm)

    # dense blocks (+ transitions)
    for block in params["blocks"]:
        feats = [y]
        for lp in block["layers"]:
            xcat = jnp.concatenate(feats, axis=-1)               # torch.cat(inputs, 1)
            Nb, H, W, Cin = xcat.shape
            # norm1+relu1+conv1(1x1)+norm2+relu2 fused (bf16 output for the 3x3 conv)
            h = pallas_dense_bottleneck(xcat.reshape(Nb * H * W, Cin),
                                        lp["pre_shift"], lp["w1"], lp["bias"])
            B = h.shape[-1]
            Wp = W + 2
            hp = jnp.pad(h.reshape(Nb, H, W, B), ((0, 0), (1, 2), (1, 1), (0, 0)))
            new = pallas_conv3x3(hp.reshape(Nb, (H + 3) * Wp, B), lp["w2"], H, W)
            new = new.reshape(Nb, H, Wp, -1)[:, :, :W, :]        # drop garbage columns
            feats.append(new)                                    # drop_rate=0 -> no dropout
        y = jnp.concatenate(feats, axis=-1)
        if "trans_w" in block:
            Nb, H, W, C = y.shape
            H2, W2 = H // 2, W // 2                              # AvgPool2d(2,2) floors
            ee = y[:, 0:2 * H2:2, 0:2 * W2:2, :].reshape(Nb, H2 * W2, C)
            eo = y[:, 0:2 * H2:2, 1:2 * W2:2, :].reshape(Nb, H2 * W2, C)
            oe = y[:, 1:2 * H2:2, 0:2 * W2:2, :].reshape(Nb, H2 * W2, C)
            oo = y[:, 1:2 * H2:2, 1:2 * W2:2, :].reshape(Nb, H2 * W2, C)
            y = pallas_transition(ee, eo, oe, oo,
                                  block["trans_shift"], block["trans_w"])
            y = y.reshape(Nb, H2, W2, -1)

    # head: norm5 + relu + GAP + flatten + (relu no-op) + classifier/aux_classifier
    Nb, H, W, C = y.shape
    out = pallas_head(y.reshape(Nb, H * W, C), params["head_shift"],
                      params["head_w"], params["head_b"])
    return out[:, :num_classes], out[:, num_classes:2 * num_classes]


if __name__ == "__main__":
    key = jax.random.PRNGKey(0)
    pkey, xkey = jax.random.split(key)

    # Small DenseNet-BC configuration consistent with the module's constructor.
    growth_rate = 8
    block_config = (2, 2)
    num_init_features = 16
    bn_size = 2
    num_classes = 10

    params = init_params(pkey, growth_rate, block_config,
                         num_init_features, bn_size, num_classes)
    x = jax.random.normal(xkey, (2, 3, 32, 32), dtype=jnp.float32)  # NCHW like PyTorch

    out1, out2 = forward(params, x, num_classes)
    jax.block_until_ready((out1, out2))
    assert out1.shape == (2, num_classes) and out2.shape == (2, num_classes)
    assert jnp.all(jnp.isfinite(out1)) and jnp.all(jnp.isfinite(out2))
    print("KERNEL_OK")
</pallas_src>

<mosaic_0001>
module attributes {stable_mosaic.version = 11 : i64} {
  func.func @_matmul_bias_relu_kernel(%arg0: i32, %arg1: memref<512x147xbf16, #tpu.memory_space<vmem>>, %arg2: memref<147x16xbf16, #tpu.memory_space<vmem>>, %arg3: memref<1x16xf32, #tpu.memory_space<vmem>>, %arg4: memref<512x16xbf16, #tpu.memory_space<vmem>>) attributes {dimension_semantics = [#tpu.dimension_semantics<parallel>], iteration_bounds = array<i64: 1>, scalar_prefetch = 0 : i64, scratch_operands = 0 : i64, tpu.core_type = #tpu.core_type<tc>, window_params = [{transform_indices = @transform_0, window_bounds = array<i64: 512, 147>}, {pipeline_mode = #tpu.pipeline_mode<synchronous>, transform_indices = @transform_1, window_bounds = array<i64: 147, 16>}, {pipeline_mode = #tpu.pipeline_mode<synchronous>, transform_indices = @transform_2, window_bounds = array<i64: 1, 16>}, {transform_indices = @transform_3, window_bounds = array<i64: 512, 16>}]} {
    %c0 = arith.constant 0 : index
    %c0_0 = arith.constant 0 : index
    %0 = vector.load %arg1[%c0, %c0_0] : memref<512x147xbf16, #tpu.memory_space<vmem>>, vector<512x147xbf16>
    %c0_1 = arith.constant 0 : index
    %c0_2 = arith.constant 0 : index
    %1 = vector.load %arg2[%c0_1, %c0_2] : memref<147x16xbf16, #tpu.memory_space<vmem>>, vector<147x16xbf16>
    %cst = arith.constant dense<0.000000e+00> : vector<512x16xf32>
    %2 = tpu.matmul %0, %1, %cst {dimension_numbers = #tpu.dot_dimension_numbers<[1], [0], [0], [1], [0, 0, 1, 1], [], []>} : vector<512x147xbf16>, vector<147x16xbf16>, vector<512x16xf32> -> vector<512x16xf32>
    %c0_3 = arith.constant 0 : index
    %c0_4 = arith.constant 0 : index
    %3 = vector.load %arg3[%c0_3, %c0_4] : memref<1x16xf32, #tpu.memory_space<vmem>>, vector<1x16xf32>
    %4 = vector.broadcast %3 : vector<1x16xf32> to vector<512x16xf32>
    %5 = arith.addf %2, %4 : vector<512x16xf32>
    %cst_5 = arith.constant 0.000000e+00 : f32
    %6 = vector.broadcast %cst_5 : f32 to vector<512x16xf32>
    %7 = arith.maximumf %5, %6 : vector<512x16xf32>
    %8 = arith.truncf %7 : vector<512x16xf32> to vector<512x16xbf16>
    %c0_6 = arith.constant 0 : index
    %c0_7 = arith.constant 0 : index
    %9 = vector.load %arg4[%c0_6, %c0_7] : memref<512x16xbf16, #tpu.memory_space<vmem>>, vector<512x16xbf16>
    tpu.vector_store %arg4[%c0_6, %c0_7], %8 {strides = array<i32>} : memref<512x16xbf16, #tpu.memory_space<vmem>>, vector<512x16xbf16>,
    return
  }
  func.func @transform_0(%arg0: i32) -> (i32, i32) {
    %c0_i32 = arith.constant 0 : i32
    %c0_i32_0 = arith.constant 0 : i32
    return %arg0, %c0_i32 : i32, i32
  }
  func.func @transform_1(%arg0: i32) -> (i32, i32) {
    %c0_i32 = arith.constant 0 : i32
    %c0_i32_0 = arith.constant 0 : i32
    %c0_i32_1 = arith.constant 0 : i32
    return %c0_i32, %c0_i32_0 : i32, i32
  }
  func.func @transform_2(%arg0: i32) -> (i32, i32) {
    %c0_i32 = arith.constant 0 : i32
    %c0_i32_0 = arith.constant 0 : i32
    %c0_i32_1 = arith.constant 0 : i32
    return %c0_i32, %c0_i32_0 : i32, i32
  }
  func.func @transform_3(%arg0: i32) -> (i32, i32) {
    %c0_i32 = arith.constant 0 : i32
    %c0_i32_0 = arith.constant 0 : i32
    return %arg0, %c0_i32 : i32, i32
  }
}

module attributes {stable_mosaic.version = 11 : i64} {
  func.func @_bneck_kernel(%arg0: i32, %arg1: memref<128x16xbf16, #tpu.memory_space<vmem>>, %arg2: memref<1x16xf32, #tpu.memory_space<vmem>>, %arg3: memref<16x16xbf16, #tpu.memory_space<vmem>>, %arg4: memref<1x16xf32, #tpu.memory_space<vmem>>, %arg5: memref<128x16xbf16, #tpu.memory_space<vmem>>) attributes {dimension_semantics = [#tpu.dimension_semantics<parallel>], iteration_bounds = array<i64: 1>, scalar_prefetch = 0 : i64, scratch_operands = 0 : i64, tpu.core_type = #tpu.core_type<tc>, window_params = [{transform_indices = @transform_0, window_bounds = array<i64: 128, 16>}, {pipeline_mode = #tpu.pipeline_mode<synchronous>, transform_indices = @transform_1, window_bounds = array<i64: 1, 16>}, {pipeline_mode = #tpu.pipeline_mode<synchronous>, transform_indices = @transform_2, window_bounds = array<i64: 16, 16>}, {pipeline_mode = #tpu.pipeline_mode<synchronous>, transform_indices = @transform_3, window_bounds = array<i64: 1, 16>}, {transform_indices = @transform_4, window_bounds = array<i64: 128, 16>}]} {
    %c0 = arith.constant 0 : index
    %c0_0 = arith.constant 0 : index
    %0 = vector.load %arg1[%c0, %c0_0] : memref<128x16xbf16, #tpu.memory_space<vmem>>, vector<128x16xbf16>
    %1 = arith.extf %0 : vector<128x16xbf16> to vector<128x16xf32>
    %c0_1 = arith.constant 0 : index
    %c0_2 = arith.constant 0 : index
    %2 = vector.load %arg2[%c0_1, %c0_2] : memref<1x16xf32, #tpu.memory_space<vmem>>, vector<1x16xf32>
    %3 = vector.broadcast %2 : vector<1x16xf32> to vector<128x16xf32>
    %4 = arith.addf %1, %3 : vector<128x16xf32>
    %cst = arith.constant 0.000000e+00 : f32
    %5 = vector.broadcast %cst : f32 to vector<128x16xf32>
    %6 = arith.maximumf %4, %5 : vector<128x16xf32>
    %7 = arith.truncf %6 : vector<128x16xf32> to vector<128x16xbf16>
    %c0_3 = arith.constant 0 : index
    %c0_4 = arith.constant 0 : index
    %8 = vector.load %arg3[%c0_3, %c0_4] : memref<16x16xbf16, #tpu.memory_space<vmem>>, vector<16x16xbf16>
    %cst_5 = arith.constant dense<0.000000e+00> : vector<128x16xf32>
    %9 = tpu.matmul %7, %8, %cst_5 {dimension_numbers = #tpu.dot_dimension_numbers<[1], [0], [0], [1], [0, 0, 1, 1], [], []>} : vector<128x16xbf16>, vector<16x16xbf16>, vector<128x16xf32> -> vector<128x16xf32>
    %c0_6 = arith.constant 0 : index
    %c0_7 = arith.constant 0 : index
    %10 = vector.load %arg4[%c0_6, %c0_7] : memref<1x16xf32, #tpu.memory_space<vmem>>, vector<1x16xf32>
    %11 = vector.broadcast %10 : vector<1x16xf32> to vector<128x16xf32>
    %12 = arith.addf %9, %11 : vector<128x16xf32>
    %cst_8 = arith.constant 0.000000e+00 : f32
    %13 = vector.broadcast %cst_8 : f32 to vector<128x16xf32>
    %14 = arith.maximumf %12, %13 : vector<128x16xf32>
    %15 = arith.truncf %14 : vector<128x16xf32> to vector<128x16xbf16>
    %c0_9 = arith.constant 0 : index
    %c0_10 = arith.constant 0 : index
    %16 = vector.load %arg5[%c0_9, %c0_10] : memref<128x16xbf16, #tpu.memory_space<vmem>>, vector<128x16xbf16>
    tpu.vector_store %arg5[%c0_9, %c0_10], %15 {strides = array<i32>} : memref<128x16xbf16, #tpu.memory_space<vmem>>, vector<128x16xbf16>,
    return
  }
  func.func @transform_0(%arg0: i32) -> (i32, i32) {
    %c0_i32 = arith.constant 0 : i32
    %c0_i32_0 = arith.constant 0 : i32
    return %arg0, %c0_i32 : i32, i32
  }
  func.func @transform_1(%arg0: i32) -> (i32, i32) {
    %c0_i32 = arith.constant 0 : i32
    %c0_i32_0 = arith.constant 0 : i32
    %c0_i32_1 = arith.constant 0 : i32
    return %c0_i32, %c0_i32_0 : i32, i32
  }
  func.func @transform_2(%arg0: i32) -> (i32, i32) {
    %c0_i32 = arith.constant 0 : i32
    %c0_i32_0 = arith.constant 0 : i32
    %c0_i32_1 = arith.constant 0 : i32
    return %c0_i32, %c0_i32_0 : i32, i32
  }
  func.func @transform_3(%arg0: i32) -> (i32, i32) {
    %c0_i32 = arith.constant 0 : i32
    %c0_i32_0 = arith.constant 0 : i32
    %c0_i32_1 = arith.constant 0 : i32
    return %c0_i32, %c0_i32_0 : i32, i32
  }
  func.func @transform_4(%arg0: i32) -> (i32, i32) {
    %c0_i32 = arith.constant 0 : i32
    %c0_i32_0 = arith.constant 0 : i32
    return %arg0, %c0_i32 : i32, i32
  }
}

module attributes {stable_mosaic.version = 11 : i64} {
  func.func @_maxpool3x3s2_kernel(%arg0: i32, %arg1: memref<1x9x9x16xbf16, #tpu.memory_space<vmem>>, %arg2: memref<1x9x8x16xbf16, #tpu.memory_space<vmem>>, %arg3: memref<1x8x9x16xbf16, #tpu.memory_space<vmem>>, %arg4: memref<1x8x8x16xbf16, #tpu.memory_space<vmem>>, %arg5: memref<1x8x8x16xbf16, #tpu.memory_space<vmem>>) attributes {dimension_semantics = [#tpu.dimension_semantics<parallel>], iteration_bounds = array<i64: 2>, scalar_prefetch = 0 : i64, scratch_operands = 0 : i64, tpu.core_type = #tpu.core_type<tc>, window_params = [{transform_indices = @transform_0, window_bounds = array<i64: 1, 9, 9, 16>}, {transform_indices = @transform_1, window_bounds = array<i64: 1, 9, 8, 16>}, {transform_indices = @transform_2, window_bounds = array<i64: 1, 8, 9, 16>}, {transform_indices = @transform_3, window_bounds = array<i64: 1, 8, 8, 16>}, {transform_indices = @transform_4, window_bounds = array<i64: 1, 8, 8, 16>}]} {
    %c0 = arith.constant 0 : index
    %c0_0 = arith.constant 0 : index
    %c0_1 = arith.constant 0 : index
    %c0_2 = arith.constant 0 : index
    %0 = vector.load %arg1[%c0, %c0_0, %c0_1, %c0_2] : memref<1x9x9x16xbf16, #tpu.memory_space<vmem>>, vector<1x9x9x16xbf16>
    %1 = vector.shape_cast %0 : vector<1x9x9x16xbf16> to vector<9x9x16xbf16>
    %c0_3 = arith.constant 0 : index
    %c0_4 = arith.constant 0 : index
    %c0_5 = arith.constant 0 : index
    %c0_6 = arith.constant 0 : index
    %2 = vector.load %arg2[%c0_3, %c0_4, %c0_5, %c0_6] : memref<1x9x8x16xbf16, #tpu.memory_space<vmem>>, vector<1x9x8x16xbf16>
    %3 = vector.shape_cast %2 : vector<1x9x8x16xbf16> to vector<9x8x16xbf16>
    %c0_7 = arith.constant 0 : index
    %c0_8 = arith.constant 0 : index
    %c0_9 = arith.constant 0 : index
    %c0_10 = arith.constant 0 : index
    %4 = vector.load %arg3[%c0_7, %c0_8, %c0_9, %c0_10] : memref<1x8x9x16xbf16, #tpu.memory_space<vmem>>, vector<1x8x9x16xbf16>
    %5 = vector.shape_cast %4 : vector<1x8x9x16xbf16> to vector<8x9x16xbf16>
    %c0_11 = arith.constant 0 : index
    %c0_12 = arith.constant 0 : index
    %c0_13 = arith.constant 0 : index
    %c0_14 = arith.constant 0 : index
    %6 = vector.load %arg4[%c0_11, %c0_12, %c0_13, %c0_14] : memref<1x8x8x16xbf16, #tpu.memory_space<vmem>>, vector<1x8x8x16xbf16>
    %7 = vector.shape_cast %6 : vector<1x8x8x16xbf16> to vector<8x8x16xbf16>
    %8 = vector.extract_strided_slice %1 {offsets = [0, 0, 0], sizes = [8, 8, 16], strides = [1, 1, 1]} : vector<9x9x16xbf16> to vector<8x8x16xbf16>
    %9 = vector.extract_strided_slice %3 {offsets = [0, 0, 0], sizes = [8, 8, 16], strides = [1, 1, 1]} : vector<9x8x16xbf16> to vector<8x8x16xbf16>
    %10 = arith.maximumf %8, %9 : vector<8x8x16xbf16>
    %11 = vector.extract_strided_slice %1 {offsets = [0, 1, 0], sizes = [8, 8, 16], strides = [1, 1, 1]} : vector<9x9x16xbf16> to vector<8x8x16xbf16>
    %12 = arith.maximumf %10, %11 : vector<8x8x16xbf16>
    %13 = vector.extract_strided_slice %5 {offsets = [0, 0, 0], sizes = [8, 8, 16], strides = [1, 1, 1]} : vector<8x9x16xbf16> to vector<8x8x16xbf16>
    %14 = arith.maximumf %12, %13 : vector<8x8x16xbf16>
    %15 = arith.maximumf %14, %7 : vector<8x8x16xbf16>
    %16 = vector.extract_strided_slice %5 {offsets = [0, 1, 0], sizes = [8, 8, 16], strides = [1, 1, 1]} : vector<8x9x16xbf16> to vector<8x8x16xbf16>
    %17 = arith.maximumf %15, %16 : vector<8x8x16xbf16>
    %18 = vector.extract_strided_slice %1 {offsets = [1, 0, 0], sizes = [8, 8, 16], strides = [1, 1, 1]} : vector<9x9x16xbf16> to vector<8x8x16xbf16>
    %19 = arith.maximumf %17, %18 : vector<8x8x16xbf16>
    %20 = vector.extract_strided_slice %3 {offsets = [1, 0, 0], sizes = [8, 8, 16], strides = [1, 1, 1]} : vector<9x8x16xbf16> to vector<8x8x16xbf16>
    %21 = arith.maximumf %19, %20 : vector<8x8x16xbf16>
    %22 = vector.extract_strided_slice %1 {offsets = [1, 1, 0], sizes = [8, 8, 16], strides = [1, 1, 1]} : vector<9x9x16xbf16> to vector<8x8x16xbf16>
    %23 = arith.maximumf %21, %22 : vector<8x8x16xbf16>
    %c0_15 = arith.constant 0 : index
    %c0_16 = arith.constant 0 : index
    %c0_17 = arith.constant 0 : index
    %c0_18 = arith.constant 0 : index
    %24 = vector.load %arg5[%c0_15, %c0_16, %c0_17, %c0_18] : memref<1x8x8x16xbf16, #tpu.memory_space<vmem>>, vector<1x8x8x16xbf16>
    %25 = vector.shape_cast %24 : vector<1x8x8x16xbf16> to vector<8x8x16xbf16>
    %26 = vector.shape_cast %23 : vector<8x8x16xbf16> to vector<1x8x8x16xbf16>
    tpu.vector_store %arg5[%c0_15, %c0_16, %c0_17, %c0_18], %26 {strides = array<i32>} : memref<1x8x8x16xbf16, #tpu.memory_space<vmem>>, vector<1x8x8x16xbf16>,
    return
  }
  func.func @transform_0(%arg0: i32) -> (i32, i32, i32, i32) {
    %c0_i32 = arith.constant 0 : i32
    %c0_i32_0 = arith.constant 0 : i32
    %c0_i32_1 = arith.constant 0 : i32
    %c0_i32_2 = arith.constant 0 : i32
    return %arg0, %c0_i32, %c0_i32_0, %c0_i32_1 : i32, i32, i32, i32
  }
  func.func @transform_1(%arg0: i32) -> (i32, i32, i32, i32) {
    %c0_i32 = arith.constant 0 : i32
    %c0_i32_0 = arith.constant 0 : i32
    %c0_i32_1 = arith.constant 0 : i32
    %c0_i32_2 = arith.constant 0 : i32
    return %arg0, %c0_i32, %c0_i32_0, %c0_i32_1 : i32, i32, i32, i32
  }
  func.func @transform_2(%arg0: i32) -> (i32, i32, i32, i32) {
    %c0_i32 = arith.constant 0 : i32
    %c0_i32_0 = arith.constant 0 : i32
    %c0_i32_1 = arith.constant 0 : i32
    %c0_i32_2 = arith.constant 0 : i32
    return %arg0, %c0_i32, %c0_i32_0, %c0_i32_1 : i32, i32, i32, i32
  }
  func.func @transform_3(%arg0: i32) -> (i32, i32, i32, i32) {
    %c0_i32 = arith.constant 0 : i32
    %c0_i32_0 = arith.constant 0 : i32
    %c0_i32_1 = arith.constant 0 : i32
    %c0_i32_2 = arith.constant 0 : i32
    return %arg0, %c0_i32, %c0_i32_0, %c0_i32_1 : i32, i32, i32, i32
  }
  func.func @transform_4(%arg0: i32) -> (i32, i32, i32, i32) {
    %c0_i32 = arith.constant 0 : i32
    %c0_i32_0 = arith.constant 0 : i32
    %c0_i32_1 = arith.constant 0 : i32
    %c0_i32_2 = arith.constant 0 : i32
    return %arg0, %c0_i32, %c0_i32_0, %c0_i32_1 : i32, i32, i32, i32
  }
}

module attributes {stable_mosaic.version = 11 : i64} {
  func.func @_conv3x3_kernel(%arg0: i32, %arg1: memref<1x110x16xbf16, #tpu.memory_space<vmem>>, %arg2: memref<3x16x24xbf16, #tpu.memory_space<vmem>>, %arg3: memref<1x80x8xbf16, #tpu.memory_space<vmem>>) attributes {dimension_semantics = [#tpu.dimension_semantics<parallel>], iteration_bounds = array<i64: 2>, scalar_prefetch = 0 : i64, scratch_operands = 0 : i64, tpu.core_type = #tpu.core_type<tc>, window_params = [{transform_indices = @transform_0, window_bounds = array<i64: 1, 110, 16>}, {pipeline_mode = #tpu.pipeline_mode<synchronous>, transform_indices = @transform_1, window_bounds = array<i64: 3, 16, 24>}, {transform_indices = @transform_2, window_bounds = array<i64: 1, 80, 8>}]} {
    %cst = arith.constant 0.000000e+00 : f32
    %0 = vector.broadcast %cst : f32 to vector<82x24xf32>
    %c0 = arith.constant 0 : index
    %c0_0 = arith.constant 0 : index
    %c0_1 = arith.constant 0 : index
    %1 = vector.load %arg1[%c0, %c0_0, %c0_1] : memref<1x110x16xbf16, #tpu.memory_space<vmem>>, vector<1x82x16xbf16>
    %2 = vector.shape_cast %1 : vector<1x82x16xbf16> to vector<82x16xbf16>
    %c0_2 = arith.constant 0 : index
    %c0_3 = arith.constant 0 : index
    %c0_4 = arith.constant 0 : index
    %3 = vector.load %arg2[%c0_2, %c0_3, %c0_4] : memref<3x16x24xbf16, #tpu.memory_space<vmem>>, vector<1x16x24xbf16>
    %4 = vector.shape_cast %3 : vector<1x16x24xbf16> to vector<16x24xbf16>
    %cst_5 = arith.constant dense<0.000000e+00> : vector<82x24xf32>
    %5 = tpu.matmul %2, %4, %cst_5 {dimension_numbers = #tpu.dot_dimension_numbers<[1], [0], [0], [1], [0, 0, 1, 1], [], []>} : vector<82x16xbf16>, vector<16x24xbf16>, vector<82x24xf32> -> vector<82x24xf32>
    %6 = arith.addf %0, %5 : vector<82x24xf32>
    %c0_6 = arith.constant 0 : index
    %c10 = arith.constant 10 : index
    %c0_7 = arith.constant 0 : index
    %7 = vector.load %arg1[%c0_6, %c10, %c0_7] : memref<1x110x16xbf16, #tpu.memory_space<vmem>>, vector<1x82x16xbf16>
    %8 = vector.shape_cast %7 : vector<1x82x16xbf16> to vector<82x16xbf16>
    %c1 = arith.constant 1 : index
    %c0_8 = arith.constant 0 : index
    %c0_9 = arith.constant 0 : index
    %9 = vector.load %arg2[%c1, %c0_8, %c0_9] : memref<3x16x24xbf16, #tpu.memory_space<vmem>>, vector<1x16x24xbf16>
    %10 = vector.shape_cast %9 : vector<1x16x24xbf16> to vector<16x24xbf16>
    %cst_10 = arith.constant dense<0.000000e+00> : vector<82x24xf32>
    %11 = tpu.matmul %8, %10, %cst_10 {dimension_numbers = #tpu.dot_dimension_numbers<[1], [0], [0], [1], [0, 0, 1, 1], [], []>} : vector<82x16xbf16>, vector<16x24xbf16>, vector<82x24xf32> -> vector<82x24xf32>
    %12 = arith.addf %6, %11 : vector<82x24xf32>
    %c0_11 = arith.constant 0 : index
    %c20 = arith.constant 20 : index
    %c0_12 = arith.constant 0 : index
    %13 = vector.load %arg1[%c0_11, %c20, %c0_12] : memref<1x110x16xbf16, #tpu.memory_space<vmem>>, vector<1x82x16xbf16>
    %14 = vector.shape_cast %13 : vector<1x82x16xbf16> to vector<82x16xbf16>
    %c2 = arith.constant 2 : index
    %c0_13 = arith.constant 0 : index
    %c0_14 = arith.constant 0 : index
    %15 = vector.load %arg2[%c2, %c0_13, %c0_14] : memref<3x16x24xbf16, #tpu.memory_space<vmem>>, vector<1x16x24xbf16>
    %16 = vector.shape_cast %15 : vector<1x16x24xbf16> to vector<16x24xbf16>
    %cst_15 = arith.constant dense<0.000000e+00> : vector<82x24xf32>
    %17 = tpu.matmul %14, %16, %cst_15 {dimension_numbers = #tpu.dot_dimension_numbers<[1], [0], [0], [1], [0, 0, 1, 1], [], []>} : vector<82x16xbf16>, vector<16x24xbf16>, vector<82x24xf32> -> vector<82x24xf32>
    %18 = arith.addf %12, %17 : vector<82x24xf32>
    %19 = vector.extract_strided_slice %18 {offsets = [0, 0], sizes = [80, 8], strides = [1, 1]} : vector<82x24xf32> to vector<80x8xf32>
    %20 = vector.extract_strided_slice %18 {offsets = [1, 8], sizes = [80, 8], strides = [1, 1]} : vector<82x24xf32> to vector<80x8xf32>
    %21 = arith.addf %19, %20 : vector<80x8xf32>
    %22 = vector.extract_strided_slice %18 {offsets = [2, 16], sizes = [80, 8], strides = [1, 1]} : vector<82x24xf32> to vector<80x8xf32>
    %23 = arith.addf %21, %22 : vector<80x8xf32>
    %24 = arith.truncf %23 : vector<80x8xf32> to vector<80x8xbf16>
    %c0_16 = arith.constant 0 : index
    %c0_17 = arith.constant 0 : index
    %c0_18 = arith.constant 0 : index
    %25 = vector.load %arg3[%c0_16, %c0_17, %c0_18] : memref<1x80x8xbf16, #tpu.memory_space<vmem>>, vector<1x80x8xbf16>
    %26 = vector.shape_cast %25 : vector<1x80x8xbf16> to vector<80x8xbf16>
    %27 = vector.shape_cast %24 : vector<80x8xbf16> to vector<1x80x8xbf16>
    tpu.vector_store %arg3[%c0_16, %c0_17, %c0_18], %27 {strides = array<i32>} : memref<1x80x8xbf16, #tpu.memory_space<vmem>>, vector<1x80x8xbf16>,
    return
  }
  func.func @transform_0(%arg0: i32) -> (i32, i32, i32) {
    %c0_i32 = arith.constant 0 : i32
    %c0_i32_0 = arith.constant 0 : i32
    %c0_i32_1 = arith.constant 0 : i32
    return %arg0, %c0_i32, %c0_i32_0 : i32, i32, i32
  }
  func.func @transform_1(%arg0: i32) -> (i32, i32, i32) {
    %c0_i32 = arith.constant 0 : i32
    %c0_i32_0 = arith.constant 0 : i32
    %c0_i32_1 = arith.constant 0 : i32
    %c0_i32_2 = arith.constant 0 : i32
    return %c0_i32, %c0_i32_0, %c0_i32_1 : i32, i32, i32
  }
  func.func @transform_2(%arg0: i32) -> (i32, i32, i32) {
    %c0_i32 = arith.constant 0 : i32
    %c0_i32_0 = arith.constant 0 : i32
    %c0_i32_1 = arith.constant 0 : i32
    return %arg0, %c0_i32, %c0_i32_0 : i32, i32, i32
  }
}

module attributes {stable_mosaic.version = 11 : i64} {
  func.func @_bneck_kernel(%arg0: i32, %arg1: memref<128x24xbf16, #tpu.memory_space<vmem>>, %arg2: memref<1x24xf32, #tpu.memory_space<vmem>>, %arg3: memref<24x16xbf16, #tpu.memory_space<vmem>>, %arg4: memref<1x16xf32, #tpu.memory_space<vmem>>, %arg5: memref<128x16xbf16, #tpu.memory_space<vmem>>) attributes {dimension_semantics = [#tpu.dimension_semantics<parallel>], iteration_bounds = array<i64: 1>, scalar_prefetch = 0 : i64, scratch_operands = 0 : i64, tpu.core_type = #tpu.core_type<tc>, window_params = [{transform_indices = @transform_0, window_bounds = array<i64: 128, 24>}, {pipeline_mode = #tpu.pipeline_mode<synchronous>, transform_indices = @transform_1, window_bounds = array<i64: 1, 24>}, {pipeline_mode = #tpu.pipeline_mode<synchronous>, transform_indices = @transform_2, window_bounds = array<i64: 24, 16>}, {pipeline_mode = #tpu.pipeline_mode<synchronous>, transform_indices = @transform_3, window_bounds = array<i64: 1, 16>}, {transform_indices = @transform_4, window_bounds = array<i64: 128, 16>}]} {
    %c0 = arith.constant 0 : index
    %c0_0 = arith.constant 0 : index
    %0 = vector.load %arg1[%c0, %c0_0] : memref<128x24xbf16, #tpu.memory_space<vmem>>, vector<128x24xbf16>
    %1 = arith.extf %0 : vector<128x24xbf16> to vector<128x24xf32>
    %c0_1 = arith.constant 0 : index
    %c0_2 = arith.constant 0 : index
    %2 = vector.load %arg2[%c0_1, %c0_2] : memref<1x24xf32, #tpu.memory_space<vmem>>, vector<1x24xf32>
    %3 = vector.broadcast %2 : vector<1x24xf32> to vector<128x24xf32>
    %4 = arith.addf %1, %3 : vector<128x24xf32>
    %cst = arith.constant 0.000000e+00 : f32
    %5 = vector.broadcast %cst : f32 to vector<128x24xf32>
    %6 = arith.maximumf %4, %5 : vector<128x24xf32>
    %7 = arith.truncf %6 : vector<128x24xf32> to vector<128x24xbf16>
    %c0_3 = arith.constant 0 : index
    %c0_4 = arith.constant 0 : index
    %8 = vector.load %arg3[%c0_3, %c0_4] : memref<24x16xbf16, #tpu.memory_space<vmem>>, vector<24x16xbf16>
    %cst_5 = arith.constant dense<0.000000e+00> : vector<128x16xf32>
    %9 = tpu.matmul %7, %8, %cst_5 {dimension_numbers = #tpu.dot_dimension_numbers<[1], [0], [0], [1], [0, 0, 1, 1], [], []>} : vector<128x24xbf16>, vector<24x16xbf16>, vector<128x16xf32> -> vector<128x16xf32>
    %c0_6 = arith.constant 0 : index
    %c0_7 = arith.constant 0 : index
    %10 = vector.load %arg4[%c0_6, %c0_7] : memref<1x16xf32, #tpu.memory_space<vmem>>, vector<1x16xf32>
    %11 = vector.broadcast %10 : vector<1x16xf32> to vector<128x16xf32>
    %12 = arith.addf %9, %11 : vector<128x16xf32>
    %cst_8 = arith.constant 0.000000e+00 : f32
    %13 = vector.broadcast %cst_8 : f32 to vector<128x16xf32>
    %14 = arith.maximumf %12, %13 : vector<128x16xf32>
    %15 = arith.truncf %14 : vector<128x16xf32> to vector<128x16xbf16>
    %c0_9 = arith.constant 0 : index
    %c0_10 = arith.constant 0 : index
    %16 = vector.load %arg5[%c0_9, %c0_10] : memref<128x16xbf16, #tpu.memory_space<vmem>>, vector<128x16xbf16>
    tpu.vector_store %arg5[%c0_9, %c0_10], %15 {strides = array<i32>} : memref<128x16xbf16, #tpu.memory_space<vmem>>, vector<128x16xbf16>,
    return
  }
  func.func @transform_0(%arg0: i32) -> (i32, i32) {
    %c0_i32 = arith.constant 0 : i32
    %c0_i32_0 = arith.constant 0 : i32
    return %arg0, %c0_i32 : i32, i32
  }
  func.func @transform_1(%arg0: i32) -> (i32, i32) {
    %c0_i32 = arith.constant 0 : i32
    %c0_i32_0 = arith.constant 0 : i32
    %c0_i32_1 = arith.constant 0 : i32
    return %c0_i32, %c0_i32_0 : i32, i32
  }
  func.func @transform_2(%arg0: i32) -> (i32, i32) {
    %c0_i32 = arith.constant 0 : i32
    %c0_i32_0 = arith.constant 0 : i32
    %c0_i32_1 = arith.constant 0 : i32
    return %c0_i32, %c0_i32_0 : i32, i32
  }
  func.func @transform_3(%arg0: i32) -> (i32, i32) {
    %c0_i32 = arith.constant 0 : i32
    %c0_i32_0 = arith.constant 0 : i32
    %c0_i32_1 = arith.constant 0 : i32
    return %c0_i32, %c0_i32_0 : i32, i32
  }
  func.func @transform_4(%arg0: i32) -> (i32, i32) {
    %c0_i32 = arith.constant 0 : i32
    %c0_i32_0 = arith.constant 0 : i32
    return %arg0, %c0_i32 : i32, i32
  }
}

module attributes {stable_mosaic.version = 11 : i64} {
  func.func @_transition_kernel(%arg0: i32, %arg1: i32, %arg2: memref<1x16x32xbf16, #tpu.memory_space<vmem>>, %arg3: memref<1x16x32xbf16, #tpu.memory_space<vmem>>, %arg4: memref<1x16x32xbf16, #tpu.memory_space<vmem>>, %arg5: memref<1x16x32xbf16, #tpu.memory_space<vmem>>, %arg6: memref<1x32xf32, #tpu.memory_space<vmem>>, %arg7: memref<32x16xbf16, #tpu.memory_space<vmem>>, %arg8: memref<1x16x16xbf16, #tpu.memory_space<vmem>>) attributes {dimension_semantics = [#tpu.dimension_semantics<parallel>, #tpu.dimension_semantics<parallel>], iteration_bounds = array<i64: 2, 1>, scalar_prefetch = 0 : i64, scratch_operands = 0 : i64, tpu.core_type = #tpu.core_type<tc>, window_params = [{transform_indices = @transform_0, window_bounds = array<i64: 1, 16, 32>}, {transform_indices = @transform_1, window_bounds = array<i64: 1, 16, 32>}, {transform_indices = @transform_2, window_bounds = array<i64: 1, 16, 32>}, {transform_indices = @transform_3, window_bounds = array<i64: 1, 16, 32>}, {pipeline_mode = #tpu.pipeline_mode<synchronous>, transform_indices = @transform_4, window_bounds = array<i64: 1, 32>}, {pipeline_mode = #tpu.pipeline_mode<synchronous>, transform_indices = @transform_5, window_bounds = array<i64: 32, 16>}, {transform_indices = @transform_6, window_bounds = array<i64: 1, 16, 16>}]} {
    %c0 = arith.constant 0 : index
    %c0_0 = arith.constant 0 : index
    %0 = vector.load %arg6[%c0, %c0_0] : memref<1x32xf32, #tpu.memory_space<vmem>>, vector<1x32xf32>
    %c0_1 = arith.constant 0 : index
    %c0_2 = arith.constant 0 : index
    %c0_3 = arith.constant 0 : index
    %1 = vector.load %arg2[%c0_1, %c0_2, %c0_3] : memref<1x16x32xbf16, #tpu.memory_space<vmem>>, vector<1x16x32xbf16>
    %2 = vector.shape_cast %1 : vector<1x16x32xbf16> to vector<16x32xbf16>
    %3 = arith.extf %2 : vector<16x32xbf16> to vector<16x32xf32>
    %4 = vector.broadcast %0 : vector<1x32xf32> to vector<16x32xf32>
    %5 = arith.addf %3, %4 : vector<16x32xf32>
    %cst = arith.constant 0.000000e+00 : f32
    %6 = vector.broadcast %cst : f32 to vector<16x32xf32>
    %7 = arith.maximumf %5, %6 : vector<16x32xf32>
    %c0_4 = arith.constant 0 : index
    %c0_5 = arith.constant 0 : index
    %c0_6 = arith.constant 0 : index
    %8 = vector.load %arg3[%c0_4, %c0_5, %c0_6] : memref<1x16x32xbf16, #tpu.memory_space<vmem>>, vector<1x16x32xbf16>
    %9 = vector.shape_cast %8 : vector<1x16x32xbf16> to vector<16x32xbf16>
    %10 = arith.extf %9 : vector<16x32xbf16> to vector<16x32xf32>
    %11 = vector.broadcast %0 : vector<1x32xf32> to vector<16x32xf32>
    %12 = arith.addf %10, %11 : vector<16x32xf32>
    %cst_7 = arith.constant 0.000000e+00 : f32
    %13 = vector.broadcast %cst_7 : f32 to vector<16x32xf32>
    %14 = arith.maximumf %12, %13 : vector<16x32xf32>
    %15 = arith.addf %7, %14 : vector<16x32xf32>
    %c0_8 = arith.constant 0 : index
    %c0_9 = arith.constant 0 : index
    %c0_10 = arith.constant 0 : index
    %16 = vector.load %arg4[%c0_8, %c0_9, %c0_10] : memref<1x16x32xbf16, #tpu.memory_space<vmem>>, vector<1x16x32xbf16>
    %17 = vector.shape_cast %16 : vector<1x16x32xbf16> to vector<16x32xbf16>
    %18 = arith.extf %17 : vector<16x32xbf16> to vector<16x32xf32>
    %19 = vector.broadcast %0 : vector<1x32xf32> to vector<16x32xf32>
    %20 = arith.addf %18, %19 : vector<16x32xf32>
    %cst_11 = arith.constant 0.000000e+00 : f32
    %21 = vector.broadcast %cst_11 : f32 to vector<16x32xf32>
    %22 = arith.maximumf %20, %21 : vector<16x32xf32>
    %23 = arith.addf %15, %22 : vector<16x32xf32>
    %c0_12 = arith.constant 0 : index
    %c0_13 = arith.constant 0 : index
    %c0_14 = arith.constant 0 : index
    %24 = vector.load %arg5[%c0_12, %c0_13, %c0_14] : memref<1x16x32xbf16, #tpu.memory_space<vmem>>, vector<1x16x32xbf16>
    %25 = vector.shape_cast %24 : vector<1x16x32xbf16> to vector<16x32xbf16>
    %26 = arith.extf %25 : vector<16x32xbf16> to vector<16x32xf32>
    %27 = vector.broadcast %0 : vector<1x32xf32> to vector<16x32xf32>
    %28 = arith.addf %26, %27 : vector<16x32xf32>
    %cst_15 = arith.constant 0.000000e+00 : f32
    %29 = vector.broadcast %cst_15 : f32 to vector<16x32xf32>
    %30 = arith.maximumf %28, %29 : vector<16x32xf32>
    %31 = arith.addf %23, %30 : vector<16x32xf32>
    %cst_16 = arith.constant 2.500000e-01 : f32
    %32 = vector.broadcast %cst_16 : f32 to vector<16x32xf32>
    %33 = arith.mulf %31, %32 : vector<16x32xf32>
    %34 = arith.truncf %33 : vector<16x32xf32> to vector<16x32xbf16>
    %c0_17 = arith.constant 0 : index
    %c0_18 = arith.constant 0 : index
    %35 = vector.load %arg7[%c0_17, %c0_18] : memref<32x16xbf16, #tpu.memory_space<vmem>>, vector<32x16xbf16>
    %cst_19 = arith.constant dense<0.000000e+00> : vector<16x16xf32>
    %36 = tpu.matmul %34, %35, %cst_19 {dimension_numbers = #tpu.dot_dimension_numbers<[1], [0], [0], [1], [0, 0, 1, 1], [], []>} : vector<16x32xbf16>, vector<32x16xbf16>, vector<16x16xf32> -> vector<16x16xf32>
    %37 = arith.truncf %36 : vector<16x16xf32> to vector<16x16xbf16>
    %c0_20 = arith.constant 0 : index
    %c0_21 = arith.constant 0 : index
    %c0_22 = arith.constant 0 : index
    %38 = vector.load %arg8[%c0_20, %c0_21, %c0_22] : memref<1x16x16xbf16, #tpu.memory_space<vmem>>, vector<1x16x16xbf16>
    %39 = vector.shape_cast %38 : vector<1x16x16xbf16> to vector<16x16xbf16>
    %40 = vector.shape_cast %37 : vector<16x16xbf16> to vector<1x16x16xbf16>
    tpu.vector_store %arg8[%c0_20, %c0_21, %c0_22], %40 {strides = array<i32>} : memref<1x16x16xbf16, #tpu.memory_space<vmem>>, vector<1x16x16xbf16>,
    return
  }
  func.func @transform_0(%arg0: i32, %arg1: i32) -> (i32, i32, i32) {
    %c0_i32 = arith.constant 0 : i32
    %c0_i32_0 = arith.constant 0 : i32
    return %arg0, %arg1, %c0_i32 : i32, i32, i32
  }
  func.func @transform_1(%arg0: i32, %arg1: i32) -> (i32, i32, i32) {
    %c0_i32 = arith.constant 0 : i32
    %c0_i32_0 = arith.constant 0 : i32
    return %arg0, %arg1, %c0_i32 : i32, i32, i32
  }
  func.func @transform_2(%arg0: i32, %arg1: i32) -> (i32, i32, i32) {
    %c0_i32 = arith.constant 0 : i32
    %c0_i32_0 = arith.constant 0 : i32
    return %arg0, %arg1, %c0_i32 : i32, i32, i32
  }
  func.func @transform_3(%arg0: i32, %arg1: i32) -> (i32, i32, i32) {
    %c0_i32 = arith.constant 0 : i32
    %c0_i32_0 = arith.constant 0 : i32
    return %arg0, %arg1, %c0_i32 : i32, i32, i32
  }
  func.func @transform_4(%arg0: i32, %arg1: i32) -> (i32, i32) {
    %c0_i32 = arith.constant 0 : i32
    %c0_i32_0 = arith.constant 0 : i32
    %c0_i32_1 = arith.constant 0 : i32
    return %c0_i32, %c0_i32_0 : i32, i32
  }
  func.func @transform_5(%arg0: i32, %arg1: i32) -> (i32, i32) {
    %c0_i32 = arith.constant 0 : i32
    %c0_i32_0 = arith.constant 0 : i32
    %c0_i32_1 = arith.constant 0 : i32
    return %c0_i32, %c0_i32_0 : i32, i32
  }
  func.func @transform_6(%arg0: i32, %arg1: i32) -> (i32, i32, i32) {
    %c0_i32 = arith.constant 0 : i32
    %c0_i32_0 = arith.constant 0 : i32
    return %arg0, %arg1, %c0_i32 : i32, i32, i32
  }
}

module attributes {stable_mosaic.version = 11 : i64} {
  func.func @_bneck_kernel(%arg0: i32, %arg1: memref<32x16xbf16, #tpu.memory_space<vmem>>, %arg2: memref<1x16xf32, #tpu.memory_space<vmem>>, %arg3: memref<16x16xbf16, #tpu.memory_space<vmem>>, %arg4: memref<1x16xf32, #tpu.memory_space<vmem>>, %arg5: memref<32x16xbf16, #tpu.memory_space<vmem>>) attributes {dimension_semantics = [#tpu.dimension_semantics<parallel>], iteration_bounds = array<i64: 1>, scalar_prefetch = 0 : i64, scratch_operands = 0 : i64, tpu.core_type = #tpu.core_type<tc>, window_params = [{transform_indices = @transform_0, window_bounds = array<i64: 32, 16>}, {pipeline_mode = #tpu.pipeline_mode<synchronous>, transform_indices = @transform_1, window_bounds = array<i64: 1, 16>}, {pipeline_mode = #tpu.pipeline_mode<synchronous>, transform_indices = @transform_2, window_bounds = array<i64: 16, 16>}, {pipeline_mode = #tpu.pipeline_mode<synchronous>, transform_indices = @transform_3, window_bounds = array<i64: 1, 16>}, {transform_indices = @transform_4, window_bounds = array<i64: 32, 16>}]} {
    %c0 = arith.constant 0 : index
    %c0_0 = arith.constant 0 : index
    %0 = vector.load %arg1[%c0, %c0_0] : memref<32x16xbf16, #tpu.memory_space<vmem>>, vector<32x16xbf16>
    %1 = arith.extf %0 : vector<32x16xbf16> to vector<32x16xf32>
    %c0_1 = arith.constant 0 : index
    %c0_2 = arith.constant 0 : index
    %2 = vector.load %arg2[%c0_1, %c0_2] : memref<1x16xf32, #tpu.memory_space<vmem>>, vector<1x16xf32>
    %3 = vector.broadcast %2 : vector<1x16xf32> to vector<32x16xf32>
    %4 = arith.addf %1, %3 : vector<32x16xf32>
    %cst = arith.constant 0.000000e+00 : f32
    %5 = vector.broadcast %cst : f32 to vector<32x16xf32>
    %6 = arith.maximumf %4, %5 : vector<32x16xf32>
    %7 = arith.truncf %6 : vector<32x16xf32> to vector<32x16xbf16>
    %c0_3 = arith.constant 0 : index
    %c0_4 = arith.constant 0 : index
    %8 = vector.load %arg3[%c0_3, %c0_4] : memref<16x16xbf16, #tpu.memory_space<vmem>>, vector<16x16xbf16>
    %cst_5 = arith.constant dense<0.000000e+00> : vector<32x16xf32>
    %9 = tpu.matmul %7, %8, %cst_5 {dimension_numbers = #tpu.dot_dimension_numbers<[1], [0], [0], [1], [0, 0, 1, 1], [], []>} : vector<32x16xbf16>, vector<16x16xbf16>, vector<32x16xf32> -> vector<32x16xf32>
    %c0_6 = arith.constant 0 : index
    %c0_7 = arith.constant 0 : index
    %10 = vector.load %arg4[%c0_6, %c0_7] : memref<1x16xf32, #tpu.memory_space<vmem>>, vector<1x16xf32>
    %11 = vector.broadcast %10 : vector<1x16xf32> to vector<32x16xf32>
    %12 = arith.addf %9, %11 : vector<32x16xf32>
    %cst_8 = arith.constant 0.000000e+00 : f32
    %13 = vector.broadcast %cst_8 : f32 to vector<32x16xf32>
    %14 = arith.maximumf %12, %13 : vector<32x16xf32>
    %15 = arith.truncf %14 : vector<32x16xf32> to vector<32x16xbf16>
    %c0_9 = arith.constant 0 : index
    %c0_10 = arith.constant 0 : index
    %16 = vector.load %arg5[%c0_9, %c0_10] : memref<32x16xbf16, #tpu.memory_space<vmem>>, vector<32x16xbf16>
    tpu.vector_store %arg5[%c0_9, %c0_10], %15 {strides = array<i32>} : memref<32x16xbf16, #tpu.memory_space<vmem>>, vector<32x16xbf16>,
    return
  }
  func.func @transform_0(%arg0: i32) -> (i32, i32) {
    %c0_i32 = arith.constant 0 : i32
    %c0_i32_0 = arith.constant 0 : i32
    return %arg0, %c0_i32 : i32, i32
  }
  func.func @transform_1(%arg0: i32) -> (i32, i32) {
    %c0_i32 = arith.constant 0 : i32
    %c0_i32_0 = arith.constant 0 : i32
    %c0_i32_1 = arith.constant 0 : i32
    return %c0_i32, %c0_i32_0 : i32, i32
  }
  func.func @transform_2(%arg0: i32) -> (i32, i32) {
    %c0_i32 = arith.constant 0 : i32
    %c0_i32_0 = arith.constant 0 : i32
    %c0_i32_1 = arith.constant 0 : i32
    return %c0_i32, %c0_i32_0 : i32, i32
  }
  func.func @transform_3(%arg0: i32) -> (i32, i32) {
    %c0_i32 = arith.constant 0 : i32
    %c0_i32_0 = arith.constant 0 : i32
    %c0_i32_1 = arith.constant 0 : i32
    return %c0_i32, %c0_i32_0 : i32, i32
  }
  func.func @transform_4(%arg0: i32) -> (i32, i32) {
    %c0_i32 = arith.constant 0 : i32
    %c0_i32_0 = arith.constant 0 : i32
    return %arg0, %c0_i32 : i32, i32
  }
}

module attributes {stable_mosaic.version = 11 : i64} {
  func.func @_conv3x3_kernel(%arg0: i32, %arg1: memref<1x42x16xbf16, #tpu.memory_space<vmem>>, %arg2: memref<3x16x24xbf16, #tpu.memory_space<vmem>>, %arg3: memref<1x24x8xbf16, #tpu.memory_space<vmem>>) attributes {dimension_semantics = [#tpu.dimension_semantics<parallel>], iteration_bounds = array<i64: 2>, scalar_prefetch = 0 : i64, scratch_operands = 0 : i64, tpu.core_type = #tpu.core_type<tc>, window_params = [{transform_indices = @transform_0, window_bounds = array<i64: 1, 42, 16>}, {pipeline_mode = #tpu.pipeline_mode<synchronous>, transform_indices = @transform_1, window_bounds = array<i64: 3, 16, 24>}, {transform_indices = @transform_2, window_bounds = array<i64: 1, 24, 8>}]} {
    %cst = arith.constant 0.000000e+00 : f32
    %0 = vector.broadcast %cst : f32 to vector<26x24xf32>
    %c0 = arith.constant 0 : index
    %c0_0 = arith.constant 0 : index
    %c0_1 = arith.constant 0 : index
    %1 = vector.load %arg1[%c0, %c0_0, %c0_1] : memref<1x42x16xbf16, #tpu.memory_space<vmem>>, vector<1x26x16xbf16>
    %2 = vector.shape_cast %1 : vector<1x26x16xbf16> to vector<26x16xbf16>
    %c0_2 = arith.constant 0 : index
    %c0_3 = arith.constant 0 : index
    %c0_4 = arith.constant 0 : index
    %3 = vector.load %arg2[%c0_2, %c0_3, %c0_4] : memref<3x16x24xbf16, #tpu.memory_space<vmem>>, vector<1x16x24xbf16>
    %4 = vector.shape_cast %3 : vector<1x16x24xbf16> to vector<16x24xbf16>
    %cst_5 = arith.constant dense<0.000000e+00> : vector<26x24xf32>
    %5 = tpu.matmul %2, %4, %cst_5 {dimension_numbers = #tpu.dot_dimension_numbers<[1], [0], [0], [1], [0, 0, 1, 1], [], []>} : vector<26x16xbf16>, vector<16x24xbf16>, vector<26x24xf32> -> vector<26x24xf32>
    %6 = arith.addf %0, %5 : vector<26x24xf32>
    %c0_6 = arith.constant 0 : index
    %c6 = arith.constant 6 : index
    %c0_7 = arith.constant 0 : index
    %7 = vector.load %arg1[%c0_6, %c6, %c0_7] : memref<1x42x16xbf16, #tpu.memory_space<vmem>>, vector<1x26x16xbf16>
    %8 = vector.shape_cast %7 : vector<1x26x16xbf16> to vector<26x16xbf16>
    %c1 = arith.constant 1 : index
    %c0_8 = arith.constant 0 : index
    %c0_9 = arith.constant 0 : index
    %9 = vector.load %arg2[%c1, %c0_8, %c0_9] : memref<3x16x24xbf16, #tpu.memory_space<vmem>>, vector<1x16x24xbf16>
    %10 = vector.shape_cast %9 : vector<1x16x24xbf16> to vector<16x24xbf16>
    %cst_10 = arith.constant dense<0.000000e+00> : vector<26x24xf32>
    %11 = tpu.matmul %8, %10, %cst_10 {dimension_numbers = #tpu.dot_dimension_numbers<[1], [0], [0], [1], [0, 0, 1, 1], [], []>} : vector<26x16xbf16>, vector<16x24xbf16>, vector<26x24xf32> -> vector<26x24xf32>
    %12 = arith.addf %6, %11 : vector<26x24xf32>
    %c0_11 = arith.constant 0 : index
    %c12 = arith.constant 12 : index
    %c0_12 = arith.constant 0 : index
    %13 = vector.load %arg1[%c0_11, %c12, %c0_12] : memref<1x42x16xbf16, #tpu.memory_space<vmem>>, vector<1x26x16xbf16>
    %14 = vector.shape_cast %13 : vector<1x26x16xbf16> to vector<26x16xbf16>
    %c2 = arith.constant 2 : index
    %c0_13 = arith.constant 0 : index
    %c0_14 = arith.constant 0 : index
    %15 = vector.load %arg2[%c2, %c0_13, %c0_14] : memref<3x16x24xbf16, #tpu.memory_space<vmem>>, vector<1x16x24xbf16>
    %16 = vector.shape_cast %15 : vector<1x16x24xbf16> to vector<16x24xbf16>
    %cst_15 = arith.constant dense<0.000000e+00> : vector<26x24xf32>
    %17 = tpu.matmul %14, %16, %cst_15 {dimension_numbers = #tpu.dot_dimension_numbers<[1], [0], [0], [1], [0, 0, 1, 1], [], []>} : vector<26x16xbf16>, vector<16x24xbf16>, vector<26x24xf32> -> vector<26x24xf32>
    %18 = arith.addf %12, %17 : vector<26x24xf32>
    %19 = vector.extract_strided_slice %18 {offsets = [0, 0], sizes = [24, 8], strides = [1, 1]} : vector<26x24xf32> to vector<24x8xf32>
    %20 = vector.extract_strided_slice %18 {offsets = [1, 8], sizes = [24, 8], strides = [1, 1]} : vector<26x24xf32> to vector<24x8xf32>
    %21 = arith.addf %19, %20 : vector<24x8xf32>
    %22 = vector.extract_strided_slice %18 {offsets = [2, 16], sizes = [24, 8], strides = [1, 1]} : vector<26x24xf32> to vector<24x8xf32>
    %23 = arith.addf %21, %22 : vector<24x8xf32>
    %24 = arith.truncf %23 : vector<24x8xf32> to vector<24x8xbf16>
    %c0_16 = arith.constant 0 : index
    %c0_17 = arith.constant 0 : index
    %c0_18 = arith.constant 0 : index
    %25 = vector.load %arg3[%c0_16, %c0_17, %c0_18] : memref<1x24x8xbf16, #tpu.memory_space<vmem>>, vector<1x24x8xbf16>
    %26 = vector.shape_cast %25 : vector<1x24x8xbf16> to vector<24x8xbf16>
    %27 = vector.shape_cast %24 : vector<24x8xbf16> to vector<1x24x8xbf16>
    tpu.vector_store %arg3[%c0_16, %c0_17, %c0_18], %27 {strides = array<i32>} : memref<1x24x8xbf16, #tpu.memory_space<vmem>>, vector<1x24x8xbf16>,
    return
  }
  func.func @transform_0(%arg0: i32) -> (i32, i32, i32) {
    %c0_i32 = arith.constant 0 : i32
    %c0_i32_0 = arith.constant 0 : i32
    %c0_i32_1 = arith.constant 0 : i32
    return %arg0, %c0_i32, %c0_i32_0 : i32, i32, i32
  }
  func.func @transform_1(%arg0: i32) -> (i32, i32, i32) {
    %c0_i32 = arith.constant 0 : i32
    %c0_i32_0 = arith.constant 0 : i32
    %c0_i32_1 = arith.constant 0 : i32
    %c0_i32_2 = arith.constant 0 : i32
    return %c0_i32, %c0_i32_0, %c0_i32_1 : i32, i32, i32
  }
  func.func @transform_2(%arg0: i32) -> (i32, i32, i32) {
    %c0_i32 = arith.constant 0 : i32
    %c0_i32_0 = arith.constant 0 : i32
    %c0_i32_1 = arith.constant 0 : i32
    return %arg0, %c0_i32, %c0_i32_0 : i32, i32, i32
  }
}

module attributes {stable_mosaic.version = 11 : i64} {
  func.func @_bneck_kernel(%arg0: i32, %arg1: memref<32x24xbf16, #tpu.memory_space<vmem>>, %arg2: memref<1x24xf32, #tpu.memory_space<vmem>>, %arg3: memref<24x16xbf16, #tpu.memory_space<vmem>>, %arg4: memref<1x16xf32, #tpu.memory_space<vmem>>, %arg5: memref<32x16xbf16, #tpu.memory_space<vmem>>) attributes {dimension_semantics = [#tpu.dimension_semantics<parallel>], iteration_bounds = array<i64: 1>, scalar_prefetch = 0 : i64, scratch_operands = 0 : i64, tpu.core_type = #tpu.core_type<tc>, window_params = [{transform_indices = @transform_0, window_bounds = array<i64: 32, 24>}, {pipeline_mode = #tpu.pipeline_mode<synchronous>, transform_indices = @transform_1, window_bounds = array<i64: 1, 24>}, {pipeline_mode = #tpu.pipeline_mode<synchronous>, transform_indices = @transform_2, window_bounds = array<i64: 24, 16>}, {pipeline_mode = #tpu.pipeline_mode<synchronous>, transform_indices = @transform_3, window_bounds = array<i64: 1, 16>}, {transform_indices = @transform_4, window_bounds = array<i64: 32, 16>}]} {
    %c0 = arith.constant 0 : index
    %c0_0 = arith.constant 0 : index
    %0 = vector.load %arg1[%c0, %c0_0] : memref<32x24xbf16, #tpu.memory_space<vmem>>, vector<32x24xbf16>
    %1 = arith.extf %0 : vector<32x24xbf16> to vector<32x24xf32>
    %c0_1 = arith.constant 0 : index
    %c0_2 = arith.constant 0 : index
    %2 = vector.load %arg2[%c0_1, %c0_2] : memref<1x24xf32, #tpu.memory_space<vmem>>, vector<1x24xf32>
    %3 = vector.broadcast %2 : vector<1x24xf32> to vector<32x24xf32>
    %4 = arith.addf %1, %3 : vector<32x24xf32>
    %cst = arith.constant 0.000000e+00 : f32
    %5 = vector.broadcast %cst : f32 to vector<32x24xf32>
    %6 = arith.maximumf %4, %5 : vector<32x24xf32>
    %7 = arith.truncf %6 : vector<32x24xf32> to vector<32x24xbf16>
    %c0_3 = arith.constant 0 : index
    %c0_4 = arith.constant 0 : index
    %8 = vector.load %arg3[%c0_3, %c0_4] : memref<24x16xbf16, #tpu.memory_space<vmem>>, vector<24x16xbf16>
    %cst_5 = arith.constant dense<0.000000e+00> : vector<32x16xf32>
    %9 = tpu.matmul %7, %8, %cst_5 {dimension_numbers = #tpu.dot_dimension_numbers<[1], [0], [0], [1], [0, 0, 1, 1], [], []>} : vector<32x24xbf16>, vector<24x16xbf16>, vector<32x16xf32> -> vector<32x16xf32>
    %c0_6 = arith.constant 0 : index
    %c0_7 = arith.constant 0 : index
    %10 = vector.load %arg4[%c0_6, %c0_7] : memref<1x16xf32, #tpu.memory_space<vmem>>, vector<1x16xf32>
    %11 = vector.broadcast %10 : vector<1x16xf32> to vector<32x16xf32>
    %12 = arith.addf %9, %11 : vector<32x16xf32>
    %cst_8 = arith.constant 0.000000e+00 : f32
    %13 = vector.broadcast %cst_8 : f32 to vector<32x16xf32>
    %14 = arith.maximumf %12, %13 : vector<32x16xf32>
    %15 = arith.truncf %14 : vector<32x16xf32> to vector<32x16xbf16>
    %c0_9 = arith.constant 0 : index
    %c0_10 = arith.constant 0 : index
    %16 = vector.load %arg5[%c0_9, %c0_10] : memref<32x16xbf16, #tpu.memory_space<vmem>>, vector<32x16xbf16>
    tpu.vector_store %arg5[%c0_9, %c0_10], %15 {strides = array<i32>} : memref<32x16xbf16, #tpu.memory_space<vmem>>, vector<32x16xbf16>,
    return
  }
  func.func @transform_0(%arg0: i32) -> (i32, i32) {
    %c0_i32 = arith.constant 0 : i32
    %c0_i32_0 = arith.constant 0 : i32
    return %arg0, %c0_i32 : i32, i32
  }
  func.func @transform_1(%arg0: i32) -> (i32, i32) {
    %c0_i32 = arith.constant 0 : i32
    %c0_i32_0 = arith.constant 0 : i32
    %c0_i32_1 = arith.constant 0 : i32
    return %c0_i32, %c0_i32_0 : i32, i32
  }
  func.func @transform_2(%arg0: i32) -> (i32, i32) {
    %c0_i32 = arith.constant 0 : i32
    %c0_i32_0 = arith.constant 0 : i32
    %c0_i32_1 = arith.constant 0 : i32
    return %c0_i32, %c0_i32_0 : i32, i32
  }
  func.func @transform_3(%arg0: i32) -> (i32, i32) {
    %c0_i32 = arith.constant 0 : i32
    %c0_i32_0 = arith.constant 0 : i32
    %c0_i32_1 = arith.constant 0 : i32
    return %c0_i32, %c0_i32_0 : i32, i32
  }
  func.func @transform_4(%arg0: i32) -> (i32, i32) {
    %c0_i32 = arith.constant 0 : i32
    %c0_i32_0 = arith.constant 0 : i32
    return %arg0, %c0_i32 : i32, i32
  }
}

module attributes {stable_mosaic.version = 11 : i64} {
  func.func @_head_kernel(%arg0: i32, %arg1: memref<1x16x32xbf16, #tpu.memory_space<vmem>>, %arg2: memref<1x1x32xf32, #tpu.memory_space<vmem>>, %arg3: memref<32x128xbf16, #tpu.memory_space<vmem>>, %arg4: memref<1x128xf32, #tpu.memory_space<vmem>>, %arg5: memref<1x1x128xf32, #tpu.memory_space<vmem>>) attributes {dimension_semantics = [#tpu.dimension_semantics<parallel>], iteration_bounds = array<i64: 2>, scalar_prefetch = 0 : i64, scratch_operands = 0 : i64, tpu.core_type = #tpu.core_type<tc>, window_params = [{transform_indices = @transform_0, window_bounds = array<i64: 1, 16, 32>}, {pipeline_mode = #tpu.pipeline_mode<synchronous>, transform_indices = @transform_1, window_bounds = array<i64: 1, 1, 32>}, {pipeline_mode = #tpu.pipeline_mode<synchronous>, transform_indices = @transform_2, window_bounds = array<i64: 32, 128>}, {pipeline_mode = #tpu.pipeline_mode<synchronous>, transform_indices = @transform_3, window_bounds = array<i64: 1, 128>}, {transform_indices = @transform_4, window_bounds = array<i64: 1, 1, 128>}]} {
    %c0 = arith.constant 0 : index
    %c0_0 = arith.constant 0 : index
    %c0_1 = arith.constant 0 : index
    %0 = vector.load %arg1[%c0, %c0_0, %c0_1] : memref<1x16x32xbf16, #tpu.memory_space<vmem>>, vector<1x16x32xbf16>
    %1 = vector.shape_cast %0 : vector<1x16x32xbf16> to vector<16x32xbf16>
    %2 = arith.extf %1 : vector<16x32xbf16> to vector<16x32xf32>
    %c0_2 = arith.constant 0 : index
    %c0_3 = arith.constant 0 : index
    %c0_4 = arith.constant 0 : index
    %3 = vector.load %arg2[%c0_2, %c0_3, %c0_4] : memref<1x1x32xf32, #tpu.memory_space<vmem>>, vector<1x1x32xf32>
    %4 = vector.shape_cast %3 : vector<1x1x32xf32> to vector<1x32xf32>
    %5 = vector.broadcast %4 : vector<1x32xf32> to vector<16x32xf32>
    %6 = arith.addf %2, %5 : vector<16x32xf32>
    %cst = arith.constant 0.000000e+00 : f32
    %7 = vector.broadcast %cst : f32 to vector<16x32xf32>
    %8 = arith.maximumf %6, %7 : vector<16x32xf32>
    %cst_5 = arith.constant dense<0.000000e+00> : vector<32xf32>
    %9 = vector.multi_reduction <add>, %8, %cst_5 [0] : vector<16x32xf32> to vector<32xf32>
    %10 = vector.shape_cast %9 : vector<32xf32> to vector<1x32xf32>
    %cst_6 = arith.constant 1.600000e+01 : f32
    %11 = vector.broadcast %cst_6 : f32 to vector<1x32xf32>
    %12 = arith.divf %10, %11 : vector<1x32xf32>
    %13 = arith.truncf %12 : vector<1x32xf32> to vector<1x32xbf16>
    %c0_7 = arith.constant 0 : index
    %c0_8 = arith.constant 0 : index
    %14 = vector.load %arg3[%c0_7, %c0_8] : memref<32x128xbf16, #tpu.memory_space<vmem>>, vector<32x128xbf16>
    %cst_9 = arith.constant dense<0.000000e+00> : vector<1x128xf32>
    %15 = tpu.matmul %13, %14, %cst_9 {dimension_numbers = #tpu.dot_dimension_numbers<[1], [0], [0], [1], [0, 0, 1, 1], [], []>} : vector<1x32xbf16>, vector<32x128xbf16>, vector<1x128xf32> -> vector<1x128xf32>
    %c0_10 = arith.constant 0 : index
    %c0_11 = arith.constant 0 : index
    %16 = vector.load %arg4[%c0_10, %c0_11] : memref<1x128xf32, #tpu.memory_space<vmem>>, vector<1x128xf32>
    %17 = arith.addf %15, %16 : vector<1x128xf32>
    %c0_12 = arith.constant 0 : index
    %c0_13 = arith.constant 0 : index
    %c0_14 = arith.constant 0 : index
    %18 = vector.load %arg5[%c0_12, %c0_13, %c0_14] : memref<1x1x128xf32, #tpu.memory_space<vmem>>, vector<1x1x128xf32>
    %19 = vector.shape_cast %18 : vector<1x1x128xf32> to vector<1x128xf32>
    %20 = vector.shape_cast %17 : vector<1x128xf32> to vector<1x1x128xf32>
    tpu.vector_store %arg5[%c0_12, %c0_13, %c0_14], %20 {strides = array<i32>} : memref<1x1x128xf32, #tpu.memory_space<vmem>>, vector<1x1x128xf32>,
    return
  }
  func.func @transform_0(%arg0: i32) -> (i32, i32, i32) {
    %c0_i32 = arith.constant 0 : i32
    %c0_i32_0 = arith.constant 0 : i32
    %c0_i32_1 = arith.constant 0 : i32
    return %arg0, %c0_i32, %c0_i32_0 : i32, i32, i32
  }
  func.func @transform_1(%arg0: i32) -> (i32, i32, i32) {
    %c0_i32 = arith.constant 0 : i32
    %c0_i32_0 = arith.constant 0 : i32
    %c0_i32_1 = arith.constant 0 : i32
    %c0_i32_2 = arith.constant 0 : i32
    return %c0_i32, %c0_i32_0, %c0_i32_1 : i32, i32, i32
  }
  func.func @transform_2(%arg0: i32) -> (i32, i32) {
    %c0_i32 = arith.constant 0 : i32
    %c0_i32_0 = arith.constant 0 : i32
    %c0_i32_1 = arith.constant 0 : i32
    return %c0_i32, %c0_i32_0 : i32, i32
  }
  func.func @transform_3(%arg0: i32) -> (i32, i32) {
    %c0_i32 = arith.constant 0 : i32
    %c0_i32_0 = arith.constant 0 : i32
    %c0_i32_1 = arith.constant 0 : i32
    return %c0_i32, %c0_i32_0 : i32, i32
  }
  func.func @transform_4(%arg0: i32) -> (i32, i32, i32) {
    %c0_i32 = arith.constant 0 : i32
    %c0_i32_0 = arith.constant 0 : i32
    %c0_i32_1 = arith.constant 0 : i32
    return %arg0, %c0_i32, %c0_i32_0 : i32, i32, i32
  }
}

</mosaic_0001>

<llo_original>
// kernel: forward.14
$region0: #{forward.14}
  #allocation0 [shape = 'u32[]', space=smem, size = 0x4, offset = 0x4, fixed_abs, tag = 'smem constant byte address 0x4 - core index']
  #allocation1 [shape = 'u32[144,128]{1,0:T(1,128)}', space=vmem, size = 0x12000, scoped, tag = 'internal scratch']
  %s0 = inlined_call_operand.vmem [shape: bf16[128,16], index: 0, kind: input, shape index: {}]
  %s1 = inlined_call_operand.vmem [shape: f32[1,16], index: 1, kind: input, shape index: {}]
  %s2 = inlined_call_operand.vmem [shape: bf16[16,16], index: 2, kind: input, shape index: {}]
  %s3 = inlined_call_operand.vmem [shape: f32[1,16], index: 3, kind: input, shape index: {}]
  %s4 = inlined_call_operand.vmem [shape: bf16[128,16], index: 4, kind: output, shape index: {}]
  %s5 = sld [smem:[#allocation0]]
  $region26: #{forward.14} parent=0
    _
  %s7 = ssub.s32 1, %s5
  %s8 = scalar_select 0, %s7, %s5
  // Predicated region
  $region2: #{forward.14} parent=0 // pred_check
    _
  $region3: #{forward.14} parent=0 // pred_check_branch
    %10 = sbr.rel (0) target = $region5
  $region4: #{forward.14} parent=0 // pred_region
    _
  $region5: #{forward.14} parent=0 // pred_fallthru
    _
  // Predicated region
  $region6: #{forward.14} parent=0 // pred_check
    _
  $region7: #{forward.14} parent=0 // pred_check_branch
    %12 = sbr.rel (0) target = $region9
  $region8: #{forward.14} parent=0 // pred_region
    _
  $region9: #{forward.14} parent=0 // pred_fallthru
    _
  // Predicated region
  $region10: #{forward.14} parent=0 // pred_check
    _
  $region11: #{forward.14} parent=0 // pred_check_branch
    %14 = sbr.rel (0) target = $region13
  $region12: #{forward.14} parent=0 // pred_region
    _
  $region13: #{forward.14} parent=0 // pred_fallthru
    _
  // Predicated region
  $region14: #{forward.14} parent=0 // pred_check
    _
  $region15: #{forward.14} parent=0 // pred_check_branch
    %16 = sbr.rel (0) target = $region17
  $region16: #{forward.14} parent=0 // pred_region
    _
  $region17: #{forward.14} parent=0 // pred_fallthru
    _
  %v18 = vld [vmem:[%s0] sm:$0xf]
  %v19 = vld [vmem:[%s0 + $0x4] sm:$0xf]
  %v20 = vld [vmem:[%s0 + $0x8] sm:$0xf]
  %v21 = vld [vmem:[%s0 + $0xc] sm:$0xf]
  %v22 = vld [vmem:[%s0 + $0x10] sm:$0xf]
  %v23 = vld [vmem:[%s0 + $0x14] sm:$0xf]
  %v24 = vld [vmem:[%s0 + $0x18] sm:$0xf]
  %v25 = vld [vmem:[%s0 + $0x1c] sm:$0xf]
  %v26 = vld [vmem:[%s0 + $0x20] sm:$0xf]
  %v27 = vld [vmem:[%s0 + $0x24] sm:$0xf]
  %v28 = vld [vmem:[%s0 + $0x28] sm:$0xf]
  %v29 = vld [vmem:[%s0 + $0x2c] sm:$0xf]
  %v30 = vld [vmem:[%s0 + $0x30] sm:$0xf]
  %v31 = vld [vmem:[%s0 + $0x34] sm:$0xf]
  %v32 = vld [vmem:[%s0 + $0x38] sm:$0xf]
  %v33 = vld [vmem:[%s0 + $0x3c] sm:$0xf]
  %v34 = vunpack.c.l.bf16 %v18
  %v35 = vunpack.c.l.bf16 %v19
  %v36 = vunpack.c.l.bf16 %v20
  %v37 = vunpack.c.l.bf16 %v21
  %v38 = vunpack.c.l.bf16 %v22
  %v39 = vunpack.c.l.bf16 %v23
  %v40 = vunpack.c.l.bf16 %v24
  %v41 = vunpack.c.l.bf16 %v25
  %v42 = vunpack.c.l.bf16 %v26
  %v43 = vunpack.c.l.bf16 %v27
  %v44 = vunpack.c.l.bf16 %v28
  %v45 = vunpack.c.l.bf16 %v29
  %v46 = vunpack.c.l.bf16 %v30
  %v47 = vunpack.c.l.bf16 %v31
  %v48 = vunpack.c.l.bf16 %v32
  %v49 = vunpack.c.l.bf16 %v33
  %v50 = vld [vmem:[%s1] sm:$0x1]
  %v52 = vlaneseq
  %v53 = vshrl.u32 %v52, 7
  %v54 = vsub.s32 0, %v53
  %v55 = vrot.slane %v50, %v54
  %v57 = vadd.f32 %v34, %v55
  %v58 = vadd.f32 %v35, %v55
  %v59 = vadd.f32 %v36, %v55
  %v60 = vadd.f32 %v37, %v55
  %v61 = vadd.f32 %v38, %v55
  %v62 = vadd.f32 %v39, %v55
  %v63 = vadd.f32 %v40, %v55
  %v64 = vadd.f32 %v41, %v55
  %v65 = vadd.f32 %v42, %v55
  %v66 = vadd.f32 %v43, %v55
  %v67 = vadd.f32 %v44, %v55
  %v68 = vadd.f32 %v45, %v55
  %v69 = vadd.f32 %v46, %v55
  %v70 = vadd.f32 %v47, %v55
  %v71 = vadd.f32 %v48, %v55
  %v72 = vadd.f32 %v49, %v55
  %v73 = vmax.f32 %v57, 0.0
  %v74 = vmax.f32 %v58, 0.0
  %v75 = vmax.f32 %v59, 0.0
  %v76 = vmax.f32 %v60, 0.0
  %v77 = vmax.f32 %v61, 0.0
  %v78 = vmax.f32 %v62, 0.0
  %v79 = vmax.f32 %v63, 0.0
  %v80 = vmax.f32 %v64, 0.0
  %v81 = vmax.f32 %v65, 0.0
  %v82 = vmax.f32 %v66, 0.0
  %v83 = vmax.f32 %v67, 0.0
  %v84 = vmax.f32 %v68, 0.0
  %v85 = vmax.f32 %v69, 0.0
  %v86 = vmax.f32 %v70, 0.0
  %v87 = vmax.f32 %v71, 0.0
  %v88 = vmax.f32 %v72, 0.0
  %v89 = vpack.c.bf16 %v74, %v73
  %v90 = vpack.c.bf16 %v76, %v75
  %v91 = vpack.c.bf16 %v78, %v77
  %v92 = vpack.c.bf16 %v80, %v79
  %v93 = vpack.c.bf16 %v82, %v81
  %v94 = vpack.c.bf16 %v84, %v83
  %v95 = vpack.c.bf16 %v86, %v85
  %v96 = vpack.c.bf16 %v88, %v87
  %v97 = vld [vmem:[%s2] sm:$0xf]
  %v98 = vld [vmem:[%s2 + $0x4] sm:$0xf]
  %v99 = vld [vmem:[%s3] sm:$0x1]
  %v101 = vlaneseq
  %v102 = vshrl.u32 %v101, 7
  %v103 = vsub.s32 0, %v102
  %v104 = vrot.slane %v99, %v103
  %v108 = vunpack.c.l.b16 %v97
  %v109 = vunpack.c.l.b16 %v98
  %v110 = vpack.c.b16 %v109, %v108
  %vm112 = vcmask 130048
  %v114 = vsel %vm112, %v89, 0
  %v117 = vsel %vm112, %v90, 0
  %v120 = vsel %vm112, %v91, 0
  %v123 = vsel %vm112, %v92, 0
  %v126 = vsel %vm112, %v93, 0
  %v129 = vsel %vm112, %v94, 0
  %v132 = vsel %vm112, %v95, 0
  %v135 = vsel %vm112, %v96, 0
  %137 = vmatprep.subr.bf16.mxu0 0
  %138 = vmatpush1.bf16.msra.mxu0 0
  %139 = vmatprep.subr.bf16.mxu0 0
  %140 = vmatpush1.bf16.msra.mxu0 0
  %141 = vmatprep.subr.bf16.mxu0 0
  %142 = vmatpush1.bf16.msra.mxu0 0
  %143 = vmatprep.subr.bf16.mxu0 0
  %144 = vmatpush1.bf16.msra.mxu0 0
  %145 = vmatprep.subr.bf16.mxu0 0
  %146 = vmatpush1.bf16.msra.mxu0 0
  %147 = vmatprep.subr.bf16.mxu0 0
  %148 = vmatpush1.bf16.msra.mxu0 0
  %149 = vmatprep.subr.bf16.mxu0 0
  %150 = vmatpush1.bf16.msra.mxu0 0
  %151 = vmatprep.subr.bf16.mxu0 0
  %152 = vmatpush1.bf16.msra.mxu0 %v110
  %153 = vmatprep.subr.bf16.mxu0 0
  %154 = vmatpush2.bf16.msra.mxu0 0
  %155 = vmatprep.subr.bf16.mxu0 0
  %156 = vmatpush2.bf16.msra.mxu0 0
  %157 = vmatprep.subr.bf16.mxu0 0
  %158 = vmatpush2.bf16.msra.mxu0 0
  %159 = vmatprep.subr.bf16.mxu0 0
  %160 = vmatpush2.bf16.msra.mxu0 0
  %161 = vmatprep.subr.bf16.mxu0 0
  %162 = vmatpush2.bf16.msra.mxu0 0
  %163 = vmatprep.subr.bf16.mxu0 0
  %164 = vmatpush2.bf16.msra.mxu0 0
  %165 = vmatprep.subr.bf16.mxu0 0
  %166 = vmatpush2.bf16.msra.mxu0 0
  %167 = vmatprep.subr.bf16.mxu0 0
  %168 = vmatpush2.bf16.msra.mxu0 0
  %169 = vmatprep.mubr.bf16.mxu0 0
  %170 = vmatmul.mubr.bf16.gmra.mxu0 %v114
  %v171 = vpop.f32.mrf.mxu0
  %v172 = vadd.f32 %v104, %v171
  %v173 = vpop.f32.mrf.mxu0
  %v174 = vpop.f32.mrf.mxu0
  %v175 = vadd.f32 %v104, %v174
  %v176 = vpop.f32.mrf.mxu0
  %177 = vmatprep.mubr.bf16.mxu0 0
  %178 = vmatmul.mubr.bf16.gmra.mxu0 %v117
  %v179 = vpop.f32.mrf.mxu0
  %v180 = vadd.f32 %v104, %v179
  %v181 = vpop.f32.mrf.mxu0
  %v182 = vpop.f32.mrf.mxu0
  %v183 = vadd.f32 %v104, %v182
  %v184 = vpop.f32.mrf.mxu0
  %185 = vmatprep.mubr.bf16.mxu0 0
  %186 = vmatmul.mubr.bf16.gmra.mxu0 %v120
  %v187 = vpop.f32.mrf.mxu0
  %v188 = vadd.f32 %v104, %v187
  %v189 = vpop.f32.mrf.mxu0
  %v190 = vpop.f32.mrf.mxu0
  %v191 = vadd.f32 %v104, %v190
  %v192 = vpop.f32.mrf.mxu0
  %193 = vmatprep.mubr.bf16.mxu0 0
  %194 = vmatmul.mubr.bf16.gmra.mxu0 %v123
  %v195 = vpop.f32.mrf.mxu0
  %v196 = vadd.f32 %v104, %v195
  %v197 = vpop.f32.mrf.mxu0
  %v198 = vpop.f32.mrf.mxu0
  %v199 = vadd.f32 %v104, %v198
  %v200 = vpop.f32.mrf.mxu0
  %201 = vmatprep.mubr.bf16.mxu0 0
  %202 = vmatmul.mubr.bf16.gmra.mxu0 %v126
  %v203 = vpop.f32.mrf.mxu0
  %v204 = vadd.f32 %v104, %v203
  %v205 = vpop.f32.mrf.mxu0
  %v206 = vpop.f32.mrf.mxu0
  %v207 = vadd.f32 %v104, %v206
  %v208 = vpop.f32.mrf.mxu0
  %209 = vmatprep.mubr.bf16.mxu0 0
  %210 = vmatmul.mubr.bf16.gmra.mxu0 %v129
  %v211 = vpop.f32.mrf.mxu0
  %v212 = vadd.f32 %v104, %v211
  %v213 = vpop.f32.mrf.mxu0
  %v214 = vpop.f32.mrf.mxu0
  %v215 = vadd.f32 %v104, %v214
  %v216 = vpop.f32.mrf.mxu0
  %217 = vmatprep.mubr.bf16.mxu0 0
  %218 = vmatmul.mubr.bf16.gmra.mxu0 %v132
  %v219 = vpop.f32.mrf.mxu0
  %v220 = vadd.f32 %v104, %v219
  %v221 = vpop.f32.mrf.mxu0
  %v222 = vpop.f32.mrf.mxu0
  %v223 = vadd.f32 %v104, %v222
  %v224 = vpop.f32.mrf.mxu0
  %225 = vmatprep.mubr.bf16.mxu0 0
  %226 = vmatmul.mubr.bf16.gmra.mxu0 %v135
  %v227 = vpop.f32.mrf.mxu0
  %v228 = vadd.f32 %v104, %v227
  %v229 = vpop.f32.mrf.mxu0
  %v230 = vpop.f32.mrf.mxu0
  %v231 = vadd.f32 %v104, %v230
  %v232 = vpop.f32.mrf.mxu0
  %233 = vdwg.mxu0
  %v234 = vmax.f32 %v172, 0.0
  %v235 = vmax.f32 %v175, 0.0
  %v236 = vmax.f32 %v180, 0.0
  %v237 = vmax.f32 %v183, 0.0
  %v238 = vmax.f32 %v188, 0.0
  %v239 = vmax.f32 %v191, 0.0
  %v240 = vmax.f32 %v196, 0.0
  %v241 = vmax.f32 %v199, 0.0
  %v242 = vmax.f32 %v204, 0.0
  %v243 = vmax.f32 %v207, 0.0
  %v244 = vmax.f32 %v212, 0.0
  %v245 = vmax.f32 %v215, 0.0
  %v246 = vmax.f32 %v220, 0.0
  %v247 = vmax.f32 %v223, 0.0
  %v248 = vmax.f32 %v228, 0.0
  %v249 = vmax.f32 %v231, 0.0
  %v250 = vpack.c.bf16 %v235, %v234
  %v251 = vpack.c.bf16 %v237, %v236
  %v252 = vpack.c.bf16 %v239, %v238
  %v253 = vpack.c.bf16 %v241, %v240
  %v254 = vpack.c.bf16 %v243, %v242
  %v255 = vpack.c.bf16 %v245, %v244
  %v256 = vpack.c.bf16 %v247, %v246
  %v257 = vpack.c.bf16 %v249, %v248
  %v266 = vunpack.c.l.b16 %v250
  %v267 = vunpack.c.h.b16 %v250
  %v268 = vunpack.c.l.b16 %v251
  %v269 = vunpack.c.h.b16 %v251
  %v270 = vunpack.c.l.b16 %v252
  %v271 = vunpack.c.h.b16 %v252
  %v272 = vunpack.c.l.b16 %v253
  %v273 = vunpack.c.h.b16 %v253
  %v274 = vunpack.c.l.b16 %v254
  %v275 = vunpack.c.h.b16 %v254
  %v276 = vunpack.c.l.b16 %v255
  %v277 = vunpack.c.h.b16 %v255
  %v278 = vunpack.c.l.b16 %v256
  %v279 = vunpack.c.h.b16 %v256
  %v280 = vunpack.c.l.b16 %v257
  %v281 = vunpack.c.h.b16 %v257
  %v282 = vpack.c.b16 %v266, %v266
  %v283 = vpack.c.b16 %v267, %v267
  %v284 = vpack.c.b16 %v268, %v268
  %v285 = vpack.c.b16 %v269, %v269
  %v286 = vpack.c.b16 %v270, %v270
  %v287 = vpack.c.b16 %v271, %v271
  %v288 = vpack.c.b16 %v272, %v272
  %v289 = vpack.c.b16 %v273, %v273
  %v290 = vpack.c.b16 %v274, %v274
  %v291 = vpack.c.b16 %v275, %v275
  %v292 = vpack.c.b16 %v276, %v276
  %v293 = vpack.c.b16 %v277, %v277
  %v294 = vpack.c.b16 %v278, %v278
  %v295 = vpack.c.b16 %v279, %v279
  %v296 = vpack.c.b16 %v280, %v280
  %v297 = vpack.c.b16 %v281, %v281
  %vm314 = vcmask 125952
  %315 = vst.msk [vmem:[%s4] sm:$0xf] %vm314, %v282
  %316 = vst.msk [vmem:[%s4 + $0x4] sm:$0xf] %vm314, %v283
  %317 = vst.msk [vmem:[%s4 + $0x8] sm:$0xf] %vm314, %v284
  %318 = vst.msk [vmem:[%s4 + $0xc] sm:$0xf] %vm314, %v285
  %319 = vst.msk [vmem:[%s4 + $0x10] sm:$0xf] %vm314, %v286
  %320 = vst.msk [vmem:[%s4 + $0x14] sm:$0xf] %vm314, %v287
  %321 = vst.msk [vmem:[%s4 + $0x18] sm:$0xf] %vm314, %v288
  %322 = vst.msk [vmem:[%s4 + $0x1c] sm:$0xf] %vm314, %v289
  %323 = vst.msk [vmem:[%s4 + $0x20] sm:$0xf] %vm314, %v290
  %324 = vst.msk [vmem:[%s4 + $0x24] sm:$0xf] %vm314, %v291
  %325 = vst.msk [vmem:[%s4 + $0x28] sm:$0xf] %vm314, %v292
  %326 = vst.msk [vmem:[%s4 + $0x2c] sm:$0xf] %vm314, %v293
  %327 = vst.msk [vmem:[%s4 + $0x30] sm:$0xf] %vm314, %v294
  %328 = vst.msk [vmem:[%s4 + $0x34] sm:$0xf] %vm314, %v295
  %329 = vst.msk [vmem:[%s4 + $0x38] sm:$0xf] %vm314, %v296
  %330 = vst.msk [vmem:[%s4 + $0x3c] sm:$0xf] %vm314, %v297
  // Predicated region
  $region18: #{forward.14} parent=0 // pred_check
    _
  $region19: #{forward.14} parent=0 // pred_check_branch
    %332 = sbr.rel (0) target = $region21
  $region20: #{forward.14} parent=0 // pred_region
    _
  $region21: #{forward.14} parent=0 // pred_fallthru
    _
  // Predicated region
  $region22: #{forward.14} parent=0 // pred_check
    _
  $region23: #{forward.14} parent=0 // pred_check_branch
    %334 = sbr.rel (0) target = $region25
  $region24: #{forward.14} parent=0 // pred_region
    _
  $region25: #{forward.14} parent=0 // pred_fallthru
    _

// kernel: forward.13
$region0: #{forward.13}
  #allocation0 [shape = 'u32[]', space=smem, size = 0x4, offset = 0x4, fixed_abs, tag = 'smem constant byte address 0x4 - core index']
  #allocation1 [shape = 'u32[144,128]{1,0:T(1,128)}', space=vmem, size = 0x12000, scoped, tag = 'internal scratch']
  %s0 = inlined_call_operand.vmem [shape: bf16[2,9,9,16], index: 0, kind: input, shape index: {}]
  %s1 = inlined_call_operand.vmem [shape: bf16[2,9,8,16], index: 1, kind: input, shape index: {}]
  %s2 = inlined_call_operand.vmem [shape: bf16[2,8,9,16], index: 2, kind: input, shape index: {}]
  %s3 = inlined_call_operand.vmem [shape: bf16[2,8,8,16], index: 3, kind: input, shape index: {}]
  %s4 = inlined_call_operand.vmem [shape: bf16[2,8,8,16], index: 4, kind: output, shape index: {}]
  %s5 = sld [smem:[#allocation0]]
  $region49: #{forward.13} parent=0
    _
  %s7 = ssub.s32 1, %s5
  %s8 = scalar_select 0, %s7, %s5
  loop: start=0, step=1, limit=4
  $region2: #{forward.13} parent=0 // loop_pre_header
    _
  $region3: #{forward.13} parent=0 // loop_header
    %s10 = sphi 0, %s14
    %p11 = scmp.ge.s32.totalorder %s10, 4
    %s20 = sphi 0, %s22
    %s23 = sphi 0, %s20
    %s24 = sphi 0, %s23
    %s40 = sphi 0, %s24
    %s46 = sphi 0, %s48
    %s49 = sphi 0, %s46
    %s50 = sphi 0, %s49
    %s66 = sphi 0, %s50
    %s72 = sphi 0, %s74
    %s75 = sphi 0, %s72
    %s76 = sphi 0, %s75
    %s92 = sphi 0, %s76
    %s98 = sphi 0, %s100
    %s101 = sphi 0, %s98
    %s102 = sphi 0, %s101
    %s118 = sphi 0, %s102
    %s124 = sphi 0, %s126
    %s127 = sphi 0, %s124
    %s128 = sphi 0, %s127
    %s144 = sphi 0, %s128
  $region4: #{forward.13} parent=0 // loop_header_branch
    %13 = sbr.rel (%p11) target = $region8
  $region5: #{forward.13} parent=0 // loop_body
    %s15 = ssub.s32 %s10, 1
    %s16 = ssub.s32 %s10, 2
    %s17 = sadd.s32 %s10, 1
    %s18 = ssub.s32 %s10, %s17
    %p19 = scmp.eq.s32.totalorder %s18, 0
    %s21 = sadd.s32 %s20, 1
    %s22 = scalar_select %p19, %s20, %s21
    %p25 = pneg %p19
    %p26 = scmp.eq.s32.totalorder %s10, 1
    %p27 = por %p25, %p26
    %p28 = scmp.ne.s32.totalorder %s20, %s23
    %p29 = scmp.eq.s32.totalorder %s10, 0
    %p30 = por %p28, %p29
    %p31 = scmp.ne.s32.totalorder %s20, %s23
    %p32 = scmp.eq.s32.totalorder %s15, 1
    %p33 = por %p31, %p32
    %p34 = scmp.ne.s32.totalorder %s23, %s24
    %p35 = scmp.eq.s32.totalorder %s15, 0
    %p36 = por %p34, %p35
    %p37 = scmp.ne.s32.totalorder %s23, %s24
    %p38 = scmp.eq.s32.totalorder %s16, 1
    %p39 = por %p37, %p38
    %p41 = scmp.ne.s32.totalorder %s24, %s40
    %p42 = scmp.eq.s32.totalorder %s16, 0
    %p43 = por %p41, %p42
    %s44 = ssub.s32 %s10, %s17
    %p45 = scmp.eq.s32.totalorder %s44, 0
    %s47 = sadd.s32 %s46, 1
    %s48 = scalar_select %p45, %s46, %s47
    %p51 = pneg %p45
    %p52 = scmp.eq.s32.totalorder %s10, 1
    %p53 = por %p51, %p52
    %p54 = scmp.ne.s32.totalorder %s46, %s49
    %p55 = scmp.eq.s32.totalorder %s10, 0
    %p56 = por %p54, %p55
    %p57 = scmp.ne.s32.totalorder %s46, %s49
    %p58 = scmp.eq.s32.totalorder %s15, 1
    %p59 = por %p57, %p58
    %p60 = scmp.ne.s32.totalorder %s49, %s50
    %p61 = scmp.eq.s32.totalorder %s15, 0
    %p62 = por %p60, %p61
    %p63 = scmp.ne.s32.totalorder %s49, %s50
    %p64 = scmp.eq.s32.totalorder %s16, 1
    %p65 = por %p63, %p64
    %p67 = scmp.ne.s32.totalorder %s50, %s66
    %p68 = scmp.eq.s32.totalorder %s16, 0
    %p69 = por %p67, %p68
    %s70 = ssub.s32 %s10, %s17
    %p71 = scmp.eq.s32.totalorder %s70, 0
    %s73 = sadd.s32 %s72, 1
    %s74 = scalar_select %p71, %s72, %s73
    %p77 = pneg %p71
    %p78 = scmp.eq.s32.totalorder %s10, 1
    %p79 = por %p77, %p78
    %p80 = scmp.ne.s32.totalorder %s72, %s75
    %p81 = scmp.eq.s32.totalorder %s10, 0
    %p82 = por %p80, %p81
    %p83 = scmp.ne.s32.totalorder %s72, %s75
    %p84 = scmp.eq.s32.totalorder %s15, 1
    %p85 = por %p83, %p84
    %p86 = scmp.ne.s32.totalorder %s75, %s76
    %p87 = scmp.eq.s32.totalorder %s15, 0
    %p88 = por %p86, %p87
    %p89 = scmp.ne.s32.totalorder %s75, %s76
    %p90 = scmp.eq.s32.totalorder %s16, 1
    %p91 = por %p89, %p90
    %p93 = scmp.ne.s32.totalorder %s76, %s92
    %p94 = scmp.eq.s32.totalorder %s16, 0
    %p95 = por %p93, %p94
    %s96 = ssub.s32 %s10, %s17
    %p97 = scmp.eq.s32.totalorder %s96, 0
    %s99 = sadd.s32 %s98, 1
    %s100 = scalar_select %p97, %s98, %s99
    %p103 = pneg %p97
    %p104 = scmp.eq.s32.totalorder %s10, 1
    %p105 = por %p103, %p104
    %p106 = scmp.ne.s32.totalorder %s98, %s101
    %p107 = scmp.eq.s32.totalorder %s10, 0
    %p108 = por %p106, %p107
    %p109 = scmp.ne.s32.totalorder %s98, %s101
    %p110 = scmp.eq.s32.totalorder %s15, 1
    %p111 = por %p109, %p110
    %p112 = scmp.ne.s32.totalorder %s101, %s102
    %p113 = scmp.eq.s32.totalorder %s15, 0
    %p114 = por %p112, %p113
    %p115 = scmp.ne.s32.totalorder %s101, %s102
    %p116 = scmp.eq.s32.totalorder %s16, 1
    %p117 = por %p115, %p116
    %p119 = scmp.ne.s32.totalorder %s102, %s118
    %p120 = scmp.eq.s32.totalorder %s16, 0
    %p121 = por %p119, %p120
    %s122 = ssub.s32 %s10, %s17
    %p123 = scmp.eq.s32.totalorder %s122, 0
    %s125 = sadd.s32 %s124, 1
    %s126 = scalar_select %p123, %s124, %s125
    %p129 = pneg %p123
    %p130 = scmp.eq.s32.totalorder %s10, 1
    %p131 = por %p129, %p130
    %p132 = scmp.ne.s32.totalorder %s124, %s127
    %p133 = scmp.eq.s32.totalorder %s10, 0
    %p134 = por %p132, %p133
    %p135 = scmp.ne.s32.totalorder %s124, %s127
    %p136 = scmp.eq.s32.totalorder %s15, 1
    %p137 = por %p135, %p136
    %p138 = scmp.ne.s32.totalorder %s127, %s128
    %p139 = scmp.eq.s32.totalorder %s15, 0
    %p140 = por %p138, %p139
    %p141 = scmp.ne.s32.totalorder %s127, %s128
    %p142 = scmp.eq.s32.totalorder %s16, 1
    %p143 = por %p141, %p142
    %p145 = scmp.ne.s32.totalorder %s128, %s144
    %p146 = scmp.eq.s32.totalorder %s16, 0
    %p147 = por %p145, %p146
    %p148 = scmp.le.s32.totalorder 1, %s10
    %p149 = scmp.lt.s32.totalorder %s10, 3
    %p150 = pnand %p148, %p149
    %p151 = pneg %p150
    // Predicated region
    $region9: #{forward.13} parent=5 // pred_check
      _
    $region10: #{forward.13} parent=5 // pred_check_branch
      %153 = sbr.rel (%p150) target = $region12
    $region11: #{forward.13} parent=5 // pred_region
      %s154 = ssub.s32 %s10, 1
    $region12: #{forward.13} parent=5 // pred_fallthru
      _
    %p155 = scmp.lt.s32.totalorder %s10, 2
    // Predicated region
    $region13: #{forward.13} parent=5 // pred_check
      %p156 = pneg %p155
    $region14: #{forward.13} parent=5 // pred_check_branch
      %158 = sbr.rel (%p156) target = $region16
    $region15: #{forward.13} parent=5 // pred_region
      // Predicated region
      $region17: #{forward.13} parent=15 // pred_check
        %p159 = pneg %p30
      $region18: #{forward.13} parent=15 // pred_check_branch
        %161 = sbr.rel (%p159) target = $region20
      $region19: #{forward.13} parent=15 // pred_region
        %p162 = scmp.lt.s32.totalorder %s10, 1
        %s163 = scalar_select %p162, %s10, 1
        %s164 = smul.addr %s163, 18
        %s165 = smul.addr %s164, 4
        %s166 = scalar_lea.vmem %s0, %s165
      $region20: #{forward.13} parent=15 // pred_fallthru
        _
      // Predicated region
      $region21: #{forward.13} parent=15 // pred_check
        %p167 = pneg %p56
      $region22: #{forward.13} parent=15 // pred_check_branch
        %169 = sbr.rel (%p167) target = $region24
      $region23: #{forward.13} parent=15 // pred_region
        %p170 = scmp.lt.s32.totalorder %s10, 1
        %s171 = scalar_select %p170, %s10, 1
        %s172 = smul.addr %s171, 9
        %s173 = smul.addr %s172, 4
        %s174 = scalar_lea.vmem %s1, %s173
      $region24: #{forward.13} parent=15 // pred_fallthru
        _
      // Predicated region
      $region25: #{forward.13} parent=15 // pred_check
        %p175 = pneg %p82
      $region26: #{forward.13} parent=15 // pred_check_branch
        %177 = sbr.rel (%p175) target = $region28
      $region27: #{forward.13} parent=15 // pred_region
        %p178 = scmp.lt.s32.totalorder %s10, 1
        %s179 = scalar_select %p178, %s10, 1
        %s180 = smul.addr %s179, 16
        %s181 = smul.addr %s180, 4
        %s182 = scalar_lea.vmem %s2, %s181
      $region28: #{forward.13} parent=15 // pred_fallthru
        _
      // Predicated region
      $region29: #{forward.13} parent=15 // pred_check
        %p183 = pneg %p108
      $region30: #{forward.13} parent=15 // pred_check_branch
        %185 = sbr.rel (%p183) target = $region32
      $region31: #{forward.13} parent=15 // pred_region
        %p186 = scmp.lt.s32.totalorder %s10, 1
        %s187 = scalar_select %p186, %s10, 1
        %s188 = smul.addr %s187, 8
        %s189 = smul.addr %s188, 4
        %s190 = scalar_lea.vmem %s3, %s189
      $region32: #{forward.13} parent=15 // pred_fallthru
        _
    $region16: #{forward.13} parent=5 // pred_fallthru
      _
    %p191 = scmp.le.s32.totalorder 1, %s10
    %p192 = scmp.lt.s32.totalorder %s10, 3
    %p193 = pnand %p191, %p192
    %p194 = pneg %p193
    // Predicated region
    $region33: #{forward.13} parent=5 // pred_check
      _
    $region34: #{forward.13} parent=5 // pred_check_branch
      %196 = sbr.rel (%p193) target = $region36
    $region35: #{forward.13} parent=5 // pred_region
      %s197 = ssub.s32 %s10, 1
      %p198 = scmp.lt.s32.totalorder %s15, 1
      %s199 = scalar_select %p198, %s15, 1
      %s200 = smul.addr %s199, 18
      %s201 = smul.addr %s200, 4
      %s202 = scalar_lea.vmem %s0, %s201
      %p203 = pneg %p36
      %p204 = pneg %p33
      %p205 = scmp.lt.s32.totalorder %s15, 1
      %s206 = scalar_select %p205, %s15, 1
      %s207 = smul.addr %s206, 9
      %s208 = smul.addr %s207, 4
      %s209 = scalar_lea.vmem %s1, %s208
      %p210 = pneg %p62
      %p211 = pneg %p59
      %p212 = scmp.lt.s32.totalorder %s15, 1
      %s213 = scalar_select %p212, %s15, 1
      %s214 = smul.addr %s213, 16
      %s215 = smul.addr %s214, 4
      %s216 = scalar_lea.vmem %s2, %s215
      %p217 = pneg %p88
      %p218 = pneg %p85
      %p219 = scmp.lt.s32.totalorder %s15, 1
      %s220 = scalar_select %p219, %s15, 1
      %s221 = smul.addr %s220, 8
      %s222 = smul.addr %s221, 4
      %s223 = scalar_lea.vmem %s3, %s222
      %p224 = pneg %p114
      %p225 = pneg %p111
      %p226 = pneg %p140
      %p227 = pneg %p137
      %p228 = scmp.lt.s32.totalorder %s15, 1
      %s229 = scalar_select %p228, %s15, 1
      %s230 = smul.addr %s229, 8
      %s231 = smul.addr %s230, 4
      %s232 = scalar_lea.vmem %s4, %s231
      %p233 = scmp.lt.s32.totalorder %s15, 1
      %s234 = scalar_select %p233, %s15, 1
      %s235 = smul.addr %s234, 18
      %s236 = smul.addr %s235, 4
      %s237 = scalar_lea.vmem %s0, %s236
      %p238 = scmp.lt.s32.totalorder %s15, 1
      %s239 = scalar_select %p238, %s15, 1
      %s240 = smul.addr %s239, 9
      %s241 = smul.addr %s240, 4
      %s242 = scalar_lea.vmem %s1, %s241
      %p243 = scmp.lt.s32.totalorder %s15, 1
      %s244 = scalar_select %p243, %s15, 1
      %s245 = smul.addr %s244, 16
      %s246 = smul.addr %s245, 4
      %s247 = scalar_lea.vmem %s2, %s246
      %p248 = scmp.lt.s32.totalorder %s15, 1
      %s249 = scalar_select %p248, %s15, 1
      %s250 = smul.addr %s249, 8
      %s251 = smul.addr %s250, 4
      %s252 = scalar_lea.vmem %s3, %s251
      %p253 = scmp.lt.s32.totalorder %s15, 1
      %s254 = scalar_select %p253, %s15, 1
      %s255 = smul.addr %s254, 8
      %s256 = smul.addr %s255, 4
      %s257 = scalar_lea.vmem %s4, %s256
      %v258 = vld [vmem:[%s237] sm:$0xf]
      %v259 = vld [vmem:[%s237 + $0x4] sm:$0x1]
      %v260 = vld [vmem:[%s237 + $0x8] sm:$0xf]
      %v261 = vld [vmem:[%s237 + $0xc] sm:$0x1]
      %v262 = vld [vmem:[%s237 + $0x10] sm:$0xf]
      %v263 = vld [vmem:[%s237 + $0x14] sm:$0x1]
      %v264 = vld [vmem:[%s237 + $0x18] sm:$0xf]
      %v265 = vld [vmem:[%s237 + $0x1c] sm:$0x1]
      %v266 = vld [vmem:[%s237 + $0x20] sm:$0xf]
      %v267 = vld [vmem:[%s237 + $0x24] sm:$0x1]
      %v268 = vld [vmem:[%s237 + $0x28] sm:$0xf]
      %v269 = vld [vmem:[%s237 + $0x2c] sm:$0x1]
      %v270 = vld [vmem:[%s237 + $0x30] sm:$0xf]
      %v271 = vld [vmem:[%s237 + $0x34] sm:$0x1]
      %v272 = vld [vmem:[%s237 + $0x38] sm:$0xf]
      %v273 = vld [vmem:[%s237 + $0x3c] sm:$0x1]
      %v274 = vld [vmem:[%s237 + $0x40] sm:$0xf]
      %v275 = vld [vmem:[%s237 + $0x44] sm:$0x1]
      %v276 = vld [vmem:[%s242] sm:$0xf]
      %v277 = vld [vmem:[%s242 + $0x4] sm:$0xf]
      %v278 = vld [vmem:[%s242 + $0x8] sm:$0xf]
      %v279 = vld [vmem:[%s242 + $0xc] sm:$0xf]
      %v280 = vld [vmem:[%s242 + $0x10] sm:$0xf]
      %v281 = vld [vmem:[%s242 + $0x14] sm:$0xf]
      %v282 = vld [vmem:[%s242 + $0x18] sm:$0xf]
      %v283 = vld [vmem:[%s242 + $0x1c] sm:$0xf]
      %v284 = vld [vmem:[%s242 + $0x20] sm:$0xf]
      %v285 = vld [vmem:[%s247] sm:$0xf]
      %v286 = vld [vmem:[%s247 + $0x4] sm:$0x1]
      %v287 = vld [vmem:[%s247 + $0x8] sm:$0xf]
      %v288 = vld [vmem:[%s247 + $0xc] sm:$0x1]
      %v289 = vld [vmem:[%s247 + $0x10] sm:$0xf]
      %v290 = vld [vmem:[%s247 + $0x14] sm:$0x1]
      %v291 = vld [vmem:[%s247 + $0x18] sm:$0xf]
      %v292 = vld [vmem:[%s247 + $0x1c] sm:$0x1]
      %v293 = vld [vmem:[%s247 + $0x20] sm:$0xf]
      %v294 = vld [vmem:[%s247 + $0x24] sm:$0x1]
      %v295 = vld [vmem:[%s247 + $0x28] sm:$0xf]
      %v296 = vld [vmem:[%s247 + $0x2c] sm:$0x1]
      %v297 = vld [vmem:[%s247 + $0x30] sm:$0xf]
      %v298 = vld [vmem:[%s247 + $0x34] sm:$0x1]
      %v299 = vld [vmem:[%s247 + $0x38] sm:$0xf]
      %v300 = vld [vmem:[%s247 + $0x3c] sm:$0x1]
      %v301 = vld [vmem:[%s252] sm:$0xf]
      %v302 = vld [vmem:[%s252 + $0x4] sm:$0xf]
      %v303 = vld [vmem:[%s252 + $0x8] sm:$0xf]
      %v304 = vld [vmem:[%s252 + $0xc] sm:$0xf]
      %v305 = vld [vmem:[%s252 + $0x10] sm:$0xf]
      %v306 = vld [vmem:[%s252 + $0x14] sm:$0xf]
      %v307 = vld [vmem:[%s252 + $0x18] sm:$0xf]
      %v308 = vld [vmem:[%s252 + $0x1c] sm:$0xf]
      %v309 = vmax.bf16 %v258, %v276
      %v310 = vmax.bf16 %v260, %v277
      %v311 = vmax.bf16 %v262, %v278
      %v312 = vmax.bf16 %v264, %v279
      %v313 = vmax.bf16 %v266, %v280
      %v314 = vmax.bf16 %v268, %v281
      %v315 = vmax.bf16 %v270, %v282
      %v316 = vmax.bf16 %v272, %v283
      %vm317 = vsmask.f32 3328
      %vm318 = vsmask.f32 7440
      %vm319 = vmor %vm317, %vm318
      %v321 = vshrl.u32 %v258, 16
      %v323 = vrot.slane %v321, 4
      %v324 = vshll.u32 %v258, 16
      %v326 = vrot.slane %v324, 5
      %v327 = vor.u32 %v323, %v326
      %v328 = vrot.slane %v327, 4
      %v330 = vshll.u32 %v259, 16
      %v332 = vrot.slane %v330, 5
      %v333 = vsel %vm319, %v328, %v332
      %v335 = vshrl.u32 %v260, 16
      %v337 = vrot.slane %v335, 4
      %v338 = vshll.u32 %v260, 16
      %v340 = vrot.slane %v338, 5
      %v341 = vor.u32 %v337, %v340
      %v342 = vrot.slane %v341, 4
      %v344 = vshll.u32 %v261, 16
      %v346 = vrot.slane %v344, 5
      %v347 = vsel %vm319, %v342, %v346
      %v349 = vshrl.u32 %v262, 16
      %v351 = vrot.slane %v349, 4
      %v352 = vshll.u32 %v262, 16
      %v354 = vrot.slane %v352, 5
      %v355 = vor.u32 %v351, %v354
      %v356 = vrot.slane %v355, 4
      %v358 = vshll.u32 %v263, 16
      %v360 = vrot.slane %v358, 5
      %v361 = vsel %vm319, %v356, %v360
      %v363 = vshrl.u32 %v264, 16
      %v365 = vrot.slane %v363, 4
      %v366 = vshll.u32 %v264, 16
      %v368 = vrot.slane %v366, 5
      %v369 = vor.u32 %v365, %v368
      %v370 = vrot.slane %v369, 4
      %v372 = vshll.u32 %v265, 16
      %v374 = vrot.slane %v372, 5
      %v375 = vsel %vm319, %v370, %v374
      %v377 = vshrl.u32 %v266, 16
      %v379 = vrot.slane %v377, 4
      %v380 = vshll.u32 %v266, 16
      %v382 = vrot.slane %v380, 5
      %v383 = vor.u32 %v379, %v382
      %v384 = vrot.slane %v383, 4
      %v386 = vshll.u32 %v267, 16
      %v388 = vrot.slane %v386, 5
      %v389 = vsel %vm319, %v384, %v388
      %v391 = vshrl.u32 %v268, 16
      %v393 = vrot.slane %v391, 4
      %v394 = vshll.u32 %v268, 16
      %v396 = vrot.slane %v394, 5
      %v397 = vor.u32 %v393, %v396
      %v398 = vrot.slane %v397, 4
      %v400 = vshll.u32 %v269, 16
      %v402 = vrot.slane %v400, 5
      %v403 = vsel %vm319, %v398, %v402
      %v405 = vshrl.u32 %v270, 16
      %v407 = vrot.slane %v405, 4
      %v408 = vshll.u32 %v270, 16
      %v410 = vrot.slane %v408, 5
      %v411 = vor.u32 %v407, %v410
      %v412 = vrot.slane %v411, 4
      %v414 = vshll.u32 %v271, 16
      %v416 = vrot.slane %v414, 5
      %v417 = vsel %vm319, %v412, %v416
      %v419 = vshrl.u32 %v272, 16
      %v421 = vrot.slane %v419, 4
      %v422 = vshll.u32 %v272, 16
      %v424 = vrot.slane %v422, 5
      %v425 = vor.u32 %v421, %v424
      %v426 = vrot.slane %v425, 4
      %v428 = vshll.u32 %v273, 16
      %v430 = vrot.slane %v428, 5
      %v431 = vsel %vm319, %v426, %v430
      %v440 = vmax.bf16 %v309, %v333
      %v441 = vmax.bf16 %v310, %v347
      %v442 = vmax.bf16 %v311, %v361
      %v443 = vmax.bf16 %v312, %v375
      %v444 = vmax.bf16 %v313, %v389
      %v445 = vmax.bf16 %v314, %v403
      %v446 = vmax.bf16 %v315, %v417
      %v447 = vmax.bf16 %v316, %v431
      %v448 = vmax.bf16 %v440, %v285
      %v449 = vmax.bf16 %v441, %v287
      %v450 = vmax.bf16 %v442, %v289
      %v451 = vmax.bf16 %v443, %v291
      %v452 = vmax.bf16 %v444, %v293
      %v453 = vmax.bf16 %v445, %v295
      %v454 = vmax.bf16 %v446, %v297
      %v455 = vmax.bf16 %v447, %v299
      %v456 = vmax.bf16 %v448, %v301
      %v457 = vmax.bf16 %v449, %v302
      %v458 = vmax.bf16 %v450, %v303
      %v459 = vmax.bf16 %v451, %v304
      %v460 = vmax.bf16 %v452, %v305
      %v461 = vmax.bf16 %v453, %v306
      %v462 = vmax.bf16 %v454, %v307
      %v463 = vmax.bf16 %v455, %v308
      %v465 = vshrl.u32 %v285, 16
      %v467 = vrot.slane %v465, 4
      %v468 = vshll.u32 %v285, 16
      %v470 = vrot.slane %v468, 5
      %v471 = vor.u32 %v467, %v470
      %v472 = vrot.slane %v471, 4
      %v474 = vshll.u32 %v286, 16
      %v476 = vrot.slane %v474, 5
      %v477 = vsel %vm319, %v472, %v476
      %v479 = vshrl.u32 %v287, 16
      %v481 = vrot.slane %v479, 4
      %v482 = vshll.u32 %v287, 16
      %v484 = vrot.slane %v482, 5
      %v485 = vor.u32 %v481, %v484
      %v486 = vrot.slane %v485, 4
      %v488 = vshll.u32 %v288, 16
      %v490 = vrot.slane %v488, 5
      %v491 = vsel %vm319, %v486, %v490
      %v493 = vshrl.u32 %v289, 16
      %v495 = vrot.slane %v493, 4
      %v496 = vshll.u32 %v289, 16
      %v498 = vrot.slane %v496, 5
      %v499 = vor.u32 %v495, %v498
      %v500 = vrot.slane %v499, 4
      %v502 = vshll.u32 %v290, 16
      %v504 = vrot.slane %v502, 5
      %v505 = vsel %vm319, %v500, %v504
      %v507 = vshrl.u32 %v291, 16
      %v509 = vrot.slane %v507, 4
      %v510 = vshll.u32 %v291, 16
      %v512 = vrot.slane %v510, 5
      %v513 = vor.u32 %v509, %v512
      %v514 = vrot.slane %v513, 4
      %v516 = vshll.u32 %v292, 16
      %v518 = vrot.slane %v516, 5
      %v519 = vsel %vm319, %v514, %v518
      %v521 = vshrl.u32 %v293, 16
      %v523 = vrot.slane %v521, 4
      %v524 = vshll.u32 %v293, 16
      %v526 = vrot.slane %v524, 5
      %v527 = vor.u32 %v523, %v526
      %v528 = vrot.slane %v527, 4
      %v530 = vshll.u32 %v294, 16
      %v532 = vrot.slane %v530, 5
      %v533 = vsel %vm319, %v528, %v532
      %v535 = vshrl.u32 %v295, 16
      %v537 = vrot.slane %v535, 4
      %v538 = vshll.u32 %v295, 16
      %v540 = vrot.slane %v538, 5
      %v541 = vor.u32 %v537, %v540
      %v542 = vrot.slane %v541, 4
      %v544 = vshll.u32 %v296, 16
      %v546 = vrot.slane %v544, 5
      %v547 = vsel %vm319, %v542, %v546
      %v549 = vshrl.u32 %v297, 16
      %v551 = vrot.slane %v549, 4
      %v552 = vshll.u32 %v297, 16
      %v554 = vrot.slane %v552, 5
      %v555 = vor.u32 %v551, %v554
      %v556 = vrot.slane %v555, 4
      %v558 = vshll.u32 %v298, 16
      %v560 = vrot.slane %v558, 5
      %v561 = vsel %vm319, %v556, %v560
      %v563 = vshrl.u32 %v299, 16
      %v565 = vrot.slane %v563, 4
      %v566 = vshll.u32 %v299, 16
      %v568 = vrot.slane %v566, 5
      %v569 = vor.u32 %v565, %v568
      %v570 = vrot.slane %v569, 4
      %v572 = vshll.u32 %v300, 16
      %v574 = vrot.slane %v572, 5
      %v575 = vsel %vm319, %v570, %v574
      %v584 = vmax.bf16 %v456, %v477
      %v585 = vmax.bf16 %v457, %v491
      %v586 = vmax.bf16 %v458, %v505
      %v587 = vmax.bf16 %v459, %v519
      %v588 = vmax.bf16 %v460, %v533
      %v589 = vmax.bf16 %v461, %v547
      %v590 = vmax.bf16 %v462, %v561
      %v591 = vmax.bf16 %v463, %v575
      %v592 = vmax.bf16 %v584, %v260
      %v593 = vmax.bf16 %v585, %v262
      %v594 = vmax.bf16 %v586, %v264
      %v595 = vmax.bf16 %v587, %v266
      %v596 = vmax.bf16 %v588, %v268
      %v597 = vmax.bf16 %v589, %v270
      %v598 = vmax.bf16 %v590, %v272
      %v599 = vmax.bf16 %v591, %v274
      %v600 = vmax.bf16 %v592, %v277
      %v601 = vmax.bf16 %v593, %v278
      %v602 = vmax.bf16 %v594, %v279
      %v603 = vmax.bf16 %v595, %v280
      %v604 = vmax.bf16 %v596, %v281
      %v605 = vmax.bf16 %v597, %v282
      %v606 = vmax.bf16 %v598, %v283
      %v607 = vmax.bf16 %v599, %v284
      %v609 = vshrl.u32 %v274, 16
      %v611 = vrot.slane %v609, 4
      %v612 = vshll.u32 %v274, 16
      %v614 = vrot.slane %v612, 5
      %v615 = vor.u32 %v611, %v614
      %v616 = vrot.slane %v615, 4
      %v618 = vshll.u32 %v275, 16
      %v620 = vrot.slane %v618, 5
      %v621 = vsel %vm319, %v616, %v620
      %v623 = vmax.bf16 %v600, %v347
      %v624 = vmax.bf16 %v601, %v361
      %v625 = vmax.bf16 %v602, %v375
      %v626 = vmax.bf16 %v603, %v389
      %v627 = vmax.bf16 %v604, %v403
      %v628 = vmax.bf16 %v605, %v417
      %v629 = vmax.bf16 %v606, %v431
      %v630 = vmax.bf16 %v607, %v621
      %vm631 = vcmask 125952
      %632 = vst.msk [vmem:[%s257] sm:$0xf] %vm631, %v623
      %633 = vst.msk [vmem:[%s257 + $0x4] sm:$0xf] %vm631, %v624
      %634 = vst.msk [vmem:[%s257 + $0x8] sm:$0xf] %vm631, %v625
      %635 = vst.msk [vmem:[%s257 + $0xc] sm:$0xf] %vm631, %v626
      %636 = vst.msk [vmem:[%s257 + $0x10] sm:$0xf] %vm631, %v627
      %637 = vst.msk [vmem:[%s257 + $0x14] sm:$0xf] %vm631, %v628
      %638 = vst.msk [vmem:[%s257 + $0x18] sm:$0xf] %vm631, %v629
      %639 = vst.msk [vmem:[%s257 + $0x1c] sm:$0xf] %vm631, %v630
      %p640 = scmp.lt.s32.totalorder %s15, 1
      %s641 = scalar_select %p640, %s15, 1
      %s642 = smul.addr %s641, 8
      %s643 = smul.addr %s642, 4
      %s644 = scalar_lea.vmem %s4, %s643
      // Predicated region
      $region37: #{forward.13} parent=35 // pred_check
        %p645 = pneg %p137
      $region38: #{forward.13} parent=35 // pred_check_branch
        %647 = sbr.rel (%p645) target = $region40
      $region39: #{forward.13} parent=35 // pred_region
        _
      $region40: #{forward.13} parent=35 // pred_fallthru
        _
    $region36: #{forward.13} parent=5 // pred_fallthru
      _
    %p648 = scmp.le.s32.totalorder 2, %s10
    // Predicated region
    $region41: #{forward.13} parent=5 // pred_check
      %p649 = pneg %p648
    $region42: #{forward.13} parent=5 // pred_check_branch
      %651 = sbr.rel (%p649) target = $region44
    $region43: #{forward.13} parent=5 // pred_region
      %s652 = ssub.s32 %s10, 2
      // Predicated region
      $region45: #{forward.13} parent=43 // pred_check
        %p653 = pneg %p143
      $region46: #{forward.13} parent=43 // pred_check_branch
        %655 = sbr.rel (%p653) target = $region48
      $region47: #{forward.13} parent=43 // pred_region
        %p656 = scmp.lt.s32.totalorder %s16, 1
        %s657 = scalar_select %p656, %s16, 1
        %s658 = smul.addr %s657, 8
        %s659 = smul.addr %s658, 4
        %s660 = scalar_lea.vmem %s4, %s659
      $region48: #{forward.13} parent=43 // pred_fallthru
        _
    $region44: #{forward.13} parent=5 // pred_fallthru
      _
  $region6: #{forward.13} parent=0 // loop_footer
    %s14 = sadd.s32 1, %s10
  $region7: #{forward.13} parent=0 // loop_footer_branch
    %9 = sbr.rel target = $region3
  $region8: #{forward.13} parent=0 // loop_exit
    _

// kernel: forward.12
$region0: #{forward.12}
  #allocation0 [shape = 'u32[]', space=smem, size = 0x4, offset = 0x4, fixed_abs, tag = 'smem constant byte address 0x4 - core index']
  #allocation1 [shape = 'u32[144,128]{1,0:T(1,128)}', space=vmem, size = 0x12000, scoped, tag = 'internal scratch']
  %s0 = inlined_call_operand.vmem [shape: bf16[512,147], index: 0, kind: input, shape index: {}]
  %s1 = inlined_call_operand.vmem [shape: bf16[147,16], index: 1, kind: input, shape index: {}]
  %s2 = inlined_call_operand.vmem [shape: f32[1,16], index: 2, kind: input, shape index: {}]
  %s3 = inlined_call_operand.vmem [shape: bf16[512,16], index: 3, kind: output, shape index: {}]
  %s4 = sld [smem:[#allocation0]]
  $region22: #{forward.12} parent=0
    _
  %s6 = ssub.s32 1, %s4
  %s7 = scalar_select 0, %s6, %s4
  // Predicated region
  $region2: #{forward.12} parent=0 // pred_check
    _
  $region3: #{forward.12} parent=0 // pred_check_branch
    %9 = sbr.rel (0) target = $region5
  $region4: #{forward.12} parent=0 // pred_region
    _
  $region5: #{forward.12} parent=0 // pred_fallthru
    _
  // Predicated region
  $region6: #{forward.12} parent=0 // pred_check
    _
  $region7: #{forward.12} parent=0 // pred_check_branch
    %11 = sbr.rel (0) target = $region9
  $region8: #{forward.12} parent=0 // pred_region
    _
  $region9: #{forward.12} parent=0 // pred_fallthru
    _
  // Predicated region
  $region10: #{forward.12} parent=0 // pred_check
    _
  $region11: #{forward.12} parent=0 // pred_check_branch
    %13 = sbr.rel (0) target = $region13
  $region12: #{forward.12} parent=0 // pred_region
    _
  $region13: #{forward.12} parent=0 // pred_fallthru
    _
  %v15 = vld [vmem:[%s0] sm:$0xff]
  %v16 = vld [vmem:[%s0 + $0x8] sm:$0xff]
  %v17 = vld [vmem:[%s0 + $0x10] sm:$0xff]
  %v18 = vld [vmem:[%s0 + $0x18] sm:$0xff]
  %v19 = vld [vmem:[%s0 + $0x20] sm:$0xff]
  %v20 = vld [vmem:[%s0 + $0x28] sm:$0xff]
  %v21 = vld [vmem:[%s0 + $0x30] sm:$0xff]
  %v22 = vld [vmem:[%s0 + $0x38] sm:$0xff]
  %v23 = vld [vmem:[%s0 + $0x40] sm:$0xff]
  %v24 = vld [vmem:[%s0 + $0x48] sm:$0xff]
  %v25 = vld [vmem:[%s0 + $0x50] sm:$0xff]
  %v26 = vld [vmem:[%s0 + $0x58] sm:$0xff]
  %v27 = vld [vmem:[%s0 + $0x60] sm:$0xff]
  %v28 = vld [vmem:[%s0 + $0x68] sm:$0xff]
  %v29 = vld [vmem:[%s0 + $0x70] sm:$0xff]
  %v30 = vld [vmem:[%s0 + $0x78] sm:$0xff]
  %v31 = vld [vmem:[%s0 + $0x80] sm:$0xff]
  %v32 = vld [vmem:[%s0 + $0x88] sm:$0xff]
  %v33 = vld [vmem:[%s0 + $0x90] sm:$0xff]
  %v34 = vld [vmem:[%s0 + $0x98] sm:$0xff]
  %v35 = vld [vmem:[%s0 + $0xa0] sm:$0xff]
  %v36 = vld [vmem:[%s0 + $0xa8] sm:$0xff]
  %v37 = vld [vmem:[%s0 + $0xb0] sm:$0xff]
  %v38 = vld [vmem:[%s0 + $0xb8] sm:$0xff]
  %v39 = vld [vmem:[%s0 + $0xc0] sm:$0xff]
  %v40 = vld [vmem:[%s0 + $0xc8] sm:$0xff]
  %v41 = vld [vmem:[%s0 + $0xd0] sm:$0xff]
  %v42 = vld [vmem:[%s0 + $0xd8] sm:$0xff]
  %v43 = vld [vmem:[%s0 + $0xe0] sm:$0xff]
  %v44 = vld [vmem:[%s0 + $0xe8] sm:$0xff]
  %v45 = vld [vmem:[%s0 + $0xf0] sm:$0xff]
  %v46 = vld [vmem:[%s0 + $0xf8] sm:$0xff]
  %v47 = vld [vmem:[%s0 + $0x100] sm:$0xff]
  %v48 = vld [vmem:[%s0 + $0x108] sm:$0xff]
  %v49 = vld [vmem:[%s0 + $0x110] sm:$0xff]
  %v50 = vld [vmem:[%s0 + $0x118] sm:$0xff]
  %v51 = vld [vmem:[%s0 + $0x120] sm:$0xff]
  %v52 = vld [vmem:[%s0 + $0x128] sm:$0xff]
  %v53 = vld [vmem:[%s0 + $0x130] sm:$0xff]
  %v54 = vld [vmem:[%s0 + $0x138] sm:$0xff]
  %v55 = vld [vmem:[%s0 + $0x140] sm:$0xff]
  %v56 = vld [vmem:[%s0 + $0x148] sm:$0xff]
  %v57 = vld [vmem:[%s0 + $0x150] sm:$0xff]
  %v58 = vld [vmem:[%s0 + $0x158] sm:$0xff]
  %v59 = vld [vmem:[%s0 + $0x160] sm:$0xff]
  %v60 = vld [vmem:[%s0 + $0x168] sm:$0xff]
  %v61 = vld [vmem:[%s0 + $0x170] sm:$0xff]
  %v62 = vld [vmem:[%s0 + $0x178] sm:$0xff]
  %v63 = vld [vmem:[%s0 + $0x180] sm:$0xff]
  %v64 = vld [vmem:[%s0 + $0x188] sm:$0xff]
  %v65 = vld [vmem:[%s0 + $0x190] sm:$0xff]
  %v66 = vld [vmem:[%s0 + $0x198] sm:$0xff]
  %v67 = vld [vmem:[%s0 + $0x1a0] sm:$0xff]
  %v68 = vld [vmem:[%s0 + $0x1a8] sm:$0xff]
  %v69 = vld [vmem:[%s0 + $0x1b0] sm:$0xff]
  %v70 = vld [vmem:[%s0 + $0x1b8] sm:$0xff]
  %v71 = vld [vmem:[%s0 + $0x1c0] sm:$0xff]
  %v72 = vld [vmem:[%s0 + $0x1c8] sm:$0xff]
  %v73 = vld [vmem:[%s0 + $0x1d0] sm:$0xff]
  %v74 = vld [vmem:[%s0 + $0x1d8] sm:$0xff]
  %v75 = vld [vmem:[%s0 + $0x1e0] sm:$0xff]
  %v76 = vld [vmem:[%s0 + $0x1e8] sm:$0xff]
  %v77 = vld [vmem:[%s0 + $0x1f0] sm:$0xff]
  %v78 = vld [vmem:[%s0 + $0x1f8] sm:$0xff]
  %v79 = vld [vmem:[%s1] sm:$0xf]
  %v80 = vld [vmem:[%s1 + $0x4] sm:$0xf]
  %v81 = vld [vmem:[%s1 + $0x8] sm:$0xf]
  %v82 = vld [vmem:[%s1 + $0xc] sm:$0xf]
  %v83 = vld [vmem:[%s1 + $0x10] sm:$0xf]
  %v84 = vld [vmem:[%s1 + $0x14] sm:$0xf]
  %v85 = vld [vmem:[%s1 + $0x18] sm:$0xf]
  %v86 = vld [vmem:[%s1 + $0x1c] sm:$0xf]
  %v87 = vld [vmem:[%s1 + $0x20] sm:$0xf]
  %v88 = vld [vmem:[%s1 + $0x24] sm:$0xf]
  %v89 = vld [vmem:[%s1 + $0x28] sm:$0xf]
  %v90 = vld [vmem:[%s1 + $0x2c] sm:$0xf]
  %v91 = vld [vmem:[%s1 + $0x30] sm:$0xf]
  %v92 = vld [vmem:[%s1 + $0x34] sm:$0xf]
  %v93 = vld [vmem:[%s1 + $0x38] sm:$0xf]
  %v94 = vld [vmem:[%s1 + $0x3c] sm:$0xf]
  %v95 = vld [vmem:[%s1 + $0x40] sm:$0xf]
  %v96 = vld [vmem:[%s1 + $0x44] sm:$0xf]
  %v97 = vld [vmem:[%s1 + $0x48] sm:$0x3]
  %v98 = vld [vmem:[%s2] sm:$0x1]
  %v100 = vlaneseq
  %v101 = vshrl.u32 %v100, 7
  %v102 = vsub.s32 0, %v101
  %v103 = vrot.slane %v98, %v102
  %v169 = vunpack.c.l.b16 %v15
  %v170 = vunpack.c.h.b16 %v15
  %v171 = vunpack.c.l.b16 %v16
  %v172 = vunpack.c.h.b16 %v16
  %v173 = vunpack.c.l.b16 %v17
  %v174 = vunpack.c.h.b16 %v17
  %v175 = vunpack.c.l.b16 %v18
  %v176 = vunpack.c.h.b16 %v18
  %v177 = vunpack.c.l.b16 %v19
  %v178 = vunpack.c.h.b16 %v19
  %v179 = vunpack.c.l.b16 %v20
  %v180 = vunpack.c.h.b16 %v20
  %v181 = vunpack.c.l.b16 %v21
  %v182 = vunpack.c.h.b16 %v21
  %v183 = vunpack.c.l.b16 %v22
  %v184 = vunpack.c.h.b16 %v22
  %v185 = vunpack.c.l.b16 %v23
  %v186 = vunpack.c.h.b16 %v23
  %v187 = vunpack.c.l.b16 %v24
  %v188 = vunpack.c.h.b16 %v24
  %v189 = vunpack.c.l.b16 %v25
  %v190 = vunpack.c.h.b16 %v25
  %v191 = vunpack.c.l.b16 %v26
  %v192 = vunpack.c.h.b16 %v26
  %v193 = vunpack.c.l.b16 %v27
  %v194 = vunpack.c.h.b16 %v27
  %v195 = vunpack.c.l.b16 %v28
  %v196 = vunpack.c.h.b16 %v28
  %v197 = vunpack.c.l.b16 %v29
  %v198 = vunpack.c.h.b16 %v29
  %v199 = vunpack.c.l.b16 %v30
  %v200 = vunpack.c.h.b16 %v30
  %v201 = vunpack.c.l.b16 %v31
  %v202 = vunpack.c.h.b16 %v31
  %v203 = vunpack.c.l.b16 %v32
  %v204 = vunpack.c.h.b16 %v32
  %v205 = vunpack.c.l.b16 %v33
  %v206 = vunpack.c.h.b16 %v33
  %v207 = vunpack.c.l.b16 %v34
  %v208 = vunpack.c.h.b16 %v34
  %v209 = vunpack.c.l.b16 %v35
  %v210 = vunpack.c.h.b16 %v35
  %v211 = vunpack.c.l.b16 %v36
  %v212 = vunpack.c.h.b16 %v36
  %v213 = vunpack.c.l.b16 %v37
  %v214 = vunpack.c.h.b16 %v37
  %v215 = vunpack.c.l.b16 %v38
  %v216 = vunpack.c.h.b16 %v38
  %v217 = vunpack.c.l.b16 %v39
  %v218 = vunpack.c.h.b16 %v39
  %v219 = vunpack.c.l.b16 %v40
  %v220 = vunpack.c.h.b16 %v40
  %v221 = vunpack.c.l.b16 %v41
  %v222 = vunpack.c.h.b16 %v41
  %v223 = vunpack.c.l.b16 %v42
  %v224 = vunpack.c.h.b16 %v42
  %v225 = vunpack.c.l.b16 %v43
  %v226 = vunpack.c.h.b16 %v43
  %v227 = vunpack.c.l.b16 %v44
  %v228 = vunpack.c.h.b16 %v44
  %v229 = vunpack.c.l.b16 %v45
  %v230 = vunpack.c.h.b16 %v45
  %v231 = vunpack.c.l.b16 %v46
  %v232 = vunpack.c.h.b16 %v46
  %v233 = vunpack.c.l.b16 %v47
  %v234 = vunpack.c.h.b16 %v47
  %v235 = vunpack.c.l.b16 %v48
  %v236 = vunpack.c.h.b16 %v48
  %v237 = vunpack.c.l.b16 %v49
  %v238 = vunpack.c.h.b16 %v49
  %v239 = vunpack.c.l.b16 %v50
  %v240 = vunpack.c.h.b16 %v50
  %v241 = vunpack.c.l.b16 %v51
  %v242 = vunpack.c.h.b16 %v51
  %v243 = vunpack.c.l.b16 %v52
  %v244 = vunpack.c.h.b16 %v52
  %v245 = vunpack.c.l.b16 %v53
  %v246 = vunpack.c.h.b16 %v53
  %v247 = vunpack.c.l.b16 %v54
  %v248 = vunpack.c.h.b16 %v54
  %v249 = vunpack.c.l.b16 %v55
  %v250 = vunpack.c.h.b16 %v55
  %v251 = vunpack.c.l.b16 %v56
  %v252 = vunpack.c.h.b16 %v56
  %v253 = vunpack.c.l.b16 %v57
  %v254 = vunpack.c.h.b16 %v57
  %v255 = vunpack.c.l.b16 %v58
  %v256 = vunpack.c.h.b16 %v58
  %v257 = vunpack.c.l.b16 %v59
  %v258 = vunpack.c.h.b16 %v59
  %v259 = vunpack.c.l.b16 %v60
  %v260 = vunpack.c.h.b16 %v60
  %v261 = vunpack.c.l.b16 %v61
  %v262 = vunpack.c.h.b16 %v61
  %v263 = vunpack.c.l.b16 %v62
  %v264 = vunpack.c.h.b16 %v62
  %v265 = vunpack.c.l.b16 %v63
  %v266 = vunpack.c.h.b16 %v63
  %v267 = vunpack.c.l.b16 %v64
  %v268 = vunpack.c.h.b16 %v64
  %v269 = vunpack.c.l.b16 %v65
  %v270 = vunpack.c.h.b16 %v65
  %v271 = vunpack.c.l.b16 %v66
  %v272 = vunpack.c.h.b16 %v66
  %v273 = vunpack.c.l.b16 %v67
  %v274 = vunpack.c.h.b16 %v67
  %v275 = vunpack.c.l.b16 %v68
  %v276 = vunpack.c.h.b16 %v68
  %v277 = vunpack.c.l.b16 %v69
  %v278 = vunpack.c.h.b16 %v69
  %v279 = vunpack.c.l.b16 %v70
  %v280 = vunpack.c.h.b16 %v70
  %v281 = vunpack.c.l.b16 %v71
  %v282 = vunpack.c.h.b16 %v71
  %v283 = vunpack.c.l.b16 %v72
  %v284 = vunpack.c.h.b16 %v72
  %v285 = vunpack.c.l.b16 %v73
  %v286 = vunpack.c.h.b16 %v73
  %v287 = vunpack.c.l.b16 %v74
  %v288 = vunpack.c.h.b16 %v74
  %v289 = vunpack.c.l.b16 %v75
  %v290 = vunpack.c.h.b16 %v75
  %v291 = vunpack.c.l.b16 %v76
  %v292 = vunpack.c.h.b16 %v76
  %v293 = vunpack.c.l.b16 %v77
  %v294 = vunpack.c.h.b16 %v77
  %v295 = vunpack.c.l.b16 %v78
  %v296 = vunpack.c.h.b16 %v78
  %v297 = vpack.c.b16 %v171, %v169
  %v298 = vpack.c.b16 %v172, %v170
  %v299 = vpack.c.b16 %v175, %v173
  %v300 = vpack.c.b16 %v176, %v174
  %v301 = vpack.c.b16 %v179, %v177
  %v302 = vpack.c.b16 %v180, %v178
  %v303 = vpack.c.b16 %v183, %v181
  %v304 = vpack.c.b16 %v184, %v182
  %v305 = vpack.c.b16 %v187, %v185
  %v306 = vpack.c.b16 %v188, %v186
  %v307 = vpack.c.b16 %v191, %v189
  %v308 = vpack.c.b16 %v192, %v190
  %v309 = vpack.c.b16 %v195, %v193
  %v310 = vpack.c.b16 %v196, %v194
  %v311 = vpack.c.b16 %v199, %v197
  %v312 = vpack.c.b16 %v200, %v198
  %v313 = vpack.c.b16 %v203, %v201
  %v314 = vpack.c.b16 %v204, %v202
  %v315 = vpack.c.b16 %v207, %v205
  %v316 = vpack.c.b16 %v208, %v206
  %v317 = vpack.c.b16 %v211, %v209
  %v318 = vpack.c.b16 %v212, %v210
  %v319 = vpack.c.b16 %v215, %v213
  %v320 = vpack.c.b16 %v216, %v214
  %v321 = vpack.c.b16 %v219, %v217
  %v322 = vpack.c.b16 %v220, %v218
  %v323 = vpack.c.b16 %v223, %v221
  %v324 = vpack.c.b16 %v224, %v222
  %v325 = vpack.c.b16 %v227, %v225
  %v326 = vpack.c.b16 %v228, %v226
  %v327 = vpack.c.b16 %v231, %v229
  %v328 = vpack.c.b16 %v232, %v230
  %v329 = vpack.c.b16 %v235, %v233
  %v330 = vpack.c.b16 %v236, %v234
  %v331 = vpack.c.b16 %v239, %v237
  %v332 = vpack.c.b16 %v240, %v238
  %v333 = vpack.c.b16 %v243, %v241
  %v334 = vpack.c.b16 %v244, %v242
  %v335 = vpack.c.b16 %v247, %v245
  %v336 = vpack.c.b16 %v248, %v246
  %v337 = vpack.c.b16 %v251, %v249
  %v338 = vpack.c.b16 %v252, %v250
  %v339 = vpack.c.b16 %v255, %v253
  %v340 = vpack.c.b16 %v256, %v254
  %v341 = vpack.c.b16 %v259, %v257
  %v342 = vpack.c.b16 %v260, %v258
  %v343 = vpack.c.b16 %v263, %v261
  %v344 = vpack.c.b16 %v264, %v262
  %v345 = vpack.c.b16 %v267, %v265
  %v346 = vpack.c.b16 %v268, %v266
  %v347 = vpack.c.b16 %v271, %v269
  %v348 = vpack.c.b16 %v272, %v270
  %v349 = vpack.c.b16 %v275, %v273
  %v350 = vpack.c.b16 %v276, %v274
  %v351 = vpack.c.b16 %v279, %v277
  %v352 = vpack.c.b16 %v280, %v278
  %v353 = vpack.c.b16 %v283, %v281
  %v354 = vpack.c.b16 %v284, %v282
  %v355 = vpack.c.b16 %v287, %v285
  %v356 = vpack.c.b16 %v288, %v286
  %v357 = vpack.c.b16 %v291, %v289
  %v358 = vpack.c.b16 %v292, %v290
  %v359 = vpack.c.b16 %v295, %v293
  %v360 = vpack.c.b16 %v296, %v294
  %v412 = vunpack.c.l.b16 %v79
  %v413 = vunpack.c.l.b16 %v80
  %v414 = vunpack.c.l.b16 %v81
  %v415 = vunpack.c.l.b16 %v82
  %v416 = vunpack.c.l.b16 %v83
  %v417 = vunpack.c.l.b16 %v84
  %v418 = vunpack.c.l.b16 %v85
  %v419 = vunpack.c.l.b16 %v86
  %v420 = vunpack.c.l.b16 %v87
  %v421 = vunpack.c.l.b16 %v88
  %v422 = vunpack.c.l.b16 %v89
  %v423 = vunpack.c.l.b16 %v90
  %v424 = vunpack.c.l.b16 %v91
  %v425 = vunpack.c.l.b16 %v92
  %v426 = vunpack.c.l.b16 %v93
  %v427 = vunpack.c.l.b16 %v94
  %v428 = vunpack.c.l.b16 %v95
  %v429 = vunpack.c.l.b16 %v96
  %v430 = vunpack.c.l.b16 %v97
  %v431 = vpack.c.b16 %v413, %v412
  %v432 = vpack.c.b16 %v415, %v414
  %v433 = vpack.c.b16 %v417, %v416
  %v434 = vpack.c.b16 %v419, %v418
  %v435 = vpack.c.b16 %v421, %v420
  %v436 = vpack.c.b16 %v423, %v422
  %v437 = vpack.c.b16 %v425, %v424
  %v438 = vpack.c.b16 %v427, %v426
  %v439 = vpack.c.b16 %v429, %v428
  %v440 = vpack.c.b16 %v430, %v430
  %vm450 = vcmask 154624
  %v452 = vsel %vm450, %v298, 0
  %v455 = vsel %vm450, %v300, 0
  %v458 = vsel %vm450, %v302, 0
  %v461 = vsel %vm450, %v304, 0
  %v464 = vsel %vm450, %v306, 0
  %v467 = vsel %vm450, %v308, 0
  %v470 = vsel %vm450, %v310, 0
  %v473 = vsel %vm450, %v312, 0
  %v476 = vsel %vm450, %v314, 0
  %v479 = vsel %vm450, %v316, 0
  %v482 = vsel %vm450, %v318, 0
  %v485 = vsel %vm450, %v320, 0
  %v488 = vsel %vm450, %v322, 0
  %v491 = vsel %vm450, %v324, 0
  %v494 = vsel %vm450, %v326, 0
  %v497 = vsel %vm450, %v328, 0
  %v500 = vsel %vm450, %v330, 0
  %v503 = vsel %vm450, %v332, 0
  %v506 = vsel %vm450, %v334, 0
  %v509 = vsel %vm450, %v336, 0
  %v512 = vsel %vm450, %v338, 0
  %v515 = vsel %vm450, %v340, 0
  %v518 = vsel %vm450, %v342, 0
  %v521 = vsel %vm450, %v344, 0
  %v524 = vsel %vm450, %v346, 0
  %v527 = vsel %vm450, %v348, 0
  %v530 = vsel %vm450, %v350, 0
  %v533 = vsel %vm450, %v352, 0
  %v536 = vsel %vm450, %v354, 0
  %v539 = vsel %vm450, %v356, 0
  %v542 = vsel %vm450, %v358, 0
  %v545 = vsel %vm450, %v360, 0
  %vm547 = vcmask 1040384
  %vm548 = vcmask 1041408
  %v549 = vsel %vm547, 4294967295, 65535
  %v550 = vsel %vm548, %v549, 0
  %v552 = vand.u32 %v440, %v550
  %554 = vmatprep.subr.bf16.mxu0 0
  %555 = vmatpush1.bf16.msra.mxu0 %v438
  %556 = vmatprep.subr.bf16.mxu0 0
  %557 = vmatpush1.bf16.msra.mxu0 %v437
  %558 = vmatprep.subr.bf16.mxu0 0
  %559 = vmatpush1.bf16.msra.mxu0 %v436
  %560 = vmatprep.subr.bf16.mxu0 0
  %561 = vmatpush1.bf16.msra.mxu0 %v435
  %562 = vmatprep.subr.bf16.mxu0 0
  %563 = vmatpush1.bf16.msra.mxu0 %v434
  %564 = vmatprep.subr.bf16.mxu0 0
  %565 = vmatpush1.bf16.msra.mxu0 %v433
  %566 = vmatprep.subr.bf16.mxu0 0
  %567 = vmatpush1.bf16.msra.mxu0 %v432
  %568 = vmatprep.subr.bf16.mxu0 0
  %569 = vmatpush1.bf16.msra.mxu0 %v431
  %570 = vmatprep.subr.bf16.mxu0 0
  %571 = vmatpush2.bf16.msra.mxu0 0
  %572 = vmatprep.subr.bf16.mxu0 0
  %573 = vmatpush2.bf16.msra.mxu0 0
  %574 = vmatprep.subr.bf16.mxu0 0
  %575 = vmatpush2.bf16.msra.mxu0 0
  %576 = vmatprep.subr.bf16.mxu0 0
  %577 = vmatpush2.bf16.msra.mxu0 0
  %578 = vmatprep.subr.bf16.mxu0 0
  %579 = vmatpush2.bf16.msra.mxu0 0
  %580 = vmatprep.subr.bf16.mxu0 0
  %581 = vmatpush2.bf16.msra.mxu0 0
  %582 = vmatprep.subr.bf16.mxu0 0
  %583 = vmatpush2.bf16.msra.mxu0 %v552
  %584 = vmatprep.subr.bf16.mxu0 0
  %585 = vmatpush2.bf16.msra.mxu0 %v439
  %586 = vmatprep.mubr.bf16.mxu0 %v452
  %587 = vmatmul.mubr.bf16.gmra.mxu0 %v297
  %v588 = vpop.f32.mrf.mxu0
  %v589 = vadd.f32 %v103, %v588
  %v590 = vpop.f32.mrf.mxu0
  %v591 = vpop.f32.mrf.mxu0
  %v592 = vadd.f32 %v103, %v591
  %v593 = vpop.f32.mrf.mxu0
  %594 = vmatprep.mubr.bf16.mxu0 %v455
  %595 = vmatmul.mubr.bf16.gmra.mxu0 %v299
  %v596 = vpop.f32.mrf.mxu0
  %v597 = vadd.f32 %v103, %v596
  %v598 = vpop.f32.mrf.mxu0
  %v599 = vpop.f32.mrf.mxu0
  %v600 = vadd.f32 %v103, %v599
  %v601 = vpop.f32.mrf.mxu0
  %602 = vmatprep.mubr.bf16.mxu0 %v458
  %603 = vmatmul.mubr.bf16.gmra.mxu0 %v301
  %v604 = vpop.f32.mrf.mxu0
  %v605 = vadd.f32 %v103, %v604
  %v606 = vpop.f32.mrf.mxu0
  %v607 = vpop.f32.mrf.mxu0
  %v608 = vadd.f32 %v103, %v607
  %v609 = vpop.f32.mrf.mxu0
  %610 = vmatprep.mubr.bf16.mxu0 %v461
  %611 = vmatmul.mubr.bf16.gmra.mxu0 %v303
  %v612 = vpop.f32.mrf.mxu0
  %v613 = vadd.f32 %v103, %v612
  %v614 = vpop.f32.mrf.mxu0
  %v615 = vpop.f32.mrf.mxu0
  %v616 = vadd.f32 %v103, %v615
  %v617 = vpop.f32.mrf.mxu0
  %618 = vmatprep.mubr.bf16.mxu0 %v464
  %619 = vmatmul.mubr.bf16.gmra.mxu0 %v305
  %v620 = vpop.f32.mrf.mxu0
  %v621 = vadd.f32 %v103, %v620
  %v622 = vpop.f32.mrf.mxu0
  %v623 = vpop.f32.mrf.mxu0
  %v624 = vadd.f32 %v103, %v623
  %v625 = vpop.f32.mrf.mxu0
  %626 = vmatprep.mubr.bf16.mxu0 %v467
  %627 = vmatmul.mubr.bf16.gmra.mxu0 %v307
  %v628 = vpop.f32.mrf.mxu0
  %v629 = vadd.f32 %v103, %v628
  %v630 = vpop.f32.mrf.mxu0
  %v631 = vpop.f32.mrf.mxu0
  %v632 = vadd.f32 %v103, %v631
  %v633 = vpop.f32.mrf.mxu0
  %634 = vmatprep.mubr.bf16.mxu0 %v470
  %635 = vmatmul.mubr.bf16.gmra.mxu0 %v309
  %v636 = vpop.f32.mrf.mxu0
  %v637 = vadd.f32 %v103, %v636
  %v638 = vpop.f32.mrf.mxu0
  %v639 = vpop.f32.mrf.mxu0
  %v640 = vadd.f32 %v103, %v639
  %v641 = vpop.f32.mrf.mxu0
  %642 = vmatprep.mubr.bf16.mxu0 %v473
  %643 = vmatmul.mubr.bf16.gmra.mxu0 %v311
  %v644 = vpop.f32.mrf.mxu0
  %v645 = vadd.f32 %v103, %v644
  %v646 = vpop.f32.mrf.mxu0
  %v647 = vpop.f32.mrf.mxu0
  %v648 = vadd.f32 %v103, %v647
  %v649 = vpop.f32.mrf.mxu0
  %650 = vmatprep.mubr.bf16.mxu0 %v476
  %651 = vmatmul.mubr.bf16.gmra.mxu0 %v313
  %v652 = vpop.f32.mrf.mxu0
  %v653 = vadd.f32 %v103, %v652
  %v654 = vpop.f32.mrf.mxu0
  %v655 = vpop.f32.mrf.mxu0
  %v656 = vadd.f32 %v103, %v655
  %v657 = vpop.f32.mrf.mxu0
  %658 = vmatprep.mubr.bf16.mxu0 %v479
  %659 = vmatmul.mubr.bf16.gmra.mxu0 %v315
  %v660 = vpop.f32.mrf.mxu0
  %v661 = vadd.f32 %v103, %v660
  %v662 = vpop.f32.mrf.mxu0
  %v663 = vpop.f32.mrf.mxu0
  %v664 = vadd.f32 %v103, %v663
  %v665 = vpop.f32.mrf.mxu0
  %666 = vmatprep.mubr.bf16.mxu0 %v482
  %667 = vmatmul.mubr.bf16.gmra.mxu0 %v317
  %v668 = vpop.f32.mrf.mxu0
  %v669 = vadd.f32 %v103, %v668
  %v670 = vpop.f32.mrf.mxu0
  %v671 = vpop.f32.mrf.mxu0
  %v672 = vadd.f32 %v103, %v671
  %v673 = vpop.f32.mrf.mxu0
  %674 = vmatprep.mubr.bf16.mxu0 %v485
  %675 = vmatmul.mubr.bf16.gmra.mxu0 %v319
  %v676 = vpop.f32.mrf.mxu0
  %v677 = vadd.f32 %v103, %v676
  %v678 = vpop.f32.mrf.mxu0
  %v679 = vpop.f32.mrf.mxu0
  %v680 = vadd.f32 %v103, %v679
  %v681 = vpop.f32.mrf.mxu0
  %682 = vmatprep.mubr.bf16.mxu0 %v488
  %683 = vmatmul.mubr.bf16.gmra.mxu0 %v321
  %v684 = vpop.f32.mrf.mxu0
  %v685 = vadd.f32 %v103, %v684
  %v686 = vpop.f32.mrf.mxu0
  %v687 = vpop.f32.mrf.mxu0
  %v688 = vadd.f32 %v103, %v687
  %v689 = vpop.f32.mrf.mxu0
  %690 = vmatprep.mubr.bf16.mxu0 %v491
  %691 = vmatmul.mubr.bf16.gmra.mxu0 %v323
  %v692 = vpop.f32.mrf.mxu0
  %v693 = vadd.f32 %v103, %v692
  %v694 = vpop.f32.mrf.mxu0
  %v695 = vpop.f32.mrf.mxu0
  %v696 = vadd.f32 %v103, %v695
  %v697 = vpop.f32.mrf.mxu0
  %698 = vmatprep.mubr.bf16.mxu0 %v494
  %699 = vmatmul.mubr.bf16.gmra.mxu0 %v325
  %v700 = vpop.f32.mrf.mxu0
  %v701 = vadd.f32 %v103, %v700
  %v702 = vpop.f32.mrf.mxu0
  %v703 = vpop.f32.mrf.mxu0
  %v704 = vadd.f32 %v103, %v703
  %v705 = vpop.f32.mrf.mxu0
  %706 = vmatprep.mubr.bf16.mxu0 %v497
  %707 = vmatmul.mubr.bf16.gmra.mxu0 %v327
  %v708 = vpop.f32.mrf.mxu0
  %v709 = vadd.f32 %v103, %v708
  %v710 = vpop.f32.mrf.mxu0
  %v711 = vpop.f32.mrf.mxu0
  %v712 = vadd.f32 %v103, %v711
  %v713 = vpop.f32.mrf.mxu0
  %714 = vmatprep.mubr.bf16.mxu0 %v500
  %715 = vmatmul.mubr.bf16.gmra.mxu0 %v329
  %v716 = vpop.f32.mrf.mxu0
  %v717 = vadd.f32 %v103, %v716
  %v718 = vpop.f32.mrf.mxu0
  %v719 = vpop.f32.mrf.mxu0
  %v720 = vadd.f32 %v103, %v719
  %v721 = vpop.f32.mrf.mxu0
  %722 = vmatprep.mubr.bf16.mxu0 %v503
  %723 = vmatmul.mubr.bf16.gmra.mxu0 %v331
  %v724 = vpop.f32.mrf.mxu0
  %v725 = vadd.f32 %v103, %v724
  %v726 = vpop.f32.mrf.mxu0
  %v727 = vpop.f32.mrf.mxu0
  %v728 = vadd.f32 %v103, %v727
  %v729 = vpop.f32.mrf.mxu0
  %730 = vmatprep.mubr.bf16.mxu0 %v506
  %731 = vmatmul.mubr.bf16.gmra.mxu0 %v333
  %v732 = vpop.f32.mrf.mxu0
  %v733 = vadd.f32 %v103, %v732
  %v734 = vpop.f32.mrf.mxu0
  %v735 = vpop.f32.mrf.mxu0
  %v736 = vadd.f32 %v103, %v735
  %v737 = vpop.f32.mrf.mxu0
  %738 = vmatprep.mubr.bf16.mxu0 %v509
  %739 = vmatmul.mubr.bf16.gmra.mxu0 %v335
  %v740 = vpop.f32.mrf.mxu0
  %v741 = vadd.f32 %v103, %v740
  %v742 = vpop.f32.mrf.mxu0
  %v743 = vpop.f32.mrf.mxu0
  %v744 = vadd.f32 %v103, %v743
  %v745 = vpop.f32.mrf.mxu0
  %746 = vmatprep.mubr.bf16.mxu0 %v512
  %747 = vmatmul.mubr.bf16.gmra.mxu0 %v337
  %v748 = vpop.f32.mrf.mxu0
  %v749 = vadd.f32 %v103, %v748
  %v750 = vpop.f32.mrf.mxu0
  %v751 = vpop.f32.mrf.mxu0
  %v752 = vadd.f32 %v103, %v751
  %v753 = vpop.f32.mrf.mxu0
  %754 = vmatprep.mubr.bf16.mxu0 %v515
  %755 = vmatmul.mubr.bf16.gmra.mxu0 %v339
  %v756 = vpop.f32.mrf.mxu0
  %v757 = vadd.f32 %v103, %v756
  %v758 = vpop.f32.mrf.mxu0
  %v759 = vpop.f32.mrf.mxu0
  %v760 = vadd.f32 %v103, %v759
  %v761 = vpop.f32.mrf.mxu0
  %762 = vmatprep.mubr.bf16.mxu0 %v518
  %763 = vmatmul.mubr.bf16.gmra.mxu0 %v341
  %v764 = vpop.f32.mrf.mxu0
  %v765 = vadd.f32 %v103, %v764
  %v766 = vpop.f32.mrf.mxu0
  %v767 = vpop.f32.mrf.mxu0
  %v768 = vadd.f32 %v103, %v767
  %v769 = vpop.f32.mrf.mxu0
  %770 = vmatprep.mubr.bf16.mxu0 %v521
  %771 = vmatmul.mubr.bf16.gmra.mxu0 %v343
  %v772 = vpop.f32.mrf.mxu0
  %v773 = vadd.f32 %v103, %v772
  %v774 = vpop.f32.mrf.mxu0
  %v775 = vpop.f32.mrf.mxu0
  %v776 = vadd.f32 %v103, %v775
  %v777 = vpop.f32.mrf.mxu0
  %778 = vmatprep.mubr.bf16.mxu0 %v524
  %779 = vmatmul.mubr.bf16.gmra.mxu0 %v345
  %v780 = vpop.f32.mrf.mxu0
  %v781 = vadd.f32 %v103, %v780
  %v782 = vpop.f32.mrf.mxu0
  %v783 = vpop.f32.mrf.mxu0
  %v784 = vadd.f32 %v103, %v783
  %v785 = vpop.f32.mrf.mxu0
  %786 = vmatprep.mubr.bf16.mxu0 %v527
  %787 = vmatmul.mubr.bf16.gmra.mxu0 %v347
  %v788 = vpop.f32.mrf.mxu0
  %v789 = vadd.f32 %v103, %v788
  %v790 = vpop.f32.mrf.mxu0
  %v791 = vpop.f32.mrf.mxu0
  %v792 = vadd.f32 %v103, %v791
  %v793 = vpop.f32.mrf.mxu0
  %794 = vmatprep.mubr.bf16.mxu0 %v530
  %795 = vmatmul.mubr.bf16.gmra.mxu0 %v349
  %v796 = vpop.f32.mrf.mxu0
  %v797 = vadd.f32 %v103, %v796
  %v798 = vpop.f32.mrf.mxu0
  %v799 = vpop.f32.mrf.mxu0
  %v800 = vadd.f32 %v103, %v799
  %v801 = vpop.f32.mrf.mxu0
  %802 = vmatprep.mubr.bf16.mxu0 %v533
  %803 = vmatmul.mubr.bf16.gmra.mxu0 %v351
  %v804 = vpop.f32.mrf.mxu0
  %v805 = vadd.f32 %v103, %v804
  %v806 = vpop.f32.mrf.mxu0
  %v807 = vpop.f32.mrf.mxu0
  %v808 = vadd.f32 %v103, %v807
  %v809 = vpop.f32.mrf.mxu0
  %810 = vmatprep.mubr.bf16.mxu0 %v536
  %811 = vmatmul.mubr.bf16.gmra.mxu0 %v353
  %v812 = vpop.f32.mrf.mxu0
  %v813 = vadd.f32 %v103, %v812
  %v814 = vpop.f32.mrf.mxu0
  %v815 = vpop.f32.mrf.mxu0
  %v816 = vadd.f32 %v103, %v815
  %v817 = vpop.f32.mrf.mxu0
  %818 = vmatprep.mubr.bf16.mxu0 %v539
  %819 = vmatmul.mubr.bf16.gmra.mxu0 %v355
  %v820 = vpop.f32.mrf.mxu0
  %v821 = vadd.f32 %v103, %v820
  %v822 = vpop.f32.mrf.mxu0
  %v823 = vpop.f32.mrf.mxu0
  %v824 = vadd.f32 %v103, %v823
  %v825 = vpop.f32.mrf.mxu0
  %826 = vmatprep.mubr.bf16.mxu0 %v542
  %827 = vmatmul.mubr.bf16.gmra.mxu0 %v357
  %v828 = vpop.f32.mrf.mxu0
  %v829 = vadd.f32 %v103, %v828
  %v830 = vpop.f32.mrf.mxu0
  %v831 = vpop.f32.mrf.mxu0
  %v832 = vadd.f32 %v103, %v831
  %v833 = vpop.f32.mrf.mxu0
  %834 = vmatprep.mubr.bf16.mxu0 %v545
  %835 = vmatmul.mubr.bf16.gmra.mxu0 %v359
  %v836 = vpop.f32.mrf.mxu0
  %v837 = vadd.f32 %v103, %v836
  %v838 = vpop.f32.mrf.mxu0
  %v839 = vpop.f32.mrf.mxu0
  %v840 = vadd.f32 %v103, %v839
  %v841 = vpop.f32.mrf.mxu0
  %842 = vdwg.mxu0
  %v843 = vmax.f32 %v589, 0.0
  %v844 = vmax.f32 %v592, 0.0
  %v845 = vmax.f32 %v597, 0.0
  %v846 = vmax.f32 %v600, 0.0
  %v847 = vmax.f32 %v605, 0.0
  %v848 = vmax.f32 %v608, 0.0
  %v849 = vmax.f32 %v613, 0.0
  %v850 = vmax.f32 %v616, 0.0
  %v851 = vmax.f32 %v621, 0.0
  %v852 = vmax.f32 %v624, 0.0
  %v853 = vmax.f32 %v629, 0.0
  %v854 = vmax.f32 %v632, 0.0
  %v855 = vmax.f32 %v637, 0.0
  %v856 = vmax.f32 %v640, 0.0
  %v857 = vmax.f32 %v645, 0.0
  %v858 = vmax.f32 %v648, 0.0
  %v859 = vmax.f32 %v653, 0.0
  %v860 = vmax.f32 %v656, 0.0
  %v861 = vmax.f32 %v661, 0.0
  %v862 = vmax.f32 %v664, 0.0
  %v863 = vmax.f32 %v669, 0.0
  %v864 = vmax.f32 %v672, 0.0
  %v865 = vmax.f32 %v677, 0.0
  %v866 = vmax.f32 %v680, 0.0
  %v867 = vmax.f32 %v685, 0.0
  %v868 = vmax.f32 %v688, 0.0
  %v869 = vmax.f32 %v693, 0.0
  %v870 = vmax.f32 %v696, 0.0
  %v871 = vmax.f32 %v701, 0.0
  %v872 = vmax.f32 %v704, 0.0
  %v873 = vmax.f32 %v709, 0.0
  %v874 = vmax.f32 %v712, 0.0
  %v875 = vmax.f32 %v717, 0.0
  %v876 = vmax.f32 %v720, 0.0
  %v877 = vmax.f32 %v725, 0.0
  %v878 = vmax.f32 %v728, 0.0
  %v879 = vmax.f32 %v733, 0.0
  %v880 = vmax.f32 %v736, 0.0
  %v881 = vmax.f32 %v741, 0.0
  %v882 = vmax.f32 %v744, 0.0
  %v883 = vmax.f32 %v749, 0.0
  %v884 = vmax.f32 %v752, 0.0
  %v885 = vmax.f32 %v757, 0.0
  %v886 = vmax.f32 %v760, 0.0
  %v887 = vmax.f32 %v765, 0.0
  %v888 = vmax.f32 %v768, 0.0
  %v889 = vmax.f32 %v773, 0.0
  %v890 = vmax.f32 %v776, 0.0
  %v891 = vmax.f32 %v781, 0.0
  %v892 = vmax.f32 %v784, 0.0
  %v893 = vmax.f32 %v789, 0.0
  %v894 = vmax.f32 %v792, 0.0
  %v895 = vmax.f32 %v797, 0.0
  %v896 = vmax.f32 %v800, 0.0
  %v897 = vmax.f32 %v805, 0.0
  %v898 = vmax.f32 %v808, 0.0
  %v899 = vmax.f32 %v813, 0.0
  %v900 = vmax.f32 %v816, 0.0
  %v901 = vmax.f32 %v821, 0.0
  %v902 = vmax.f32 %v824, 0.0
  %v903 = vmax.f32 %v829, 0.0
  %v904 = vmax.f32 %v832, 0.0
  %v905 = vmax.f32 %v837, 0.0
  %v906 = vmax.f32 %v840, 0.0
  %v907 = vpack.c.bf16 %v844, %v843
  %v908 = vpack.c.bf16 %v846, %v845
  %v909 = vpack.c.bf16 %v848, %v847
  %v910 = vpack.c.bf16 %v850, %v849
  %v911 = vpack.c.bf16 %v852, %v851
  %v912 = vpack.c.bf16 %v854, %v853
  %v913 = vpack.c.bf16 %v856, %v855
  %v914 = vpack.c.bf16 %v858, %v857
  %v915 = vpack.c.bf16 %v860, %v859
  %v916 = vpack.c.bf16 %v862, %v861
  %v917 = vpack.c.bf16 %v864, %v863
  %v918 = vpack.c.bf16 %v866, %v865
  %v919 = vpack.c.bf16 %v868, %v867
  %v920 = vpack.c.bf16 %v870, %v869
  %v921 = vpack.c.bf16 %v872, %v871
  %v922 = vpack.c.bf16 %v874, %v873
  %v923 = vpack.c.bf16 %v876, %v875
  %v924 = vpack.c.bf16 %v878, %v877
  %v925 = vpack.c.bf16 %v880, %v879
  %v926 = vpack.c.bf16 %v882, %v881
  %v927 = vpack.c.bf16 %v884, %v883
  %v928 = vpack.c.bf16 %v886, %v885
  %v929 = vpack.c.bf16 %v888, %v887
  %v930 = vpack.c.bf16 %v890, %v889
  %v931 = vpack.c.bf16 %v892, %v891
  %v932 = vpack.c.bf16 %v894, %v893
  %v933 = vpack.c.bf16 %v896, %v895
  %v934 = vpack.c.bf16 %v898, %v897
  %v935 = vpack.c.bf16 %v900, %v899
  %v936 = vpack.c.bf16 %v902, %v901
  %v937 = vpack.c.bf16 %v904, %v903
  %v938 = vpack.c.bf16 %v906, %v905
  %v971 = vunpack.c.l.b16 %v907
  %v972 = vunpack.c.h.b16 %v907
  %v973 = vunpack.c.l.b16 %v908
  %v974 = vunpack.c.h.b16 %v908
  %v975 = vunpack.c.l.b16 %v909
  %v976 = vunpack.c.h.b16 %v909
  %v977 = vunpack.c.l.b16 %v910
  %v978 = vunpack.c.h.b16 %v910
  %v979 = vunpack.c.l.b16 %v911
  %v980 = vunpack.c.h.b16 %v911
  %v981 = vunpack.c.l.b16 %v912
  %v982 = vunpack.c.h.b16 %v912
  %v983 = vunpack.c.l.b16 %v913
  %v984 = vunpack.c.h.b16 %v913
  %v985 = vunpack.c.l.b16 %v914
  %v986 = vunpack.c.h.b16 %v914
  %v987 = vunpack.c.l.b16 %v915
  %v988 = vunpack.c.h.b16 %v915
  %v989 = vunpack.c.l.b16 %v916
  %v990 = vunpack.c.h.b16 %v916
  %v991 = vunpack.c.l.b16 %v917
  %v992 = vunpack.c.h.b16 %v917
  %v993 = vunpack.c.l.b16 %v918
  %v994 = vunpack.c.h.b16 %v918
  %v995 = vunpack.c.l.b16 %v919
  %v996 = vunpack.c.h.b16 %v919
  %v997 = vunpack.c.l.b16 %v920
  %v998 = vunpack.c.h.b16 %v920
  %v999 = vunpack.c.l.b16 %v921
  %v1000 = vunpack.c.h.b16 %v921
  %v1001 = vunpack.c.l.b16 %v922
  %v1002 = vunpack.c.h.b16 %v922
  %v1003 = vunpack.c.l.b16 %v923
  %v1004 = vunpack.c.h.b16 %v923
  %v1005 = vunpack.c.l.b16 %v924
  %v1006 = vunpack.c.h.b16 %v924
  %v1007 = vunpack.c.l.b16 %v925
  %v1008 = vunpack.c.h.b16 %v925
  %v1009 = vunpack.c.l.b16 %v926
  %v1010 = vunpack.c.h.b16 %v926
  %v1011 = vunpack.c.l.b16 %v927
  %v1012 = vunpack.c.h.b16 %v927
  %v1013 = vunpack.c.l.b16 %v928
  %v1014 = vunpack.c.h.b16 %v928
  %v1015 = vunpack.c.l.b16 %v929
  %v1016 = vunpack.c.h.b16 %v929
  %v1017 = vunpack.c.l.b16 %v930
  %v1018 = vunpack.c.h.b16 %v930
  %v1019 = vunpack.c.l.b16 %v931
  %v1020 = vunpack.c.h.b16 %v931
  %v1021 = vunpack.c.l.b16 %v932
  %v1022 = vunpack.c.h.b16 %v932
  %v1023 = vunpack.c.l.b16 %v933
  %v1024 = vunpack.c.h.b16 %v933
  %v1025 = vunpack.c.l.b16 %v934
  %v1026 = vunpack.c.h.b16 %v934
  %v1027 = vunpack.c.l.b16 %v935
  %v1028 = vunpack.c.h.b16 %v935
  %v1029 = vunpack.c.l.b16 %v936
  %v1030 = vunpack.c.h.b16 %v936
  %v1031 = vunpack.c.l.b16 %v937
  %v1032 = vunpack.c.h.b16 %v937
  %v1033 = vunpack.c.l.b16 %v938
  %v1034 = vunpack.c.h.b16 %v938
  %v1035 = vpack.c.b16 %v971, %v971
  %v1036 = vpack.c.b16 %v972, %v972
  %v1037 = vpack.c.b16 %v973, %v973
  %v1038 = vpack.c.b16 %v974, %v974
  %v1039 = vpack.c.b16 %v975, %v975
  %v1040 = vpack.c.b16 %v976, %v976
  %v1041 = vpack.c.b16 %v977, %v977
  %v1042 = vpack.c.b16 %v978, %v978
  %v1043 = vpack.c.b16 %v979, %v979
  %v1044 = vpack.c.b16 %v980, %v980
  %v1045 = vpack.c.b16 %v981, %v981
  %v1046 = vpack.c.b16 %v982, %v982
  %v1047 = vpack.c.b16 %v983, %v983
  %v1048 = vpack.c.b16 %v984, %v984
  %v1049 = vpack.c.b16 %v985, %v985
  %v1050 = vpack.c.b16 %v986, %v986
  %v1051 = vpack.c.b16 %v987, %v987
  %v1052 = vpack.c.b16 %v988, %v988
  %v1053 = vpack.c.b16 %v989, %v989
  %v1054 = vpack.c.b16 %v990, %v990
  %v1055 = vpack.c.b16 %v991, %v991
  %v1056 = vpack.c.b16 %v992, %v992
  %v1057 = vpack.c.b16 %v993, %v993
  %v1058 = vpack.c.b16 %v994, %v994
  %v1059 = vpack.c.b16 %v995, %v995
  %v1060 = vpack.c.b16 %v996, %v996
  %v1061 = vpack.c.b16 %v997, %v997
  %v1062 = vpack.c.b16 %v998, %v998
  %v1063 = vpack.c.b16 %v999, %v999
  %v1064 = vpack.c.b16 %v1000, %v1000
  %v1065 = vpack.c.b16 %v1001, %v1001
  %v1066 = vpack.c.b16 %v1002, %v1002
  %v1067 = vpack.c.b16 %v1003, %v1003
  %v1068 = vpack.c.b16 %v1004, %v1004
  %v1069 = vpack.c.b16 %v1005, %v1005
  %v1070 = vpack.c.b16 %v1006, %v1006
  %v1071 = vpack.c.b16 %v1007, %v1007
  %v1072 = vpack.c.b16 %v1008, %v1008
  %v1073 = vpack.c.b16 %v1009, %v1009
  %v1074 = vpack.c.b16 %v1010, %v1010
  %v1075 = vpack.c.b16 %v1011, %v1011
  %v1076 = vpack.c.b16 %v1012, %v1012
  %v1077 = vpack.c.b16 %v1013, %v1013
  %v1078 = vpack.c.b16 %v1014, %v1014
  %v1079 = vpack.c.b16 %v1015, %v1015
  %v1080 = vpack.c.b16 %v1016, %v1016
  %v1081 = vpack.c.b16 %v1017, %v1017
  %v1082 = vpack.c.b16 %v1018, %v1018
  %v1083 = vpack.c.b16 %v1019, %v1019
  %v1084 = vpack.c.b16 %v1020, %v1020
  %v1085 = vpack.c.b16 %v1021, %v1021
  %v1086 = vpack.c.b16 %v1022, %v1022
  %v1087 = vpack.c.b16 %v1023, %v1023
  %v1088 = vpack.c.b16 %v1024, %v1024
  %v1089 = vpack.c.b16 %v1025, %v1025
  %v1090 = vpack.c.b16 %v1026, %v1026
  %v1091 = vpack.c.b16 %v1027, %v1027
  %v1092 = vpack.c.b16 %v1028, %v1028
  %v1093 = vpack.c.b16 %v1029, %v1029
  %v1094 = vpack.c.b16 %v1030, %v1030
  %v1095 = vpack.c.b16 %v1031, %v1031
  %v1096 = vpack.c.b16 %v1032, %v1032
  %v1097 = vpack.c.b16 %v1033, %v1033
  %v1098 = vpack.c.b16 %v1034, %v1034
  %vm1163 = vcmask 125952
  %1164 = vst.msk [vmem:[%s3] sm:$0xf] %vm1163, %v1035
  %1165 = vst.msk [vmem:[%s3 + $0x4] sm:$0xf] %vm1163, %v1036
  %1166 = vst.msk [vmem:[%s3 + $0x8] sm:$0xf] %vm1163, %v1037
  %1167 = vst.msk [vmem:[%s3 + $0xc] sm:$0xf] %vm1163, %v1038
  %1168 = vst.msk [vmem:[%s3 + $0x10] sm:$0xf] %vm1163, %v1039
  %1169 = vst.msk [vmem:[%s3 + $0x14] sm:$0xf] %vm1163, %v1040
  %1170 = vst.msk [vmem:[%s3 + $0x18] sm:$0xf] %vm1163, %v1041
  %1171 = vst.msk [vmem:[%s3 + $0x1c] sm:$0xf] %vm1163, %v1042
  %1172 = vst.msk [vmem:[%s3 + $0x20] sm:$0xf] %vm1163, %v1043
  %1173 = vst.msk [vmem:[%s3 + $0x24] sm:$0xf] %vm1163, %v1044
  %1174 = vst.msk [vmem:[%s3 + $0x28] sm:$0xf] %vm1163, %v1045
  %1175 = vst.msk [vmem:[%s3 + $0x2c] sm:$0xf] %vm1163, %v1046
  %1176 = vst.msk [vmem:[%s3 + $0x30] sm:$0xf] %vm1163, %v1047
  %1177 = vst.msk [vmem:[%s3 + $0x34] sm:$0xf] %vm1163, %v1048
  %1178 = vst.msk [vmem:[%s3 + $0x38] sm:$0xf] %vm1163, %v1049
  %1179 = vst.msk [vmem:[%s3 + $0x3c] sm:$0xf] %vm1163, %v1050
  %1180 = vst.msk [vmem:[%s3 + $0x40] sm:$0xf] %vm1163, %v1051
  %1181 = vst.msk [vmem:[%s3 + $0x44] sm:$0xf] %vm1163, %v1052
  %1182 = vst.msk [vmem:[%s3 + $0x48] sm:$0xf] %vm1163, %v1053
  %1183 = vst.msk [vmem:[%s3 + $0x4c] sm:$0xf] %vm1163, %v1054
  %1184 = vst.msk [vmem:[%s3 + $0x50] sm:$0xf] %vm1163, %v1055
  %1185 = vst.msk [vmem:[%s3 + $0x54] sm:$0xf] %vm1163, %v1056
  %1186 = vst.msk [vmem:[%s3 + $0x58] sm:$0xf] %vm1163, %v1057
  %1187 = vst.msk [vmem:[%s3 + $0x5c] sm:$0xf] %vm1163, %v1058
  %1188 = vst.msk [vmem:[%s3 + $0x60] sm:$0xf] %vm1163, %v1059
  %1189 = vst.msk [vmem:[%s3 + $0x64] sm:$0xf] %vm1163, %v1060
  %1190 = vst.msk [vmem:[%s3 + $0x68] sm:$0xf] %vm1163, %v1061
  %1191 = vst.msk [vmem:[%s3 + $0x6c] sm:$0xf] %vm1163, %v1062
  %1192 = vst.msk [vmem:[%s3 + $0x70] sm:$0xf] %vm1163, %v1063
  %1193 = vst.msk [vmem:[%s3 + $0x74] sm:$0xf] %vm1163, %v1064
  %1194 = vst.msk [vmem:[%s3 + $0x78] sm:$0xf] %vm1163, %v1065
  %1195 = vst.msk [vmem:[%s3 + $0x7c] sm:$0xf] %vm1163, %v1066
  %1196 = vst.msk [vmem:[%s3 + $0x80] sm:$0xf] %vm1163, %v1067
  %1197 = vst.msk [vmem:[%s3 + $0x84] sm:$0xf] %vm1163, %v1068
  %1198 = vst.msk [vmem:[%s3 + $0x88] sm:$0xf] %vm1163, %v1069
  %1199 = vst.msk [vmem:[%s3 + $0x8c] sm:$0xf] %vm1163, %v1070
  %1200 = vst.msk [vmem:[%s3 + $0x90] sm:$0xf] %vm1163, %v1071
  %1201 = vst.msk [vmem:[%s3 + $0x94] sm:$0xf] %vm1163, %v1072
  %1202 = vst.msk [vmem:[%s3 + $0x98] sm:$0xf] %vm1163, %v1073
  %1203 = vst.msk [vmem:[%s3 + $0x9c] sm:$0xf] %vm1163, %v1074
  %1204 = vst.msk [vmem:[%s3 + $0xa0] sm:$0xf] %vm1163, %v1075
  %1205 = vst.msk [vmem:[%s3 + $0xa4] sm:$0xf] %vm1163, %v1076
  %1206 = vst.msk [vmem:[%s3 + $0xa8] sm:$0xf] %vm1163, %v1077
  %1207 = vst.msk [vmem:[%s3 + $0xac] sm:$0xf] %vm1163, %v1078
  %1208 = vst.msk [vmem:[%s3 + $0xb0] sm:$0xf] %vm1163, %v1079
  %1209 = vst.msk [vmem:[%s3 + $0xb4] sm:$0xf] %vm1163, %v1080
  %1210 = vst.msk [vmem:[%s3 + $0xb8] sm:$0xf] %vm1163, %v1081
  %1211 = vst.msk [vmem:[%s3 + $0xbc] sm:$0xf] %vm1163, %v1082
  %1212 = vst.msk [vmem:[%s3 + $0xc0] sm:$0xf] %vm1163, %v1083
  %1213 = vst.msk [vmem:[%s3 + $0xc4] sm:$0xf] %vm1163, %v1084
  %1214 = vst.msk [vmem:[%s3 + $0xc8] sm:$0xf] %vm1163, %v1085
  %1215 = vst.msk [vmem:[%s3 + $0xcc] sm:$0xf] %vm1163, %v1086
  %1216 = vst.msk [vmem:[%s3 + $0xd0] sm:$0xf] %vm1163, %v1087
  %1217 = vst.msk [vmem:[%s3 + $0xd4] sm:$0xf] %vm1163, %v1088
  %1218 = vst.msk [vmem:[%s3 + $0xd8] sm:$0xf] %vm1163, %v1089
  %1219 = vst.msk [vmem:[%s3 + $0xdc] sm:$0xf] %vm1163, %v1090
  %1220 = vst.msk [vmem:[%s3 + $0xe0] sm:$0xf] %vm1163, %v1091
  %1221 = vst.msk [vmem:[%s3 + $0xe4] sm:$0xf] %vm1163, %v1092
  %1222 = vst.msk [vmem:[%s3 + $0xe8] sm:$0xf] %vm1163, %v1093
  %1223 = vst.msk [vmem:[%s3 + $0xec] sm:$0xf] %vm1163, %v1094
  %1224 = vst.msk [vmem:[%s3 + $0xf0] sm:$0xf] %vm1163, %v1095
  %1225 = vst.msk [vmem:[%s3 + $0xf4] sm:$0xf] %vm1163, %v1096
  %1226 = vst.msk [vmem:[%s3 + $0xf8] sm:$0xf] %vm1163, %v1097
  %1227 = vst.msk [vmem:[%s3 + $0xfc] sm:$0xf] %vm1163, %v1098
  // Predicated region
  $region14: #{forward.12} parent=0 // pred_check
    _
  $region15: #{forward.12} parent=0 // pred_check_branch
    %1229 = sbr.rel (0) target = $region17
  $region16: #{forward.12} parent=0 // pred_region
    _
  $region17: #{forward.12} parent=0 // pred_fallthru
    _
  // Predicated region
  $region18: #{forward.12} parent=0 // pred_check
    _
  $region19: #{forward.12} parent=0 // pred_check_branch
    %1231 = sbr.rel (0) target = $region21
  $region20: #{forward.12} parent=0 // pred_region
    _
  $region21: #{forward.12} parent=0 // pred_fallthru
    _

// kernel: forward.15
$region0: #{forward.15}
  #allocation0 [shape = 'u32[]', space=smem, size = 0x4, offset = 0x4, fixed_abs, tag = 'smem constant byte address 0x4 - core index']
  #allocation1 [shape = 'u32[144,128]{1,0:T(1,128)}', space=vmem, size = 0x12000, scoped, tag = 'internal scratch']
  %s0 = inlined_call_operand.vmem [shape: bf16[2,110,16], index: 0, kind: input, shape index: {}]
  %s1 = inlined_call_operand.vmem [shape: bf16[3,16,24], index: 1, kind: input, shape index: {}]
  %s2 = inlined_call_operand.vmem [shape: bf16[2,80,8], index: 2, kind: output, shape index: {}]
  %s3 = sld [smem:[#allocation0]]
  $region41: #{forward.15} parent=0
    _
  %s5 = ssub.s32 1, %s3
  %s6 = scalar_select 0, %s5, %s3
  loop: start=0, step=1, limit=4
  $region2: #{forward.15} parent=0 // loop_pre_header
    _
  $region3: #{forward.15} parent=0 // loop_header
    %s8 = sphi 0, %s12
    %p9 = scmp.ge.s32.totalorder %s8, 4
    %s18 = sphi 0, %s20
    %s21 = sphi 0, %s18
    %s22 = sphi 0, %s21
    %s38 = sphi 0, %s22
    %s42 = sphi 0, %s42
    %s44 = sphi 0, %s42
    %s45 = sphi 0, %s44
    %s59 = sphi 0, %s45
    %s65 = sphi 0, %s67
    %s68 = sphi 0, %s65
    %s69 = sphi 0, %s68
    %s85 = sphi 0, %s69
  $region4: #{forward.15} parent=0 // loop_header_branch
    %11 = sbr.rel (%p9) target = $region8
  $region5: #{forward.15} parent=0 // loop_body
    %s13 = ssub.s32 %s8, 1
    %s14 = ssub.s32 %s8, 2
    %s15 = sadd.s32 %s8, 1
    %s16 = ssub.s32 %s8, %s15
    %p17 = scmp.eq.s32.totalorder %s16, 0
    %s19 = sadd.s32 %s18, 1
    %s20 = scalar_select %p17, %s18, %s19
    %p23 = pneg %p17
    %p24 = scmp.eq.s32.totalorder %s8, 1
    %p25 = por %p23, %p24
    %p26 = scmp.ne.s32.totalorder %s18, %s21
    %p27 = scmp.eq.s32.totalorder %s8, 0
    %p28 = por %p26, %p27
    %p29 = scmp.ne.s32.totalorder %s18, %s21
    %p30 = scmp.eq.s32.totalorder %s13, 1
    %p31 = por %p29, %p30
    %p32 = scmp.ne.s32.totalorder %s21, %s22
    %p33 = scmp.eq.s32.totalorder %s13, 0
    %p34 = por %p32, %p33
    %p35 = scmp.ne.s32.totalorder %s21, %s22
    %p36 = scmp.eq.s32.totalorder %s14, 1
    %p37 = por %p35, %p36
    %p39 = scmp.ne.s32.totalorder %s22, %s38
    %p40 = scmp.eq.s32.totalorder %s14, 0
    %p41 = por %p39, %p40
    %s43 = sadd.s32 %s42, 1
    %p46 = scmp.eq.s32.totalorder %s8, 1
    %p47 = scmp.ne.s32.totalorder %s42, %s44
    %p48 = scmp.eq.s32.totalorder %s8, 0
    %p49 = por %p47, %p48
    %p50 = scmp.ne.s32.totalorder %s42, %s44
    %p51 = scmp.eq.s32.totalorder %s13, 1
    %p52 = por %p50, %p51
    %p53 = scmp.ne.s32.totalorder %s44, %s45
    %p54 = scmp.eq.s32.totalorder %s13, 0
    %p55 = por %p53, %p54
    %p56 = scmp.ne.s32.totalorder %s44, %s45
    %p57 = scmp.eq.s32.totalorder %s14, 1
    %p58 = por %p56, %p57
    %p60 = scmp.ne.s32.totalorder %s45, %s59
    %p61 = scmp.eq.s32.totalorder %s14, 0
    %p62 = por %p60, %p61
    %s63 = ssub.s32 %s8, %s15
    %p64 = scmp.eq.s32.totalorder %s63, 0
    %s66 = sadd.s32 %s65, 1
    %s67 = scalar_select %p64, %s65, %s66
    %p70 = pneg %p64
    %p71 = scmp.eq.s32.totalorder %s8, 1
    %p72 = por %p70, %p71
    %p73 = scmp.ne.s32.totalorder %s65, %s68
    %p74 = scmp.eq.s32.totalorder %s8, 0
    %p75 = por %p73, %p74
    %p76 = scmp.ne.s32.totalorder %s65, %s68
    %p77 = scmp.eq.s32.totalorder %s13, 1
    %p78 = por %p76, %p77
    %p79 = scmp.ne.s32.totalorder %s68, %s69
    %p80 = scmp.eq.s32.totalorder %s13, 0
    %p81 = por %p79, %p80
    %p82 = scmp.ne.s32.totalorder %s68, %s69
    %p83 = scmp.eq.s32.totalorder %s14, 1
    %p84 = por %p82, %p83
    %p86 = scmp.ne.s32.totalorder %s69, %s85
    %p87 = scmp.eq.s32.totalorder %s14, 0
    %p88 = por %p86, %p87
    %p89 = scmp.le.s32.totalorder 1, %s8
    %p90 = scmp.lt.s32.totalorder %s8, 3
    %p91 = pnand %p89, %p90
    %p92 = pneg %p91
    // Predicated region
    $region9: #{forward.15} parent=5 // pred_check
      _
    $region10: #{forward.15} parent=5 // pred_check_branch
      %94 = sbr.rel (%p91) target = $region12
    $region11: #{forward.15} parent=5 // pred_region
      %s95 = ssub.s32 %s8, 1
      // Predicated region
      $region13: #{forward.15} parent=11 // pred_check
        %p96 = pneg %p55
      $region14: #{forward.15} parent=11 // pred_check_branch
        %98 = sbr.rel (%p96) target = $region16
      $region15: #{forward.15} parent=11 // pred_region
        _
      $region16: #{forward.15} parent=11 // pred_fallthru
        _
    $region12: #{forward.15} parent=5 // pred_fallthru
      _
    %p99 = scmp.lt.s32.totalorder %s8, 2
    // Predicated region
    $region17: #{forward.15} parent=5 // pred_check
      %p100 = pneg %p99
    $region18: #{forward.15} parent=5 // pred_check_branch
      %102 = sbr.rel (%p100) target = $region20
    $region19: #{forward.15} parent=5 // pred_region
      // Predicated region
      $region21: #{forward.15} parent=19 // pred_check
        %p103 = pneg %p28
      $region22: #{forward.15} parent=19 // pred_check_branch
        %105 = sbr.rel (%p103) target = $region24
      $region23: #{forward.15} parent=19 // pred_region
        %p106 = scmp.lt.s32.totalorder %s8, 1
        %s107 = scalar_select %p106, %s8, 1
        %s108 = smul.addr %s107, 14
        %s109 = smul.addr %s108, 4
        %s110 = scalar_lea.vmem %s0, %s109
      $region24: #{forward.15} parent=19 // pred_fallthru
        _
    $region20: #{forward.15} parent=5 // pred_fallthru
      _
    %p111 = scmp.le.s32.totalorder 1, %s8
    %p112 = scmp.lt.s32.totalorder %s8, 3
    %p113 = pnand %p111, %p112
    %p114 = pneg %p113
    // Predicated region
    $region25: #{forward.15} parent=5 // pred_check
      _
    $region26: #{forward.15} parent=5 // pred_check_branch
      %116 = sbr.rel (%p113) target = $region28
    $region27: #{forward.15} parent=5 // pred_region
      %s117 = ssub.s32 %s8, 1
      %p118 = scmp.lt.s32.totalorder %s13, 1
      %s119 = scalar_select %p118, %s13, 1
      %s120 = smul.addr %s119, 14
      %s121 = smul.addr %s120, 4
      %s122 = scalar_lea.vmem %s0, %s121
      %p123 = pneg %p34
      %p124 = pneg %p31
      %p125 = pneg %p55
      %p126 = pneg %p52
      %p127 = pneg %p81
      %p128 = pneg %p78
      %p129 = scmp.lt.s32.totalorder %s13, 1
      %s130 = scalar_select %p129, %s13, 1
      %s131 = smul.addr %s130, 10
      %s132 = smul.addr %s131, 4
      %s133 = scalar_lea.vmem %s2, %s132
      %p134 = scmp.lt.s32.totalorder %s13, 1
      %s135 = scalar_select %p134, %s13, 1
      %s136 = smul.addr %s135, 14
      %s137 = smul.addr %s136, 4
      %s138 = scalar_lea.vmem %s0, %s137
      %p139 = scmp.lt.s32.totalorder %s13, 1
      %s140 = scalar_select %p139, %s13, 1
      %s141 = smul.addr %s140, 10
      %s142 = smul.addr %s141, 4
      %s143 = scalar_lea.vmem %s2, %s142
      %v145 = vld [vmem:[%s138] sm:$0xf]
      %v146 = vld [vmem:[%s138 + $0x4] sm:$0xf]
      %v147 = vld [vmem:[%s138 + $0x8] sm:$0xf]
      %v148 = vld [vmem:[%s138 + $0xc] sm:$0xf]
      %v149 = vld [vmem:[%s138 + $0x10] sm:$0xf]
      %v150 = vld [vmem:[%s138 + $0x14] sm:$0xf]
      %v151 = vld [vmem:[%s138 + $0x18] sm:$0xf]
      %v152 = vld [vmem:[%s138 + $0x1c] sm:$0xf]
      %v153 = vld [vmem:[%s138 + $0x20] sm:$0xf]
      %v154 = vld [vmem:[%s138 + $0x24] sm:$0xf]
      %v155 = vld [vmem:[%s138 + $0x28] sm:$0x1]
      %v156 = vld [vmem:[%s1] sm:$0xf]
      %v157 = vld [vmem:[%s1 + $0x4] sm:$0xf]
      %v158 = vld [vmem:[%s138 + $0x4] sm:$0xe]
      %v159 = vld [vmem:[%s138 + $0x28] sm:$0xf]
      %v160 = vld [vmem:[%s138 + $0x2c] sm:$0x3]
      %s161 = scalar_lea.vmem %s1, 8
      %v162 = vld [vmem:[%s161] sm:$0xf]
      %v163 = vld [vmem:[%s161 + $0x4] sm:$0xf]
      %v175 = vunpack.c.l.b16 %v158
      %v176 = vunpack.c.l.b16 %v147
      %v177 = vunpack.c.l.b16 %v148
      %v178 = vunpack.c.l.b16 %v149
      %v179 = vunpack.c.l.b16 %v150
      %v180 = vunpack.c.l.b16 %v151
      %v181 = vunpack.c.l.b16 %v152
      %v182 = vunpack.c.l.b16 %v153
      %v183 = vunpack.c.l.b16 %v154
      %v184 = vunpack.c.l.b16 %v159
      %v185 = vunpack.c.l.b16 %v160
      %v186 = vpack.c.b16 %v176, %v175
      %v187 = vpack.c.b16 %v178, %v177
      %v188 = vpack.c.b16 %v180, %v179
      %v189 = vpack.c.b16 %v182, %v181
      %v190 = vpack.c.b16 %v184, %v183
      %v191 = vpack.c.b16 %v185, %v185
      %vm192 = vcmask 1046528
      %v193 = vrot.slane %v186, 1
      %v194 = vrot.slane %v187, 1
      %v195 = vsel %vm192, %v193, %v194
      %v196 = vrot.slane %v188, 1
      %v197 = vsel %vm192, %v194, %v196
      %v198 = vrot.slane %v189, 1
      %v199 = vsel %vm192, %v196, %v198
      %v200 = vrot.slane %v190, 1
      %v201 = vsel %vm192, %v198, %v200
      %v202 = vrot.slane %v191, 1
      %v203 = vsel %vm192, %v200, %v202
      %v206 = vunpack.c.l.b16 %v162
      %v207 = vunpack.c.l.b16 %v163
      %v208 = vpack.c.b16 %v207, %v206
      %vm210 = vcmask 130048
      %v212 = vsel %vm210, %v195, 0
      %v215 = vsel %vm210, %v197, 0
      %v218 = vsel %vm210, %v199, 0
      %v221 = vsel %vm210, %v201, 0
      %v224 = vsel %vm210, %v203, 0
      %v227 = vsel %vm210, %v202, 0
      %229 = vmatprep.subr.bf16.mxu0 0
      %230 = vmatpush1.bf16.msra.mxu0 0
      %231 = vmatprep.subr.bf16.mxu0 0
      %232 = vmatpush1.bf16.msra.mxu0 0
      %233 = vmatprep.subr.bf16.mxu0 0
      %234 = vmatpush1.bf16.msra.mxu0 0
      %235 = vmatprep.subr.bf16.mxu0 0
      %236 = vmatpush1.bf16.msra.mxu0 0
      %237 = vmatprep.subr.bf16.mxu0 0
      %238 = vmatpush1.bf16.msra.mxu0 0
      %239 = vmatprep.subr.bf16.mxu0 0
      %240 = vmatpush1.bf16.msra.mxu0 0
      %241 = vmatprep.subr.bf16.mxu0 0
      %242 = vmatpush1.bf16.msra.mxu0 0
      %243 = vmatprep.subr.bf16.mxu0 0
      %244 = vmatpush1.bf16.msra.mxu0 %v208
      %245 = vmatprep.subr.bf16.mxu0 0
      %246 = vmatpush2.bf16.msra.mxu0 0
      %247 = vmatprep.subr.bf16.mxu0 0
      %248 = vmatpush2.bf16.msra.mxu0 0
      %249 = vmatprep.subr.bf16.mxu0 0
      %250 = vmatpush2.bf16.msra.mxu0 0
      %251 = vmatprep.subr.bf16.mxu0 0
      %252 = vmatpush2.bf16.msra.mxu0 0
      %253 = vmatprep.subr.bf16.mxu0 0
      %254 = vmatpush2.bf16.msra.mxu0 0
      %255 = vmatprep.subr.bf16.mxu0 0
      %256 = vmatpush2.bf16.msra.mxu0 0
      %257 = vmatprep.subr.bf16.mxu0 0
      %258 = vmatpush2.bf16.msra.mxu0 0
      %259 = vmatprep.subr.bf16.mxu0 0
      %260 = vmatpush2.bf16.msra.mxu0 0
      %261 = vmatprep.mubr.bf16.mxu0 0
      %262 = vmatmul.mubr.bf16.gmra.mxu0 %v212
      %v263 = vpop.f32.mrf.mxu0
      %v264 = vadd.f32 0.0, %v263
      %v265 = vpop.f32.mrf.mxu0
      %v266 = vpop.f32.mrf.mxu0
      %v267 = vadd.f32 0.0, %v266
      %v268 = vpop.f32.mrf.mxu0
      %269 = vmatprep.mubr.bf16.mxu0 0
      %270 = vmatmul.mubr.bf16.gmra.mxu0 %v215
      %v271 = vpop.f32.mrf.mxu0
      %v272 = vadd.f32 0.0, %v271
      %v273 = vpop.f32.mrf.mxu0
      %v274 = vpop.f32.mrf.mxu0
      %v275 = vadd.f32 0.0, %v274
      %v276 = vpop.f32.mrf.mxu0
      %277 = vmatprep.mubr.bf16.mxu0 0
      %278 = vmatmul.mubr.bf16.gmra.mxu0 %v218
      %v279 = vpop.f32.mrf.mxu0
      %v280 = vadd.f32 0.0, %v279
      %v281 = vpop.f32.mrf.mxu0
      %v282 = vpop.f32.mrf.mxu0
      %v283 = vadd.f32 0.0, %v282
      %v284 = vpop.f32.mrf.mxu0
      %285 = vmatprep.mubr.bf16.mxu0 0
      %286 = vmatmul.mubr.bf16.gmra.mxu0 %v221
      %v287 = vpop.f32.mrf.mxu0
      %v288 = vadd.f32 0.0, %v287
      %v289 = vpop.f32.mrf.mxu0
      %v290 = vpop.f32.mrf.mxu0
      %v291 = vadd.f32 0.0, %v290
      %v292 = vpop.f32.mrf.mxu0
      %293 = vmatprep.mubr.bf16.mxu0 0
      %294 = vmatmul.mubr.bf16.gmra.mxu0 %v224
      %v295 = vpop.f32.mrf.mxu0
      %v296 = vadd.f32 0.0, %v295
      %v297 = vpop.f32.mrf.mxu0
      %v298 = vpop.f32.mrf.mxu0
      %v299 = vadd.f32 0.0, %v298
      %v300 = vpop.f32.mrf.mxu0
      %301 = vmatprep.mubr.bf16.mxu0 0
      %302 = vmatmul.mubr.bf16.gmra.mxu0 %v227
      %v303 = vpop.f32.mrf.mxu0
      %v304 = vadd.f32 0.0, %v303
      %v305 = vpop.f32.mrf.mxu0
      %v306 = vpop.f32.mrf.mxu0
      %v307 = vpop.f32.mrf.mxu0
      %308 = vdwg.mxu0
      %v312 = vunpack.c.l.b16 %v145
      %v313 = vunpack.c.l.b16 %v146
      %v314 = vunpack.c.l.b16 %v155
      %v315 = vpack.c.b16 %v313, %v312
      %v316 = vpack.c.b16 %v177, %v176
      %v317 = vpack.c.b16 %v179, %v178
      %v318 = vpack.c.b16 %v181, %v180
      %v319 = vpack.c.b16 %v183, %v182
      %v320 = vpack.c.b16 %v314, %v314
      %v323 = vunpack.c.l.b16 %v156
      %v324 = vunpack.c.l.b16 %v157
      %v325 = vpack.c.b16 %v324, %v323
      %v328 = vsel %vm210, %v315, 0
      %v331 = vsel %vm210, %v316, 0
      %v334 = vsel %vm210, %v317, 0
      %v337 = vsel %vm210, %v318, 0
      %v340 = vsel %vm210, %v319, 0
      %v343 = vsel %vm210, %v320, 0
      %345 = vmatprep.subr.bf16.mxu0 0
      %346 = vmatpush1.bf16.msra.mxu0 0
      %347 = vmatprep.subr.bf16.mxu0 0
      %348 = vmatpush1.bf16.msra.mxu0 0
      %349 = vmatprep.subr.bf16.mxu0 0
      %350 = vmatpush1.bf16.msra.mxu0 0
      %351 = vmatprep.subr.bf16.mxu0 0
      %352 = vmatpush1.bf16.msra.mxu0 0
      %353 = vmatprep.subr.bf16.mxu0 0
      %354 = vmatpush1.bf16.msra.mxu0 0
      %355 = vmatprep.subr.bf16.mxu0 0
      %356 = vmatpush1.bf16.msra.mxu0 0
      %357 = vmatprep.subr.bf16.mxu0 0
      %358 = vmatpush1.bf16.msra.mxu0 0
      %359 = vmatprep.subr.bf16.mxu0 0
      %360 = vmatpush1.bf16.msra.mxu0 %v325
      %361 = vmatprep.subr.bf16.mxu0 0
      %362 = vmatpush2.bf16.msra.mxu0 0
      %363 = vmatprep.subr.bf16.mxu0 0
      %364 = vmatpush2.bf16.msra.mxu0 0
      %365 = vmatprep.subr.bf16.mxu0 0
      %366 = vmatpush2.bf16.msra.mxu0 0
      %367 = vmatprep.subr.bf16.mxu0 0
      %368 = vmatpush2.bf16.msra.mxu0 0
      %369 = vmatprep.subr.bf16.mxu0 0
      %370 = vmatpush2.bf16.msra.mxu0 0
      %371 = vmatprep.subr.bf16.mxu0 0
      %372 = vmatpush2.bf16.msra.mxu0 0
      %373 = vmatprep.subr.bf16.mxu0 0
      %374 = vmatpush2.bf16.msra.mxu0 0
      %375 = vmatprep.subr.bf16.mxu0 0
      %376 = vmatpush2.bf16.msra.mxu0 0
      %377 = vmatprep.mubr.bf16.mxu0 0
      %378 = vmatmul.mubr.bf16.gmra.mxu0 %v328
      %v379 = vpop.f32.mrf.mxu0
      %v380 = vadd.f32 %v264, %v379
      %v381 = vpop.f32.mrf.mxu0
      %v382 = vpop.f32.mrf.mxu0
      %v383 = vadd.f32 %v267, %v382
      %v384 = vpop.f32.mrf.mxu0
      %385 = vmatprep.mubr.bf16.mxu0 0
      %386 = vmatmul.mubr.bf16.gmra.mxu0 %v331
      %v387 = vpop.f32.mrf.mxu0
      %v388 = vadd.f32 %v272, %v387
      %v389 = vpop.f32.mrf.mxu0
      %v390 = vpop.f32.mrf.mxu0
      %v391 = vadd.f32 %v275, %v390
      %v392 = vpop.f32.mrf.mxu0
      %393 = vmatprep.mubr.bf16.mxu0 0
      %394 = vmatmul.mubr.bf16.gmra.mxu0 %v334
      %v395 = vpop.f32.mrf.mxu0
      %v396 = vadd.f32 %v280, %v395
      %v397 = vpop.f32.mrf.mxu0
      %v398 = vpop.f32.mrf.mxu0
      %v399 = vadd.f32 %v283, %v398
      %v400 = vpop.f32.mrf.mxu0
      %401 = vmatprep.mubr.bf16.mxu0 0
      %402 = vmatmul.mubr.bf16.gmra.mxu0 %v337
      %v403 = vpop.f32.mrf.mxu0
      %v404 = vadd.f32 %v288, %v403
      %v405 = vpop.f32.mrf.mxu0
      %v406 = vpop.f32.mrf.mxu0
      %v407 = vadd.f32 %v291, %v406
      %v408 = vpop.f32.mrf.mxu0
      %409 = vmatprep.mubr.bf16.mxu0 0
      %410 = vmatmul.mubr.bf16.gmra.mxu0 %v340
      %v411 = vpop.f32.mrf.mxu0
      %v412 = vadd.f32 %v296, %v411
      %v413 = vpop.f32.mrf.mxu0
      %v414 = vpop.f32.mrf.mxu0
      %v415 = vadd.f32 %v299, %v414
      %v416 = vpop.f32.mrf.mxu0
      %417 = vmatprep.mubr.bf16.mxu0 0
      %418 = vmatmul.mubr.bf16.gmra.mxu0 %v343
      %v419 = vpop.f32.mrf.mxu0
      %v420 = vadd.f32 %v304, %v419
      %v421 = vpop.f32.mrf.mxu0
      %v422 = vpop.f32.mrf.mxu0
      %v423 = vpop.f32.mrf.mxu0
      %424 = vdwg.mxu0
      %v425 = vld [vmem:[%s138 + $0x8] sm:$0xc]
      %v426 = vld [vmem:[%s138 + $0xc] sm:$0xf]
      %v427 = vld [vmem:[%s138 + $0x10] sm:$0xf]
      %v428 = vld [vmem:[%s138 + $0x14] sm:$0xf]
      %v429 = vld [vmem:[%s138 + $0x18] sm:$0xf]
      %v430 = vld [vmem:[%s138 + $0x1c] sm:$0xf]
      %v431 = vld [vmem:[%s138 + $0x20] sm:$0xf]
      %v432 = vld [vmem:[%s138 + $0x24] sm:$0xf]
      %v433 = vld [vmem:[%s138 + $0x28] sm:$0xf]
      %v434 = vld [vmem:[%s138 + $0x2c] sm:$0xf]
      %v435 = vld [vmem:[%s138 + $0x30] sm:$0x7]
      %s436 = scalar_lea.vmem %s1, 16
      %v437 = vld [vmem:[%s436] sm:$0xf]
      %v438 = vld [vmem:[%s436 + $0x4] sm:$0xf]
      %v450 = vunpack.c.l.b16 %v425
      %v451 = vunpack.c.l.b16 %v426
      %v452 = vunpack.c.l.b16 %v427
      %v453 = vunpack.c.l.b16 %v428
      %v454 = vunpack.c.l.b16 %v429
      %v455 = vunpack.c.l.b16 %v430
      %v456 = vunpack.c.l.b16 %v431
      %v457 = vunpack.c.l.b16 %v432
      %v458 = vunpack.c.l.b16 %v433
      %v459 = vunpack.c.l.b16 %v434
      %v460 = vunpack.c.l.b16 %v435
      %v461 = vpack.c.b16 %v451, %v450
      %v462 = vpack.c.b16 %v453, %v452
      %v463 = vpack.c.b16 %v455, %v454
      %v464 = vpack.c.b16 %v457, %v456
      %v465 = vpack.c.b16 %v459, %v458
      %v466 = vpack.c.b16 %v460, %v460
      %vm467 = vcmask 1045504
      %v468 = vrot.slane %v461, 2
      %v469 = vrot.slane %v462, 2
      %v470 = vsel %vm467, %v468, %v469
      %v471 = vrot.slane %v463, 2
      %v472 = vsel %vm467, %v469, %v471
      %v473 = vrot.slane %v464, 2
      %v474 = vsel %vm467, %v471, %v473
      %v475 = vrot.slane %v465, 2
      %v476 = vsel %vm467, %v473, %v475
      %v477 = vrot.slane %v466, 2
      %v478 = vsel %vm467, %v475, %v477
      %v481 = vunpack.c.l.b16 %v437
      %v482 = vunpack.c.l.b16 %v438
      %v483 = vpack.c.b16 %v482, %v481
      %v486 = vsel %vm210, %v470, 0
      %v489 = vsel %vm210, %v472, 0
      %v492 = vsel %vm210, %v474, 0
      %v495 = vsel %vm210, %v476, 0
      %v498 = vsel %vm210, %v478, 0
      %v501 = vsel %vm210, %v477, 0
      %503 = vmatprep.subr.bf16.mxu0 0
      %504 = vmatpush1.bf16.msra.mxu0 0
      %505 = vmatprep.subr.bf16.mxu0 0
      %506 = vmatpush1.bf16.msra.mxu0 0
      %507 = vmatprep.subr.bf16.mxu0 0
      %508 = vmatpush1.bf16.msra.mxu0 0
      %509 = vmatprep.subr.bf16.mxu0 0
      %510 = vmatpush1.bf16.msra.mxu0 0
      %511 = vmatprep.subr.bf16.mxu0 0
      %512 = vmatpush1.bf16.msra.mxu0 0
      %513 = vmatprep.subr.bf16.mxu0 0
      %514 = vmatpush1.bf16.msra.mxu0 0
      %515 = vmatprep.subr.bf16.mxu0 0
      %516 = vmatpush1.bf16.msra.mxu0 0
      %517 = vmatprep.subr.bf16.mxu0 0
      %518 = vmatpush1.bf16.msra.mxu0 %v483
      %519 = vmatprep.subr.bf16.mxu0 0
      %520 = vmatpush2.bf16.msra.mxu0 0
      %521 = vmatprep.subr.bf16.mxu0 0
      %522 = vmatpush2.bf16.msra.mxu0 0
      %523 = vmatprep.subr.bf16.mxu0 0
      %524 = vmatpush2.bf16.msra.mxu0 0
      %525 = vmatprep.subr.bf16.mxu0 0
      %526 = vmatpush2.bf16.msra.mxu0 0
      %527 = vmatprep.subr.bf16.mxu0 0
      %528 = vmatpush2.bf16.msra.mxu0 0
      %529 = vmatprep.subr.bf16.mxu0 0
      %530 = vmatpush2.bf16.msra.mxu0 0
      %531 = vmatprep.subr.bf16.mxu0 0
      %532 = vmatpush2.bf16.msra.mxu0 0
      %533 = vmatprep.subr.bf16.mxu0 0
      %534 = vmatpush2.bf16.msra.mxu0 0
      %535 = vmatprep.mubr.bf16.mxu0 0
      %536 = vmatmul.mubr.bf16.gmra.mxu0 %v486
      %v537 = vpop.f32.mrf.mxu0
      %v538 = vadd.f32 0.0, %v537
      %v539 = vpop.f32.mrf.mxu0
      %v540 = vpop.f32.mrf.mxu0
      %v541 = vadd.f32 0.0, %v540
      %v542 = vpop.f32.mrf.mxu0
      %543 = vmatprep.mubr.bf16.mxu0 0
      %544 = vmatmul.mubr.bf16.gmra.mxu0 %v489
      %v545 = vpop.f32.mrf.mxu0
      %v546 = vadd.f32 0.0, %v545
      %v547 = vpop.f32.mrf.mxu0
      %v548 = vpop.f32.mrf.mxu0
      %v549 = vadd.f32 0.0, %v548
      %v550 = vpop.f32.mrf.mxu0
      %551 = vmatprep.mubr.bf16.mxu0 0
      %552 = vmatmul.mubr.bf16.gmra.mxu0 %v492
      %v553 = vpop.f32.mrf.mxu0
      %v554 = vadd.f32 0.0, %v553
      %v555 = vpop.f32.mrf.mxu0
      %v556 = vpop.f32.mrf.mxu0
      %v557 = vadd.f32 0.0, %v556
      %v558 = vpop.f32.mrf.mxu0
      %559 = vmatprep.mubr.bf16.mxu0 0
      %560 = vmatmul.mubr.bf16.gmra.mxu0 %v495
      %v561 = vpop.f32.mrf.mxu0
      %v562 = vadd.f32 0.0, %v561
      %v563 = vpop.f32.mrf.mxu0
      %v564 = vpop.f32.mrf.mxu0
      %v565 = vadd.f32 0.0, %v564
      %v566 = vpop.f32.mrf.mxu0
      %567 = vmatprep.mubr.bf16.mxu0 0
      %568 = vmatmul.mubr.bf16.gmra.mxu0 %v498
      %v569 = vpop.f32.mrf.mxu0
      %v570 = vadd.f32 0.0, %v569
      %v571 = vpop.f32.mrf.mxu0
      %v572 = vpop.f32.mrf.mxu0
      %v573 = vadd.f32 0.0, %v572
      %v574 = vpop.f32.mrf.mxu0
      %575 = vmatprep.mubr.bf16.mxu0 0
      %576 = vmatmul.mubr.bf16.gmra.mxu0 %v501
      %v577 = vpop.f32.mrf.mxu0
      %v578 = vadd.f32 0.0, %v577
      %v579 = vpop.f32.mrf.mxu0
      %v580 = vpop.f32.mrf.mxu0
      %v581 = vpop.f32.mrf.mxu0
      %582 = vdwg.mxu0
      %v583 = vadd.f32 %v380, %v538
      %v584 = vadd.f32 %v383, %v541
      %v585 = vadd.f32 %v388, %v546
      %v586 = vadd.f32 %v391, %v549
      %v587 = vadd.f32 %v396, %v554
      %v588 = vadd.f32 %v399, %v557
      %v589 = vadd.f32 %v404, %v562
      %v590 = vadd.f32 %v407, %v565
      %v591 = vadd.f32 %v412, %v570
      %v592 = vadd.f32 %v415, %v573
      %v593 = vadd.f32 %v420, %v578
      %vm605 = vcmask 1046528
      %v606 = vrot.slane %v583, 1
      %v607 = vrot.slane %v584, 1
      %v608 = vsel %vm605, %v606, %v607
      %v609 = vrot.slane %v585, 1
      %v610 = vsel %vm605, %v607, %v609
      %v611 = vrot.slane %v586, 1
      %v612 = vsel %vm605, %v609, %v611
      %v613 = vrot.slane %v587, 1
      %v614 = vsel %vm605, %v611, %v613
      %v615 = vrot.slane %v588, 1
      %v616 = vsel %vm605, %v613, %v615
      %v617 = vrot.slane %v589, 1
      %v618 = vsel %vm605, %v615, %v617
      %v619 = vrot.slane %v590, 1
      %v620 = vsel %vm605, %v617, %v619
      %v621 = vrot.slane %v591, 1
      %v622 = vsel %vm605, %v619, %v621
      %v623 = vrot.slane %v592, 1
      %v624 = vsel %vm605, %v621, %v623
      %v625 = vrot.slane %v593, 1
      %v626 = vsel %vm605, %v623, %v625
      %627 = vrot.lane.b32.xlu0 %v608, 120
      %v628 = vpop.permute.xlu0 %627
      %629 = vrot.lane.b32.xlu0 %v610, 120
      %v630 = vpop.permute.xlu0 %629
      %631 = vrot.lane.b32.xlu0 %v612, 120
      %v632 = vpop.permute.xlu0 %631
      %633 = vrot.lane.b32.xlu0 %v614, 120
      %v634 = vpop.permute.xlu0 %633
      %635 = vrot.lane.b32.xlu0 %v616, 120
      %v636 = vpop.permute.xlu0 %635
      %637 = vrot.lane.b32.xlu0 %v618, 120
      %v638 = vpop.permute.xlu0 %637
      %639 = vrot.lane.b32.xlu0 %v620, 120
      %v640 = vpop.permute.xlu0 %639
      %641 = vrot.lane.b32.xlu0 %v622, 120
      %v642 = vpop.permute.xlu0 %641
      %643 = vrot.lane.b32.xlu0 %v624, 120
      %v644 = vpop.permute.xlu0 %643
      %645 = vrot.lane.b32.xlu0 %v626, 120
      %v646 = vpop.permute.xlu0 %645
      %v657 = vadd.f32 %v583, %v628
      %v658 = vadd.f32 %v584, %v630
      %v659 = vadd.f32 %v585, %v632
      %v660 = vadd.f32 %v586, %v634
      %v661 = vadd.f32 %v587, %v636
      %v662 = vadd.f32 %v588, %v638
      %v663 = vadd.f32 %v589, %v640
      %v664 = vadd.f32 %v590, %v642
      %v665 = vadd.f32 %v591, %v644
      %v666 = vadd.f32 %v592, %v646
      %vm667 = vcmask 1045504
      %v668 = vrot.slane %v583, 2
      %v669 = vrot.slane %v584, 2
      %v670 = vsel %vm667, %v668, %v669
      %v671 = vrot.slane %v585, 2
      %v672 = vsel %vm667, %v669, %v671
      %v673 = vrot.slane %v586, 2
      %v674 = vsel %vm667, %v671, %v673
      %v675 = vrot.slane %v587, 2
      %v676 = vsel %vm667, %v673, %v675
      %v677 = vrot.slane %v588, 2
      %v678 = vsel %vm667, %v675, %v677
      %v679 = vrot.slane %v589, 2
      %v680 = vsel %vm667, %v677, %v679
      %v681 = vrot.slane %v590, 2
      %v682 = vsel %vm667, %v679, %v681
      %v683 = vrot.slane %v591, 2
      %v684 = vsel %vm667, %v681, %v683
      %v685 = vrot.slane %v592, 2
      %v686 = vsel %vm667, %v683, %v685
      %v687 = vrot.slane %v593, 2
      %v688 = vsel %vm667, %v685, %v687
      %689 = vrot.lane.b32.xlu0 %v670, 112
      %v690 = vpop.permute.xlu0 %689
      %691 = vrot.lane.b32.xlu0 %v672, 112
      %v692 = vpop.permute.xlu0 %691
      %693 = vrot.lane.b32.xlu0 %v674, 112
      %v694 = vpop.permute.xlu0 %693
      %695 = vrot.lane.b32.xlu0 %v676, 112
      %v696 = vpop.permute.xlu0 %695
      %697 = vrot.lane.b32.xlu0 %v678, 112
      %v698 = vpop.permute.xlu0 %697
      %699 = vrot.lane.b32.xlu0 %v680, 112
      %v700 = vpop.permute.xlu0 %699
      %701 = vrot.lane.b32.xlu0 %v682, 112
      %v702 = vpop.permute.xlu0 %701
      %703 = vrot.lane.b32.xlu0 %v684, 112
      %v704 = vpop.permute.xlu0 %703
      %705 = vrot.lane.b32.xlu0 %v686, 112
      %v706 = vpop.permute.xlu0 %705
      %707 = vrot.lane.b32.xlu0 %v688, 112
      %v708 = vpop.permute.xlu0 %707
      %v719 = vadd.f32 %v657, %v690
      %v720 = vadd.f32 %v658, %v692
      %v721 = vadd.f32 %v659, %v694
      %v722 = vadd.f32 %v660, %v696
      %v723 = vadd.f32 %v661, %v698
      %v724 = vadd.f32 %v662, %v700
      %v725 = vadd.f32 %v663, %v702
      %v726 = vadd.f32 %v664, %v704
      %v727 = vadd.f32 %v665, %v706
      %v728 = vadd.f32 %v666, %v708
      %v729 = vpack.c.bf16 %v720, %v719
      %v730 = vpack.c.bf16 %v722, %v721
      %v731 = vpack.c.bf16 %v724, %v723
      %v732 = vpack.c.bf16 %v726, %v725
      %v733 = vpack.c.bf16 %v728, %v727
      %v739 = vunpack.c.l.b16 %v729
      %v740 = vunpack.c.h.b16 %v729
      %v741 = vunpack.c.l.b16 %v730
      %v742 = vunpack.c.h.b16 %v730
      %v743 = vunpack.c.l.b16 %v731
      %v744 = vunpack.c.h.b16 %v731
      %v745 = vunpack.c.l.b16 %v732
      %v746 = vunpack.c.h.b16 %v732
      %v747 = vunpack.c.l.b16 %v733
      %v748 = vunpack.c.h.b16 %v733
      %v749 = vpack.c.b16 %v739, %v739
      %v750 = vpack.c.b16 %v740, %v740
      %v751 = vpack.c.b16 %v741, %v741
      %v752 = vpack.c.b16 %v742, %v742
      %v753 = vpack.c.b16 %v743, %v743
      %v754 = vpack.c.b16 %v744, %v744
      %v755 = vpack.c.b16 %v745, %v745
      %v756 = vpack.c.b16 %v746, %v746
      %v757 = vpack.c.b16 %v747, %v747
      %v758 = vpack.c.b16 %v748, %v748
      %vm769 = vcmask 60416
      %770 = vst.msk [vmem:[%s143] sm:$0xf] %vm769, %v749
      %771 = vst.msk [vmem:[%s143 + $0x4] sm:$0xf] %vm769, %v750
      %772 = vst.msk [vmem:[%s143 + $0x8] sm:$0xf] %vm769, %v751
      %773 = vst.msk [vmem:[%s143 + $0xc] sm:$0xf] %vm769, %v752
      %774 = vst.msk [vmem:[%s143 + $0x10] sm:$0xf] %vm769, %v753
      %775 = vst.msk [vmem:[%s143 + $0x14] sm:$0xf] %vm769, %v754
      %776 = vst.msk [vmem:[%s143 + $0x18] sm:$0xf] %vm769, %v755
      %777 = vst.msk [vmem:[%s143 + $0x1c] sm:$0xf] %vm769, %v756
      %778 = vst.msk [vmem:[%s143 + $0x20] sm:$0xf] %vm769, %v757
      %779 = vst.msk [vmem:[%s143 + $0x24] sm:$0xf] %vm769, %v758
      %p780 = scmp.lt.s32.totalorder %s13, 1
      %s781 = scalar_select %p780, %s13, 1
      %s782 = smul.addr %s781, 10
      %s783 = smul.addr %s782, 4
      %s784 = scalar_lea.vmem %s2, %s783
      // Predicated region
      $region29: #{forward.15} parent=27 // pred_check
        %p785 = pneg %p78
      $region30: #{forward.15} parent=27 // pred_check_branch
        %787 = sbr.rel (%p785) target = $region32
      $region31: #{forward.15} parent=27 // pred_region
        _
      $region32: #{forward.15} parent=27 // pred_fallthru
        _
    $region28: #{forward.15} parent=5 // pred_fallthru
      _
    %p788 = scmp.le.s32.totalorder 2, %s8
    // Predicated region
    $region33: #{forward.15} parent=5 // pred_check
      %p789 = pneg %p788
    $region34: #{forward.15} parent=5 // pred_check_branch
      %791 = sbr.rel (%p789) target = $region36
    $region35: #{forward.15} parent=5 // pred_region
      %s792 = ssub.s32 %s8, 2
      // Predicated region
      $region37: #{forward.15} parent=35 // pred_check
        %p793 = pneg %p84
      $region38: #{forward.15} parent=35 // pred_check_branch
        %795 = sbr.rel (%p793) target = $region40
      $region39: #{forward.15} parent=35 // pred_region
        %p796 = scmp.lt.s32.totalorder %s14, 1
        %s797 = scalar_select %p796, %s14, 1
        %s798 = smul.addr %s797, 10
        %s799 = smul.addr %s798, 4
        %s800 = scalar_lea.vmem %s2, %s799
      $region40: #{forward.15} parent=35 // pred_fallthru
        _
    $region36: #{forward.15} parent=5 // pred_fallthru
      _
  $region6: #{forward.15} parent=0 // loop_footer
    %s12 = sadd.s32 1, %s8
  $region7: #{forward.15} parent=0 // loop_footer_branch
    %7 = sbr.rel target = $region3
  $region8: #{forward.15} parent=0 // loop_exit
    _

// kernel: forward.16
$region0: #{forward.16}
  #allocation0 [shape = 'u32[]', space=smem, size = 0x4, offset = 0x4, fixed_abs, tag = 'smem constant byte address 0x4 - core index']
  #allocation1 [shape = 'u32[144,128]{1,0:T(1,128)}', space=vmem, size = 0x12000, scoped, tag = 'internal scratch']
  %s0 = inlined_call_operand.vmem [shape: bf16[128,24], index: 0, kind: input, shape index: {}]
  %s1 = inlined_call_operand.vmem [shape: f32[1,24], index: 1, kind: input, shape index: {}]
  %s2 = inlined_call_operand.vmem [shape: bf16[24,16], index: 2, kind: input, shape index: {}]
  %s3 = inlined_call_operand.vmem [shape: f32[1,16], index: 3, kind: input, shape index: {}]
  %s4 = inlined_call_operand.vmem [shape: bf16[128,16], index: 4, kind: output, shape index: {}]
  %s5 = sld [smem:[#allocation0]]
  $region26: #{forward.16} parent=0
    _
  %s7 = ssub.s32 1, %s5
  %s8 = scalar_select 0, %s7, %s5
  // Predicated region
  $region2: #{forward.16} parent=0 // pred_check
    _
  $region3: #{forward.16} parent=0 // pred_check_branch
    %10 = sbr.rel (0) target = $region5
  $region4: #{forward.16} parent=0 // pred_region
    _
  $region5: #{forward.16} parent=0 // pred_fallthru
    _
  // Predicated region
  $region6: #{forward.16} parent=0 // pred_check
    _
  $region7: #{forward.16} parent=0 // pred_check_branch
    %12 = sbr.rel (0) target = $region9
  $region8: #{forward.16} parent=0 // pred_region
    _
  $region9: #{forward.16} parent=0 // pred_fallthru
    _
  // Predicated region
  $region10: #{forward.16} parent=0 // pred_check
    _
  $region11: #{forward.16} parent=0 // pred_check_branch
    %14 = sbr.rel (0) target = $region13
  $region12: #{forward.16} parent=0 // pred_region
    _
  $region13: #{forward.16} parent=0 // pred_fallthru
    _
  // Predicated region
  $region14: #{forward.16} parent=0 // pred_check
    _
  $region15: #{forward.16} parent=0 // pred_check_branch
    %16 = sbr.rel (0) target = $region17
  $region16: #{forward.16} parent=0 // pred_region
    _
  $region17: #{forward.16} parent=0 // pred_fallthru
    _
  %v18 = vld [vmem:[%s0] sm:$0xf]
  %v19 = vld [vmem:[%s0 + $0x4] sm:$0xf]
  %v20 = vld [vmem:[%s0 + $0x8] sm:$0xf]
  %v21 = vld [vmem:[%s0 + $0xc] sm:$0xf]
  %v22 = vld [vmem:[%s0 + $0x10] sm:$0xf]
  %v23 = vld [vmem:[%s0 + $0x14] sm:$0xf]
  %v24 = vld [vmem:[%s0 + $0x18] sm:$0xf]
  %v25 = vld [vmem:[%s0 + $0x1c] sm:$0xf]
  %v26 = vld [vmem:[%s0 + $0x20] sm:$0xf]
  %v27 = vld [vmem:[%s0 + $0x24] sm:$0xf]
  %v28 = vld [vmem:[%s0 + $0x28] sm:$0xf]
  %v29 = vld [vmem:[%s0 + $0x2c] sm:$0xf]
  %v30 = vld [vmem:[%s0 + $0x30] sm:$0xf]
  %v31 = vld [vmem:[%s0 + $0x34] sm:$0xf]
  %v32 = vld [vmem:[%s0 + $0x38] sm:$0xf]
  %v33 = vld [vmem:[%s0 + $0x3c] sm:$0xf]
  %v34 = vunpack.c.l.bf16 %v18
  %v35 = vunpack.c.l.bf16 %v19
  %v36 = vunpack.c.l.bf16 %v20
  %v37 = vunpack.c.l.bf16 %v21
  %v38 = vunpack.c.l.bf16 %v22
  %v39 = vunpack.c.l.bf16 %v23
  %v40 = vunpack.c.l.bf16 %v24
  %v41 = vunpack.c.l.bf16 %v25
  %v42 = vunpack.c.l.bf16 %v26
  %v43 = vunpack.c.l.bf16 %v27
  %v44 = vunpack.c.l.bf16 %v28
  %v45 = vunpack.c.l.bf16 %v29
  %v46 = vunpack.c.l.bf16 %v30
  %v47 = vunpack.c.l.bf16 %v31
  %v48 = vunpack.c.l.bf16 %v32
  %v49 = vunpack.c.l.bf16 %v33
  %v50 = vld [vmem:[%s1] sm:$0x1]
  %v52 = vlaneseq
  %v53 = vshrl.u32 %v52, 7
  %v54 = vsub.s32 0, %v53
  %v55 = vrot.slane %v50, %v54
  %v57 = vadd.f32 %v34, %v55
  %v58 = vadd.f32 %v35, %v55
  %v59 = vadd.f32 %v36, %v55
  %v60 = vadd.f32 %v37, %v55
  %v61 = vadd.f32 %v38, %v55
  %v62 = vadd.f32 %v39, %v55
  %v63 = vadd.f32 %v40, %v55
  %v64 = vadd.f32 %v41, %v55
  %v65 = vadd.f32 %v42, %v55
  %v66 = vadd.f32 %v43, %v55
  %v67 = vadd.f32 %v44, %v55
  %v68 = vadd.f32 %v45, %v55
  %v69 = vadd.f32 %v46, %v55
  %v70 = vadd.f32 %v47, %v55
  %v71 = vadd.f32 %v48, %v55
  %v72 = vadd.f32 %v49, %v55
  %v73 = vmax.f32 %v57, 0.0
  %v74 = vmax.f32 %v58, 0.0
  %v75 = vmax.f32 %v59, 0.0
  %v76 = vmax.f32 %v60, 0.0
  %v77 = vmax.f32 %v61, 0.0
  %v78 = vmax.f32 %v62, 0.0
  %v79 = vmax.f32 %v63, 0.0
  %v80 = vmax.f32 %v64, 0.0
  %v81 = vmax.f32 %v65, 0.0
  %v82 = vmax.f32 %v66, 0.0
  %v83 = vmax.f32 %v67, 0.0
  %v84 = vmax.f32 %v68, 0.0
  %v85 = vmax.f32 %v69, 0.0
  %v86 = vmax.f32 %v70, 0.0
  %v87 = vmax.f32 %v71, 0.0
  %v88 = vmax.f32 %v72, 0.0
  %v89 = vpack.c.bf16 %v74, %v73
  %v90 = vpack.c.bf16 %v76, %v75
  %v91 = vpack.c.bf16 %v78, %v77
  %v92 = vpack.c.bf16 %v80, %v79
  %v93 = vpack.c.bf16 %v82, %v81
  %v94 = vpack.c.bf16 %v84, %v83
  %v95 = vpack.c.bf16 %v86, %v85
  %v96 = vpack.c.bf16 %v88, %v87
  %v97 = vld [vmem:[%s2] sm:$0xf]
  %v98 = vld [vmem:[%s2 + $0x4] sm:$0xf]
  %v99 = vld [vmem:[%s2 + $0x8] sm:$0xf]
  %v100 = vld [vmem:[%s3] sm:$0x1]
  %v102 = vlaneseq
  %v103 = vshrl.u32 %v102, 7
  %v104 = vsub.s32 0, %v103
  %v105 = vrot.slane %v100, %v104
  %v110 = vunpack.c.l.b16 %v97
  %v111 = vunpack.c.l.b16 %v98
  %v112 = vunpack.c.l.b16 %v99
  %v113 = vpack.c.b16 %v111, %v110
  %v114 = vpack.c.b16 %v112, %v112
  %vm116 = vcmask 195584
  %v118 = vsel %vm116, %v89, 0
  %v121 = vsel %vm116, %v90, 0
  %v124 = vsel %vm116, %v91, 0
  %v127 = vsel %vm116, %v92, 0
  %v130 = vsel %vm116, %v93, 0
  %v133 = vsel %vm116, %v94, 0
  %v136 = vsel %vm116, %v95, 0
  %v139 = vsel %vm116, %v96, 0
  %vm141 = vcmask 1043456
  %v143 = vsel %vm141, %v114, 0
  %145 = vmatprep.subr.bf16.mxu0 0
  %146 = vmatpush1.bf16.msra.mxu0 0
  %147 = vmatprep.subr.bf16.mxu0 0
  %148 = vmatpush1.bf16.msra.mxu0 0
  %149 = vmatprep.subr.bf16.mxu0 0
  %150 = vmatpush1.bf16.msra.mxu0 0
  %151 = vmatprep.subr.bf16.mxu0 0
  %152 = vmatpush1.bf16.msra.mxu0 0
  %153 = vmatprep.subr.bf16.mxu0 0
  %154 = vmatpush1.bf16.msra.mxu0 0
  %155 = vmatprep.subr.bf16.mxu0 0
  %156 = vmatpush1.bf16.msra.mxu0 0
  %157 = vmatprep.subr.bf16.mxu0 0
  %158 = vmatpush1.bf16.msra.mxu0 %v143
  %159 = vmatprep.subr.bf16.mxu0 0
  %160 = vmatpush1.bf16.msra.mxu0 %v113
  %161 = vmatprep.subr.bf16.mxu0 0
  %162 = vmatpush2.bf16.msra.mxu0 0
  %163 = vmatprep.subr.bf16.mxu0 0
  %164 = vmatpush2.bf16.msra.mxu0 0
  %165 = vmatprep.subr.bf16.mxu0 0
  %166 = vmatpush2.bf16.msra.mxu0 0
  %167 = vmatprep.subr.bf16.mxu0 0
  %168 = vmatpush2.bf16.msra.mxu0 0
  %169 = vmatprep.subr.bf16.mxu0 0
  %170 = vmatpush2.bf16.msra.mxu0 0
  %171 = vmatprep.subr.bf16.mxu0 0
  %172 = vmatpush2.bf16.msra.mxu0 0
  %173 = vmatprep.subr.bf16.mxu0 0
  %174 = vmatpush2.bf16.msra.mxu0 0
  %175 = vmatprep.subr.bf16.mxu0 0
  %176 = vmatpush2.bf16.msra.mxu0 0
  %177 = vmatprep.mubr.bf16.mxu0 0
  %178 = vmatmul.mubr.bf16.gmra.mxu0 %v118
  %v179 = vpop.f32.mrf.mxu0
  %v180 = vadd.f32 %v105, %v179
  %v181 = vpop.f32.mrf.mxu0
  %v182 = vpop.f32.mrf.mxu0
  %v183 = vadd.f32 %v105, %v182
  %v184 = vpop.f32.mrf.mxu0
  %185 = vmatprep.mubr.bf16.mxu0 0
  %186 = vmatmul.mubr.bf16.gmra.mxu0 %v121
  %v187 = vpop.f32.mrf.mxu0
  %v188 = vadd.f32 %v105, %v187
  %v189 = vpop.f32.mrf.mxu0
  %v190 = vpop.f32.mrf.mxu0
  %v191 = vadd.f32 %v105, %v190
  %v192 = vpop.f32.mrf.mxu0
  %193 = vmatprep.mubr.bf16.mxu0 0
  %194 = vmatmul.mubr.bf16.gmra.mxu0 %v124
  %v195 = vpop.f32.mrf.mxu0
  %v196 = vadd.f32 %v105, %v195
  %v197 = vpop.f32.mrf.mxu0
  %v198 = vpop.f32.mrf.mxu0
  %v199 = vadd.f32 %v105, %v198
  %v200 = vpop.f32.mrf.mxu0
  %201 = vmatprep.mubr.bf16.mxu0 0
  %202 = vmatmul.mubr.bf16.gmra.mxu0 %v127
  %v203 = vpop.f32.mrf.mxu0
  %v204 = vadd.f32 %v105, %v203
  %v205 = vpop.f32.mrf.mxu0
  %v206 = vpop.f32.mrf.mxu0
  %v207 = vadd.f32 %v105, %v206
  %v208 = vpop.f32.mrf.mxu0
  %209 = vmatprep.mubr.bf16.mxu0 0
  %210 = vmatmul.mubr.bf16.gmra.mxu0 %v130
  %v211 = vpop.f32.mrf.mxu0
  %v212 = vadd.f32 %v105, %v211
  %v213 = vpop.f32.mrf.mxu0
  %v214 = vpop.f32.mrf.mxu0
  %v215 = vadd.f32 %v105, %v214
  %v216 = vpop.f32.mrf.mxu0
  %217 = vmatprep.mubr.bf16.mxu0 0
  %218 = vmatmul.mubr.bf16.gmra.mxu0 %v133
  %v219 = vpop.f32.mrf.mxu0
  %v220 = vadd.f32 %v105, %v219
  %v221 = vpop.f32.mrf.mxu0
  %v222 = vpop.f32.mrf.mxu0
  %v223 = vadd.f32 %v105, %v222
  %v224 = vpop.f32.mrf.mxu0
  %225 = vmatprep.mubr.bf16.mxu0 0
  %226 = vmatmul.mubr.bf16.gmra.mxu0 %v136
  %v227 = vpop.f32.mrf.mxu0
  %v228 = vadd.f32 %v105, %v227
  %v229 = vpop.f32.mrf.mxu0
  %v230 = vpop.f32.mrf.mxu0
  %v231 = vadd.f32 %v105, %v230
  %v232 = vpop.f32.mrf.mxu0
  %233 = vmatprep.mubr.bf16.mxu0 0
  %234 = vmatmul.mubr.bf16.gmra.mxu0 %v139
  %v235 = vpop.f32.mrf.mxu0
  %v236 = vadd.f32 %v105, %v235
  %v237 = vpop.f32.mrf.mxu0
  %v238 = vpop.f32.mrf.mxu0
  %v239 = vadd.f32 %v105, %v238
  %v240 = vpop.f32.mrf.mxu0
  %241 = vdwg.mxu0
  %v242 = vmax.f32 %v180, 0.0
  %v243 = vmax.f32 %v183, 0.0
  %v244 = vmax.f32 %v188, 0.0
  %v245 = vmax.f32 %v191, 0.0
  %v246 = vmax.f32 %v196, 0.0
  %v247 = vmax.f32 %v199, 0.0
  %v248 = vmax.f32 %v204, 0.0
  %v249 = vmax.f32 %v207, 0.0
  %v250 = vmax.f32 %v212, 0.0
  %v251 = vmax.f32 %v215, 0.0
  %v252 = vmax.f32 %v220, 0.0
  %v253 = vmax.f32 %v223, 0.0
  %v254 = vmax.f32 %v228, 0.0
  %v255 = vmax.f32 %v231, 0.0
  %v256 = vmax.f32 %v236, 0.0
  %v257 = vmax.f32 %v239, 0.0
  %v258 = vpack.c.bf16 %v243, %v242
  %v259 = vpack.c.bf16 %v245, %v244
  %v260 = vpack.c.bf16 %v247, %v246
  %v261 = vpack.c.bf16 %v249, %v248
  %v262 = vpack.c.bf16 %v251, %v250
  %v263 = vpack.c.bf16 %v253, %v252
  %v264 = vpack.c.bf16 %v255, %v254
  %v265 = vpack.c.bf16 %v257, %v256
  %v274 = vunpack.c.l.b16 %v258
  %v275 = vunpack.c.h.b16 %v258
  %v276 = vunpack.c.l.b16 %v259
  %v277 = vunpack.c.h.b16 %v259
  %v278 = vunpack.c.l.b16 %v260
  %v279 = vunpack.c.h.b16 %v260
  %v280 = vunpack.c.l.b16 %v261
  %v281 = vunpack.c.h.b16 %v261
  %v282 = vunpack.c.l.b16 %v262
  %v283 = vunpack.c.h.b16 %v262
  %v284 = vunpack.c.l.b16 %v263
  %v285 = vunpack.c.h.b16 %v263
  %v286 = vunpack.c.l.b16 %v264
  %v287 = vunpack.c.h.b16 %v264
  %v288 = vunpack.c.l.b16 %v265
  %v289 = vunpack.c.h.b16 %v265
  %v290 = vpack.c.b16 %v274, %v274
  %v291 = vpack.c.b16 %v275, %v275
  %v292 = vpack.c.b16 %v276, %v276
  %v293 = vpack.c.b16 %v277, %v277
  %v294 = vpack.c.b16 %v278, %v278
  %v295 = vpack.c.b16 %v279, %v279
  %v296 = vpack.c.b16 %v280, %v280
  %v297 = vpack.c.b16 %v281, %v281
  %v298 = vpack.c.b16 %v282, %v282
  %v299 = vpack.c.b16 %v283, %v283
  %v300 = vpack.c.b16 %v284, %v284
  %v301 = vpack.c.b16 %v285, %v285
  %v302 = vpack.c.b16 %v286, %v286
  %v303 = vpack.c.b16 %v287, %v287
  %v304 = vpack.c.b16 %v288, %v288
  %v305 = vpack.c.b16 %v289, %v289
  %vm322 = vcmask 125952
  %323 = vst.msk [vmem:[%s4] sm:$0xf] %vm322, %v290
  %324 = vst.msk [vmem:[%s4 + $0x4] sm:$0xf] %vm322, %v291
  %325 = vst.msk [vmem:[%s4 + $0x8] sm:$0xf] %vm322, %v292
  %326 = vst.msk [vmem:[%s4 + $0xc] sm:$0xf] %vm322, %v293
  %327 = vst.msk [vmem:[%s4 + $0x10] sm:$0xf] %vm322, %v294
  %328 = vst.msk [vmem:[%s4 + $0x14] sm:$0xf] %vm322, %v295
  %329 = vst.msk [vmem:[%s4 + $0x18] sm:$0xf] %vm322, %v296
  %330 = vst.msk [vmem:[%s4 + $0x1c] sm:$0xf] %vm322, %v297
  %331 = vst.msk [vmem:[%s4 + $0x20] sm:$0xf] %vm322, %v298
  %332 = vst.msk [vmem:[%s4 + $0x24] sm:$0xf] %vm322, %v299
  %333 = vst.msk [vmem:[%s4 + $0x28] sm:$0xf] %vm322, %v300
  %334 = vst.msk [vmem:[%s4 + $0x2c] sm:$0xf] %vm322, %v301
  %335 = vst.msk [vmem:[%s4 + $0x30] sm:$0xf] %vm322, %v302
  %336 = vst.msk [vmem:[%s4 + $0x34] sm:$0xf] %vm322, %v303
  %337 = vst.msk [vmem:[%s4 + $0x38] sm:$0xf] %vm322, %v304
  %338 = vst.msk [vmem:[%s4 + $0x3c] sm:$0xf] %vm322, %v305
  // Predicated region
  $region18: #{forward.16} parent=0 // pred_check
    _
  $region19: #{forward.16} parent=0 // pred_check_branch
    %340 = sbr.rel (0) target = $region21
  $region20: #{forward.16} parent=0 // pred_region
    _
  $region21: #{forward.16} parent=0 // pred_fallthru
    _
  // Predicated region
  $region22: #{forward.16} parent=0 // pred_check
    _
  $region23: #{forward.16} parent=0 // pred_check_branch
    %342 = sbr.rel (0) target = $region25
  $region24: #{forward.16} parent=0 // pred_region
    _
  $region25: #{forward.16} parent=0 // pred_fallthru
    _

// kernel: forward.18
$region0: #{forward.18}
  #allocation0 [shape = 'u32[]', space=smem, size = 0x4, offset = 0x4, fixed_abs, tag = 'smem constant byte address 0x4 - core index']
  #allocation1 [shape = 'u32[144,128]{1,0:T(1,128)}', space=vmem, size = 0x12000, scoped, tag = 'internal scratch']
  %s0 = inlined_call_operand.vmem [shape: bf16[2,16,32], index: 0, kind: input, shape index: {}]
  %s1 = inlined_call_operand.vmem [shape: bf16[2,16,32], index: 1, kind: input, shape index: {}]
  %s2 = inlined_call_operand.vmem [shape: bf16[2,16,32], index: 2, kind: input, shape index: {}]
  %s3 = inlined_call_operand.vmem [shape: bf16[2,16,32], index: 3, kind: input, shape index: {}]
  %s4 = inlined_call_operand.vmem [shape: f32[1,32], index: 4, kind: input, shape index: {}]
  %s5 = inlined_call_operand.vmem [shape: bf16[32,16], index: 5, kind: input, shape index: {}]
  %s6 = inlined_call_operand.vmem [shape: bf16[2,16,16], index: 6, kind: output, shape index: {}]
  %s7 = sld [smem:[#allocation0]]
  $region57: #{forward.18} parent=0
    _
  %s9 = ssub.s32 1, %s7
  %s10 = scalar_select 0, %s9, %s7
  loop: start=0, step=1, limit=4
  $region2: #{forward.18} parent=0 // loop_pre_header
    _
  $region3: #{forward.18} parent=0 // loop_header
    %s12 = sphi 0, %s16
    %p13 = scmp.ge.s32.totalorder %s12, 4
    %s19 = sphi 0, %s31
    %s20 = sphi 0, %s27
    %s21 = sphi 0, %s19
    %s22 = sphi 0, %s20
    %s23 = sphi 0, %s21
    %s24 = sphi 0, %s22
    %s36 = sphi 0, %s38
    %s39 = sphi 0, %s36
    %s40 = sphi 0, %s39
    %s56 = sphi 0, %s40
    %s64 = sphi 0, %s66
    %s67 = sphi 0, %s64
    %s68 = sphi 0, %s67
    %s84 = sphi 0, %s68
    %s92 = sphi 0, %s94
    %s95 = sphi 0, %s92
    %s96 = sphi 0, %s95
    %s112 = sphi 0, %s96
    %s120 = sphi 0, %s122
    %s123 = sphi 0, %s120
    %s124 = sphi 0, %s123
    %s140 = sphi 0, %s124
    %s144 = sphi 0, %s144
    %s146 = sphi 0, %s144
    %s147 = sphi 0, %s146
    %s161 = sphi 0, %s147
    %s165 = sphi 0, %s165
    %s167 = sphi 0, %s165
    %s168 = sphi 0, %s167
    %s182 = sphi 0, %s168
    %s190 = sphi 0, %s192
    %s193 = sphi 0, %s190
    %s194 = sphi 0, %s193
    %s210 = sphi 0, %s194
  $region4: #{forward.18} parent=0 // loop_header_branch
    %15 = sbr.rel (%p13) target = $region8
  $region5: #{forward.18} parent=0 // loop_body
    %s17 = ssub.s32 %s12, 1
    %s18 = ssub.s32 %s12, 2
    %s25 = sadd.s32 1, %s20
    %p26 = scmp.ge.s32.totalorder %s25, 1
    %s27 = scalar_select %p26, 0, %s25
    %s28 = sadd.s32 1, %s19
    %s29 = scalar_select %p26, %s28, %s19
    %p30 = scmp.ge.s32.totalorder %s29, 2
    %s31 = scalar_select %p30, 0, %s29
    %s32 = ssub.s32 %s19, %s31
    %s33 = ssub.s32 %s20, %s27
    %s34 = sor.u32 %s32, %s33
    %p35 = scmp.eq.s32.totalorder %s34, 0
    %s37 = sadd.s32 %s36, 1
    %s38 = scalar_select %p35, %s36, %s37
    %p41 = pneg %p35
    %p42 = scmp.eq.s32.totalorder %s12, 1
    %p43 = por %p41, %p42
    %p44 = scmp.ne.s32.totalorder %s36, %s39
    %p45 = scmp.eq.s32.totalorder %s12, 0
    %p46 = por %p44, %p45
    %p47 = scmp.ne.s32.totalorder %s36, %s39
    %p48 = scmp.eq.s32.totalorder %s17, 1
    %p49 = por %p47, %p48
    %p50 = scmp.ne.s32.totalorder %s39, %s40
    %p51 = scmp.eq.s32.totalorder %s17, 0
    %p52 = por %p50, %p51
    %p53 = scmp.ne.s32.totalorder %s39, %s40
    %p54 = scmp.eq.s32.totalorder %s18, 1
    %p55 = por %p53, %p54
    %p57 = scmp.ne.s32.totalorder %s40, %s56
    %p58 = scmp.eq.s32.totalorder %s18, 0
    %p59 = por %p57, %p58
    %s60 = ssub.s32 %s19, %s31
    %s61 = ssub.s32 %s20, %s27
    %s62 = sor.u32 %s60, %s61
    %p63 = scmp.eq.s32.totalorder %s62, 0
    %s65 = sadd.s32 %s64, 1
    %s66 = scalar_select %p63, %s64, %s65
    %p69 = pneg %p63
    %p70 = scmp.eq.s32.totalorder %s12, 1
    %p71 = por %p69, %p70
    %p72 = scmp.ne.s32.totalorder %s64, %s67
    %p73 = scmp.eq.s32.totalorder %s12, 0
    %p74 = por %p72, %p73
    %p75 = scmp.ne.s32.totalorder %s64, %s67
    %p76 = scmp.eq.s32.totalorder %s17, 1
    %p77 = por %p75, %p76
    %p78 = scmp.ne.s32.totalorder %s67, %s68
    %p79 = scmp.eq.s32.totalorder %s17, 0
    %p80 = por %p78, %p79
    %p81 = scmp.ne.s32.totalorder %s67, %s68
    %p82 = scmp.eq.s32.totalorder %s18, 1
    %p83 = por %p81, %p82
    %p85 = scmp.ne.s32.totalorder %s68, %s84
    %p86 = scmp.eq.s32.totalorder %s18, 0
    %p87 = por %p85, %p86
    %s88 = ssub.s32 %s19, %s31
    %s89 = ssub.s32 %s20, %s27
    %s90 = sor.u32 %s88, %s89
    %p91 = scmp.eq.s32.totalorder %s90, 0
    %s93 = sadd.s32 %s92, 1
    %s94 = scalar_select %p91, %s92, %s93
    %p97 = pneg %p91
    %p98 = scmp.eq.s32.totalorder %s12, 1
    %p99 = por %p97, %p98
    %p100 = scmp.ne.s32.totalorder %s92, %s95
    %p101 = scmp.eq.s32.totalorder %s12, 0
    %p102 = por %p100, %p101
    %p103 = scmp.ne.s32.totalorder %s92, %s95
    %p104 = scmp.eq.s32.totalorder %s17, 1
    %p105 = por %p103, %p104
    %p106 = scmp.ne.s32.totalorder %s95, %s96
    %p107 = scmp.eq.s32.totalorder %s17, 0
    %p108 = por %p106, %p107
    %p109 = scmp.ne.s32.totalorder %s95, %s96
    %p110 = scmp.eq.s32.totalorder %s18, 1
    %p111 = por %p109, %p110
    %p113 = scmp.ne.s32.totalorder %s96, %s112
    %p114 = scmp.eq.s32.totalorder %s18, 0
    %p115 = por %p113, %p114
    %s116 = ssub.s32 %s19, %s31
    %s117 = ssub.s32 %s20, %s27
    %s118 = sor.u32 %s116, %s117
    %p119 = scmp.eq.s32.totalorder %s118, 0
    %s121 = sadd.s32 %s120, 1
    %s122 = scalar_select %p119, %s120, %s121
    %p125 = pneg %p119
    %p126 = scmp.eq.s32.totalorder %s12, 1
    %p127 = por %p125, %p126
    %p128 = scmp.ne.s32.totalorder %s120, %s123
    %p129 = scmp.eq.s32.totalorder %s12, 0
    %p130 = por %p128, %p129
    %p131 = scmp.ne.s32.totalorder %s120, %s123
    %p132 = scmp.eq.s32.totalorder %s17, 1
    %p133 = por %p131, %p132
    %p134 = scmp.ne.s32.totalorder %s123, %s124
    %p135 = scmp.eq.s32.totalorder %s17, 0
    %p136 = por %p134, %p135
    %p137 = scmp.ne.s32.totalorder %s123, %s124
    %p138 = scmp.eq.s32.totalorder %s18, 1
    %p139 = por %p137, %p138
    %p141 = scmp.ne.s32.totalorder %s124, %s140
    %p142 = scmp.eq.s32.totalorder %s18, 0
    %p143 = por %p141, %p142
    %s145 = sadd.s32 %s144, 1
    %p148 = scmp.eq.s32.totalorder %s12, 1
    %p149 = scmp.ne.s32.totalorder %s144, %s146
    %p150 = scmp.eq.s32.totalorder %s12, 0
    %p151 = por %p149, %p150
    %p152 = scmp.ne.s32.totalorder %s144, %s146
    %p153 = scmp.eq.s32.totalorder %s17, 1
    %p154 = por %p152, %p153
    %p155 = scmp.ne.s32.totalorder %s146, %s147
    %p156 = scmp.eq.s32.totalorder %s17, 0
    %p157 = por %p155, %p156
    %p158 = scmp.ne.s32.totalorder %s146, %s147
    %p159 = scmp.eq.s32.totalorder %s18, 1
    %p160 = por %p158, %p159
    %p162 = scmp.ne.s32.totalorder %s147, %s161
    %p163 = scmp.eq.s32.totalorder %s18, 0
    %p164 = por %p162, %p163
    %s166 = sadd.s32 %s165, 1
    %p169 = scmp.eq.s32.totalorder %s12, 1
    %p170 = scmp.ne.s32.totalorder %s165, %s167
    %p171 = scmp.eq.s32.totalorder %s12, 0
    %p172 = por %p170, %p171
    %p173 = scmp.ne.s32.totalorder %s165, %s167
    %p174 = scmp.eq.s32.totalorder %s17, 1
    %p175 = por %p173, %p174
    %p176 = scmp.ne.s32.totalorder %s167, %s168
    %p177 = scmp.eq.s32.totalorder %s17, 0
    %p178 = por %p176, %p177
    %p179 = scmp.ne.s32.totalorder %s167, %s168
    %p180 = scmp.eq.s32.totalorder %s18, 1
    %p181 = por %p179, %p180
    %p183 = scmp.ne.s32.totalorder %s168, %s182
    %p184 = scmp.eq.s32.totalorder %s18, 0
    %p185 = por %p183, %p184
    %s186 = ssub.s32 %s19, %s31
    %s187 = ssub.s32 %s20, %s27
    %s188 = sor.u32 %s186, %s187
    %p189 = scmp.eq.s32.totalorder %s188, 0
    %s191 = sadd.s32 %s190, 1
    %s192 = scalar_select %p189, %s190, %s191
    %p195 = pneg %p189
    %p196 = scmp.eq.s32.totalorder %s12, 1
    %p197 = por %p195, %p196
    %p198 = scmp.ne.s32.totalorder %s190, %s193
    %p199 = scmp.eq.s32.totalorder %s12, 0
    %p200 = por %p198, %p199
    %p201 = scmp.ne.s32.totalorder %s190, %s193
    %p202 = scmp.eq.s32.totalorder %s17, 1
    %p203 = por %p201, %p202
    %p204 = scmp.ne.s32.totalorder %s193, %s194
    %p205 = scmp.eq.s32.totalorder %s17, 0
    %p206 = por %p204, %p205
    %p207 = scmp.ne.s32.totalorder %s193, %s194
    %p208 = scmp.eq.s32.totalorder %s18, 1
    %p209 = por %p207, %p208
    %p211 = scmp.ne.s32.totalorder %s194, %s210
    %p212 = scmp.eq.s32.totalorder %s18, 0
    %p213 = por %p211, %p212
    %p214 = scmp.le.s32.totalorder 1, %s12
    %p215 = scmp.lt.s32.totalorder %s12, 3
    %p216 = pnand %p214, %p215
    %p217 = pneg %p216
    // Predicated region
    $region9: #{forward.18} parent=5 // pred_check
      _
    $region10: #{forward.18} parent=5 // pred_check_branch
      %219 = sbr.rel (%p216) target = $region12
    $region11: #{forward.18} parent=5 // pred_region
      %s220 = ssub.s32 %s12, 1
      // Predicated region
      $region13: #{forward.18} parent=11 // pred_check
        %p221 = pneg %p157
      $region14: #{forward.18} parent=11 // pred_check_branch
        %223 = sbr.rel (%p221) target = $region16
      $region15: #{forward.18} parent=11 // pred_region
        _
      $region16: #{forward.18} parent=11 // pred_fallthru
        _
      // Predicated region
      $region17: #{forward.18} parent=11 // pred_check
        %p224 = pneg %p178
      $region18: #{forward.18} parent=11 // pred_check_branch
        %226 = sbr.rel (%p224) target = $region20
      $region19: #{forward.18} parent=11 // pred_region
        _
      $region20: #{forward.18} parent=11 // pred_fallthru
        _
    $region12: #{forward.18} parent=5 // pred_fallthru
      _
    %p227 = scmp.lt.s32.totalorder %s12, 2
    // Predicated region
    $region21: #{forward.18} parent=5 // pred_check
      %p228 = pneg %p227
    $region22: #{forward.18} parent=5 // pred_check_branch
      %230 = sbr.rel (%p228) target = $region24
    $region23: #{forward.18} parent=5 // pred_region
      // Predicated region
      $region25: #{forward.18} parent=23 // pred_check
        %p231 = pneg %p46
      $region26: #{forward.18} parent=23 // pred_check_branch
        %233 = sbr.rel (%p231) target = $region28
      $region27: #{forward.18} parent=23 // pred_region
        %s234 = smul.u32 2, %s20
        %p235 = scmp.lt.s32.totalorder %s19, 1
        %s236 = scalar_select %p235, %s19, 1
        %p237 = scmp.lt.s32.totalorder %s234, 1
        %s238 = scalar_select %p237, %s234, 1
        %s239 = smul.addr %s236, 2
        %s240 = sadd.s32 %s238, %s239
        %s241 = smul.addr %s240, 4
        %s242 = scalar_lea.vmem %s0, %s241
        %s243 = smul.u32 2, %s20
      $region28: #{forward.18} parent=23 // pred_fallthru
        _
      // Predicated region
      $region29: #{forward.18} parent=23 // pred_check
        %p244 = pneg %p74
      $region30: #{forward.18} parent=23 // pred_check_branch
        %246 = sbr.rel (%p244) target = $region32
      $region31: #{forward.18} parent=23 // pred_region
        %s247 = smul.u32 2, %s20
        %p248 = scmp.lt.s32.totalorder %s19, 1
        %s249 = scalar_select %p248, %s19, 1
        %p250 = scmp.lt.s32.totalorder %s247, 1
        %s251 = scalar_select %p250, %s247, 1
        %s252 = smul.addr %s249, 2
        %s253 = sadd.s32 %s251, %s252
        %s254 = smul.addr %s253, 4
        %s255 = scalar_lea.vmem %s1, %s254
        %s256 = smul.u32 2, %s20
      $region32: #{forward.18} parent=23 // pred_fallthru
        _
      // Predicated region
      $region33: #{forward.18} parent=23 // pred_check
        %p257 = pneg %p102
      $region34: #{forward.18} parent=23 // pred_check_branch
        %259 = sbr.rel (%p257) target = $region36
      $region35: #{forward.18} parent=23 // pred_region
        %s260 = smul.u32 2, %s20
        %p261 = scmp.lt.s32.totalorder %s19, 1
        %s262 = scalar_select %p261, %s19, 1
        %p263 = scmp.lt.s32.totalorder %s260, 1
        %s264 = scalar_select %p263, %s260, 1
        %s265 = smul.addr %s262, 2
        %s266 = sadd.s32 %s264, %s265
        %s267 = smul.addr %s266, 4
        %s268 = scalar_lea.vmem %s2, %s267
        %s269 = smul.u32 2, %s20
      $region36: #{forward.18} parent=23 // pred_fallthru
        _
      // Predicated region
      $region37: #{forward.18} parent=23 // pred_check
        %p270 = pneg %p130
      $region38: #{forward.18} parent=23 // pred_check_branch
        %272 = sbr.rel (%p270) target = $region40
      $region39: #{forward.18} parent=23 // pred_region
        %s273 = smul.u32 2, %s20
        %p274 = scmp.lt.s32.totalorder %s19, 1
        %s275 = scalar_select %p274, %s19, 1
        %p276 = scmp.lt.s32.totalorder %s273, 1
        %s277 = scalar_select %p276, %s273, 1
        %s278 = smul.addr %s275, 2
        %s279 = sadd.s32 %s277, %s278
        %s280 = smul.addr %s279, 4
        %s281 = scalar_lea.vmem %s3, %s280
        %s282 = smul.u32 2, %s20
      $region40: #{forward.18} parent=23 // pred_fallthru
        _
    $region24: #{forward.18} parent=5 // pred_fallthru
      _
    %p283 = scmp.le.s32.totalorder 1, %s12
    %p284 = scmp.lt.s32.totalorder %s12, 3
    %p285 = pnand %p283, %p284
    %p286 = pneg %p285
    // Predicated region
    $region41: #{forward.18} parent=5 // pred_check
      _
    $region42: #{forward.18} parent=5 // pred_check_branch
      %288 = sbr.rel (%p285) target = $region44
    $region43: #{forward.18} parent=5 // pred_region
      %s289 = ssub.s32 %s12, 1
      %s290 = smul.u32 2, %s22
      %p291 = scmp.lt.s32.totalorder %s21, 1
      %s292 = scalar_select %p291, %s21, 1
      %p293 = scmp.lt.s32.totalorder %s290, 1
      %s294 = scalar_select %p293, %s290, 1
      %s295 = smul.addr %s292, 2
      %s296 = sadd.s32 %s294, %s295
      %s297 = smul.addr %s296, 4
      %s298 = scalar_lea.vmem %s0, %s297
      %p299 = pneg %p52
      %p300 = pneg %p49
      %s301 = smul.u32 2, %s22
      %p302 = scmp.lt.s32.totalorder %s21, 1
      %s303 = scalar_select %p302, %s21, 1
      %p304 = scmp.lt.s32.totalorder %s301, 1
      %s305 = scalar_select %p304, %s301, 1
      %s306 = smul.addr %s303, 2
      %s307 = sadd.s32 %s305, %s306
      %s308 = smul.addr %s307, 4
      %s309 = scalar_lea.vmem %s1, %s308
      %p310 = pneg %p80
      %p311 = pneg %p77
      %s312 = smul.u32 2, %s22
      %p313 = scmp.lt.s32.totalorder %s21, 1
      %s314 = scalar_select %p313, %s21, 1
      %p315 = scmp.lt.s32.totalorder %s312, 1
      %s316 = scalar_select %p315, %s312, 1
      %s317 = smul.addr %s314, 2
      %s318 = sadd.s32 %s316, %s317
      %s319 = smul.addr %s318, 4
      %s320 = scalar_lea.vmem %s2, %s319
      %p321 = pneg %p108
      %p322 = pneg %p105
      %s323 = smul.u32 2, %s22
      %p324 = scmp.lt.s32.totalorder %s21, 1
      %s325 = scalar_select %p324, %s21, 1
      %p326 = scmp.lt.s32.totalorder %s323, 1
      %s327 = scalar_select %p326, %s323, 1
      %s328 = smul.addr %s325, 2
      %s329 = sadd.s32 %s327, %s328
      %s330 = smul.addr %s329, 4
      %s331 = scalar_lea.vmem %s3, %s330
      %p332 = pneg %p136
      %p333 = pneg %p133
      %p334 = pneg %p157
      %p335 = pneg %p154
      %p336 = pneg %p178
      %p337 = pneg %p175
      %p338 = pneg %p206
      %p339 = pneg %p203
      %s340 = smul.u32 2, %s22
      %p341 = scmp.lt.s32.totalorder %s21, 1
      %s342 = scalar_select %p341, %s21, 1
      %p343 = scmp.lt.s32.totalorder %s340, 1
      %s344 = scalar_select %p343, %s340, 1
      %s345 = smul.addr %s342, 2
      %s346 = sadd.s32 %s344, %s345
      %s347 = smul.addr %s346, 4
      %s348 = scalar_lea.vmem %s6, %s347
      %s349 = smul.u32 2, %s22
      %p350 = scmp.lt.s32.totalorder %s21, 1
      %s351 = scalar_select %p350, %s21, 1
      %p352 = scmp.lt.s32.totalorder %s349, 1
      %s353 = scalar_select %p352, %s349, 1
      %s354 = smul.addr %s351, 2
      %s355 = sadd.s32 %s353, %s354
      %s356 = smul.addr %s355, 4
      %s357 = scalar_lea.vmem %s0, %s356
      %s358 = smul.u32 2, %s22
      %s359 = smul.u32 2, %s22
      %p360 = scmp.lt.s32.totalorder %s21, 1
      %s361 = scalar_select %p360, %s21, 1
      %p362 = scmp.lt.s32.totalorder %s359, 1
      %s363 = scalar_select %p362, %s359, 1
      %s364 = smul.addr %s361, 2
      %s365 = sadd.s32 %s363, %s364
      %s366 = smul.addr %s365, 4
      %s367 = scalar_lea.vmem %s1, %s366
      %s368 = smul.u32 2, %s22
      %s369 = smul.u32 2, %s22
      %p370 = scmp.lt.s32.totalorder %s21, 1
      %s371 = scalar_select %p370, %s21, 1
      %p372 = scmp.lt.s32.totalorder %s369, 1
      %s373 = scalar_select %p372, %s369, 1
      %s374 = smul.addr %s371, 2
      %s375 = sadd.s32 %s373, %s374
      %s376 = smul.addr %s375, 4
      %s377 = scalar_lea.vmem %s2, %s376
      %s378 = smul.u32 2, %s22
      %s379 = smul.u32 2, %s22
      %p380 = scmp.lt.s32.totalorder %s21, 1
      %s381 = scalar_select %p380, %s21, 1
      %p382 = scmp.lt.s32.totalorder %s379, 1
      %s383 = scalar_select %p382, %s379, 1
      %s384 = smul.addr %s381, 2
      %s385 = sadd.s32 %s383, %s384
      %s386 = smul.addr %s385, 4
      %s387 = scalar_lea.vmem %s3, %s386
      %s388 = smul.u32 2, %s22
      %s389 = smul.u32 2, %s22
      %p390 = scmp.lt.s32.totalorder %s21, 1
      %s391 = scalar_select %p390, %s21, 1
      %p392 = scmp.lt.s32.totalorder %s389, 1
      %s393 = scalar_select %p392, %s389, 1
      %s394 = smul.addr %s391, 2
      %s395 = sadd.s32 %s393, %s394
      %s396 = smul.addr %s395, 4
      %s397 = scalar_lea.vmem %s6, %s396
      %s398 = smul.u32 2, %s22
      %v400 = vld [vmem:[%s4] sm:$0x1]
      %v401 = vld [vmem:[%s357] sm:$0xf]
      %v402 = vld [vmem:[%s357 + $0x4] sm:$0xf]
      %v403 = vunpack.c.l.bf16 %v401
      %v404 = vunpack.c.l.bf16 %v402
      %v406 = vlaneseq
      %v407 = vshrl.u32 %v406, 7
      %v408 = vsub.s32 0, %v407
      %v409 = vrot.slane %v400, %v408
      %v411 = vadd.f32 %v403, %v409
      %v412 = vadd.f32 %v404, %v409
      %v413 = vmax.f32 %v411, 0.0
      %v414 = vmax.f32 %v412, 0.0
      %v415 = vld [vmem:[%s367] sm:$0xf]
      %v416 = vld [vmem:[%s367 + $0x4] sm:$0xf]
      %v417 = vunpack.c.l.bf16 %v415
      %v418 = vunpack.c.l.bf16 %v416
      %v419 = vadd.f32 %v417, %v409
      %v420 = vadd.f32 %v418, %v409
      %v421 = vmax.f32 %v419, 0.0
      %v422 = vmax.f32 %v420, 0.0
      %v423 = vadd.f32 %v413, %v421
      %v424 = vadd.f32 %v414, %v422
      %v425 = vld [vmem:[%s377] sm:$0xf]
      %v426 = vld [vmem:[%s377 + $0x4] sm:$0xf]
      %v427 = vunpack.c.l.bf16 %v425
      %v428 = vunpack.c.l.bf16 %v426
      %v429 = vadd.f32 %v427, %v409
      %v430 = vadd.f32 %v428, %v409
      %v431 = vmax.f32 %v429, 0.0
      %v432 = vmax.f32 %v430, 0.0
      %v433 = vadd.f32 %v423, %v431
      %v434 = vadd.f32 %v424, %v432
      %v435 = vld [vmem:[%s387] sm:$0xf]
      %v436 = vld [vmem:[%s387 + $0x4] sm:$0xf]
      %v437 = vunpack.c.l.bf16 %v435
      %v438 = vunpack.c.l.bf16 %v436
      %v439 = vadd.f32 %v437, %v409
      %v440 = vadd.f32 %v438, %v409
      %v441 = vmax.f32 %v439, 0.0
      %v442 = vmax.f32 %v440, 0.0
      %v443 = vadd.f32 %v433, %v441
      %v444 = vadd.f32 %v434, %v442
      %v445 = vmul.f32 %v443, 0.25
      %v446 = vmul.f32 %v444, 0.25
      %v447 = vpack.c.bf16 %v446, %v445
      %v448 = vld [vmem:[%s5] sm:$0xf]
      %v449 = vld [vmem:[%s5 + $0x4] sm:$0xf]
      %v450 = vld [vmem:[%s5 + $0x8] sm:$0xf]
      %v451 = vld [vmem:[%s5 + $0xc] sm:$0xf]
      %v456 = vunpack.c.l.b16 %v448
      %v457 = vunpack.c.l.b16 %v449
      %v458 = vunpack.c.l.b16 %v450
      %v459 = vunpack.c.l.b16 %v451
      %v460 = vpack.c.b16 %v457, %v456
      %v461 = vpack.c.b16 %v459, %v458
      %vm464 = vcmask 261120
      %v466 = vsel %vm464, %v447, 0
      %468 = vmatprep.subr.bf16.mxu0 0
      %469 = vmatpush1.bf16.msra.mxu0 0
      %470 = vmatprep.subr.bf16.mxu0 0
      %471 = vmatpush1.bf16.msra.mxu0 0
      %472 = vmatprep.subr.bf16.mxu0 0
      %473 = vmatpush1.bf16.msra.mxu0 0
      %474 = vmatprep.subr.bf16.mxu0 0
      %475 = vmatpush1.bf16.msra.mxu0 0
      %476 = vmatprep.subr.bf16.mxu0 0
      %477 = vmatpush1.bf16.msra.mxu0 0
      %478 = vmatprep.subr.bf16.mxu0 0
      %479 = vmatpush1.bf16.msra.mxu0 0
      %480 = vmatprep.subr.bf16.mxu0 0
      %481 = vmatpush1.bf16.msra.mxu0 %v461
      %482 = vmatprep.subr.bf16.mxu0 0
      %483 = vmatpush1.bf16.msra.mxu0 %v460
      %484 = vmatprep.subr.bf16.mxu0 0
      %485 = vmatpush2.bf16.msra.mxu0 0
      %486 = vmatprep.subr.bf16.mxu0 0
      %487 = vmatpush2.bf16.msra.mxu0 0
      %488 = vmatprep.subr.bf16.mxu0 0
      %489 = vmatpush2.bf16.msra.mxu0 0
      %490 = vmatprep.subr.bf16.mxu0 0
      %491 = vmatpush2.bf16.msra.mxu0 0
      %492 = vmatprep.subr.bf16.mxu0 0
      %493 = vmatpush2.bf16.msra.mxu0 0
      %494 = vmatprep.subr.bf16.mxu0 0
      %495 = vmatpush2.bf16.msra.mxu0 0
      %496 = vmatprep.subr.bf16.mxu0 0
      %497 = vmatpush2.bf16.msra.mxu0 0
      %498 = vmatprep.subr.bf16.mxu0 0
      %499 = vmatpush2.bf16.msra.mxu0 0
      %500 = vmatprep.mubr.bf16.mxu0 0
      %501 = vmatmul.mubr.bf16.gmra.mxu0 %v466
      %v502 = vpop.f32.mrf.mxu0
      %v503 = vadd.f32 0.0, %v502
      %v504 = vpop.f32.mrf.mxu0
      %v505 = vpop.f32.mrf.mxu0
      %v506 = vadd.f32 0.0, %v505
      %v507 = vpop.f32.mrf.mxu0
      %508 = vdwg.mxu0
      %v509 = vpack.c.bf16 %v506, %v503
      %v511 = vunpack.c.l.b16 %v509
      %v512 = vunpack.c.h.b16 %v509
      %v513 = vpack.c.b16 %v511, %v511
      %v514 = vpack.c.b16 %v512, %v512
      %vm517 = vcmask 125952
      %518 = vst.msk [vmem:[%s397] sm:$0xf] %vm517, %v513
      %519 = vst.msk [vmem:[%s397 + $0x4] sm:$0xf] %vm517, %v514
      %s520 = smul.u32 2, %s22
      %p521 = scmp.lt.s32.totalorder %s21, 1
      %s522 = scalar_select %p521, %s21, 1
      %p523 = scmp.lt.s32.totalorder %s520, 1
      %s524 = scalar_select %p523, %s520, 1
      %s525 = smul.addr %s522, 2
      %s526 = sadd.s32 %s524, %s525
      %s527 = smul.addr %s526, 4
      %s528 = scalar_lea.vmem %s6, %s527
      // Predicated region
      $region45: #{forward.18} parent=43 // pred_check
        %p529 = pneg %p203
      $region46: #{forward.18} parent=43 // pred_check_branch
        %531 = sbr.rel (%p529) target = $region48
      $region47: #{forward.18} parent=43 // pred_region
        %s532 = smul.u32 2, %s22
      $region48: #{forward.18} parent=43 // pred_fallthru
        _
    $region44: #{forward.18} parent=5 // pred_fallthru
      _
    %p533 = scmp.le.s32.totalorder 2, %s12
    // Predicated region
    $region49: #{forward.18} parent=5 // pred_check
      %p534 = pneg %p533
    $region50: #{forward.18} parent=5 // pred_check_branch
      %536 = sbr.rel (%p534) target = $region52
    $region51: #{forward.18} parent=5 // pred_region
      %s537 = ssub.s32 %s12, 2
      // Predicated region
      $region53: #{forward.18} parent=51 // pred_check
        %p538 = pneg %p209
      $region54: #{forward.18} parent=51 // pred_check_branch
        %540 = sbr.rel (%p538) target = $region56
      $region55: #{forward.18} parent=51 // pred_region
        %s541 = smul.u32 2, %s24
        %p542 = scmp.lt.s32.totalorder %s23, 1
        %s543 = scalar_select %p542, %s23, 1
        %p544 = scmp.lt.s32.totalorder %s541, 1
        %s545 = scalar_select %p544, %s541, 1
        %s546 = smul.addr %s543, 2
        %s547 = sadd.s32 %s545, %s546
        %s548 = smul.addr %s547, 4
        %s549 = scalar_lea.vmem %s6, %s548
      $region56: #{forward.18} parent=51 // pred_fallthru
        _
    $region52: #{forward.18} parent=5 // pred_fallthru
      _
  $region6: #{forward.18} parent=0 // loop_footer
    %s16 = sadd.s32 1, %s12
  $region7: #{forward.18} parent=0 // loop_footer_branch
    %11 = sbr.rel target = $region3
  $region8: #{forward.18} parent=0 // loop_exit
    _

// kernel: forward.19
$region0: #{forward.19}
  #allocation0 [shape = 'u32[]', space=smem, size = 0x4, offset = 0x4, fixed_abs, tag = 'smem constant byte address 0x4 - core index']
  #allocation1 [shape = 'u32[144,128]{1,0:T(1,128)}', space=vmem, size = 0x12000, scoped, tag = 'internal scratch']
  %s0 = inlined_call_operand.vmem [shape: bf16[32,16], index: 0, kind: input, shape index: {}]
  %s1 = inlined_call_operand.vmem [shape: f32[1,16], index: 1, kind: input, shape index: {}]
  %s2 = inlined_call_operand.vmem [shape: bf16[16,16], index: 2, kind: input, shape index: {}]
  %s3 = inlined_call_operand.vmem [shape: f32[1,16], index: 3, kind: input, shape index: {}]
  %s4 = inlined_call_operand.vmem [shape: bf16[32,16], index: 4, kind: output, shape index: {}]
  %s5 = sld [smem:[#allocation0]]
  $region26: #{forward.19} parent=0
    _
  %s7 = ssub.s32 1, %s5
  %s8 = scalar_select 0, %s7, %s5
  // Predicated region
  $region2: #{forward.19} parent=0 // pred_check
    _
  $region3: #{forward.19} parent=0 // pred_check_branch
    %10 = sbr.rel (0) target = $region5
  $region4: #{forward.19} parent=0 // pred_region
    _
  $region5: #{forward.19} parent=0 // pred_fallthru
    _
  // Predicated region
  $region6: #{forward.19} parent=0 // pred_check
    _
  $region7: #{forward.19} parent=0 // pred_check_branch
    %12 = sbr.rel (0) target = $region9
  $region8: #{forward.19} parent=0 // pred_region
    _
  $region9: #{forward.19} parent=0 // pred_fallthru
    _
  // Predicated region
  $region10: #{forward.19} parent=0 // pred_check
    _
  $region11: #{forward.19} parent=0 // pred_check_branch
    %14 = sbr.rel (0) target = $region13
  $region12: #{forward.19} parent=0 // pred_region
    _
  $region13: #{forward.19} parent=0 // pred_fallthru
    _
  // Predicated region
  $region14: #{forward.19} parent=0 // pred_check
    _
  $region15: #{forward.19} parent=0 // pred_check_branch
    %16 = sbr.rel (0) target = $region17
  $region16: #{forward.19} parent=0 // pred_region
    _
  $region17: #{forward.19} parent=0 // pred_fallthru
    _
  %v18 = vld [vmem:[%s0] sm:$0xf]
  %v19 = vld [vmem:[%s0 + $0x4] sm:$0xf]
  %v20 = vld [vmem:[%s0 + $0x8] sm:$0xf]
  %v21 = vld [vmem:[%s0 + $0xc] sm:$0xf]
  %v22 = vunpack.c.l.bf16 %v18
  %v23 = vunpack.c.l.bf16 %v19
  %v24 = vunpack.c.l.bf16 %v20
  %v25 = vunpack.c.l.bf16 %v21
  %v26 = vld [vmem:[%s1] sm:$0x1]
  %v28 = vlaneseq
  %v29 = vshrl.u32 %v28, 7
  %v30 = vsub.s32 0, %v29
  %v31 = vrot.slane %v26, %v30
  %v33 = vadd.f32 %v22, %v31
  %v34 = vadd.f32 %v23, %v31
  %v35 = vadd.f32 %v24, %v31
  %v36 = vadd.f32 %v25, %v31
  %v37 = vmax.f32 %v33, 0.0
  %v38 = vmax.f32 %v34, 0.0
  %v39 = vmax.f32 %v35, 0.0
  %v40 = vmax.f32 %v36, 0.0
  %v41 = vpack.c.bf16 %v38, %v37
  %v42 = vpack.c.bf16 %v40, %v39
  %v43 = vld [vmem:[%s2] sm:$0xf]
  %v44 = vld [vmem:[%s2 + $0x4] sm:$0xf]
  %v45 = vld [vmem:[%s3] sm:$0x1]
  %v47 = vlaneseq
  %v48 = vshrl.u32 %v47, 7
  %v49 = vsub.s32 0, %v48
  %v50 = vrot.slane %v45, %v49
  %v54 = vunpack.c.l.b16 %v43
  %v55 = vunpack.c.l.b16 %v44
  %v56 = vpack.c.b16 %v55, %v54
  %vm58 = vcmask 130048
  %v60 = vsel %vm58, %v41, 0
  %v63 = vsel %vm58, %v42, 0
  %65 = vmatprep.subr.bf16.mxu0 0
  %66 = vmatpush1.bf16.msra.mxu0 0
  %67 = vmatprep.subr.bf16.mxu0 0
  %68 = vmatpush1.bf16.msra.mxu0 0
  %69 = vmatprep.subr.bf16.mxu0 0
  %70 = vmatpush1.bf16.msra.mxu0 0
  %71 = vmatprep.subr.bf16.mxu0 0
  %72 = vmatpush1.bf16.msra.mxu0 0
  %73 = vmatprep.subr.bf16.mxu0 0
  %74 = vmatpush1.bf16.msra.mxu0 0
  %75 = vmatprep.subr.bf16.mxu0 0
  %76 = vmatpush1.bf16.msra.mxu0 0
  %77 = vmatprep.subr.bf16.mxu0 0
  %78 = vmatpush1.bf16.msra.mxu0 0
  %79 = vmatprep.subr.bf16.mxu0 0
  %80 = vmatpush1.bf16.msra.mxu0 %v56
  %81 = vmatprep.subr.bf16.mxu0 0
  %82 = vmatpush2.bf16.msra.mxu0 0
  %83 = vmatprep.subr.bf16.mxu0 0
  %84 = vmatpush2.bf16.msra.mxu0 0
  %85 = vmatprep.subr.bf16.mxu0 0
  %86 = vmatpush2.bf16.msra.mxu0 0
  %87 = vmatprep.subr.bf16.mxu0 0
  %88 = vmatpush2.bf16.msra.mxu0 0
  %89 = vmatprep.subr.bf16.mxu0 0
  %90 = vmatpush2.bf16.msra.mxu0 0
  %91 = vmatprep.subr.bf16.mxu0 0
  %92 = vmatpush2.bf16.msra.mxu0 0
  %93 = vmatprep.subr.bf16.mxu0 0
  %94 = vmatpush2.bf16.msra.mxu0 0
  %95 = vmatprep.subr.bf16.mxu0 0
  %96 = vmatpush2.bf16.msra.mxu0 0
  %97 = vmatprep.mubr.bf16.mxu0 0
  %98 = vmatmul.mubr.bf16.gmra.mxu0 %v60
  %v99 = vpop.f32.mrf.mxu0
  %v100 = vadd.f32 %v50, %v99
  %v101 = vpop.f32.mrf.mxu0
  %v102 = vpop.f32.mrf.mxu0
  %v103 = vadd.f32 %v50, %v102
  %v104 = vpop.f32.mrf.mxu0
  %105 = vmatprep.mubr.bf16.mxu0 0
  %106 = vmatmul.mubr.bf16.gmra.mxu0 %v63
  %v107 = vpop.f32.mrf.mxu0
  %v108 = vadd.f32 %v50, %v107
  %v109 = vpop.f32.mrf.mxu0
  %v110 = vpop.f32.mrf.mxu0
  %v111 = vadd.f32 %v50, %v110
  %v112 = vpop.f32.mrf.mxu0
  %113 = vdwg.mxu0
  %v114 = vmax.f32 %v100, 0.0
  %v115 = vmax.f32 %v103, 0.0
  %v116 = vmax.f32 %v108, 0.0
  %v117 = vmax.f32 %v111, 0.0
  %v118 = vpack.c.bf16 %v115, %v114
  %v119 = vpack.c.bf16 %v117, %v116
  %v122 = vunpack.c.l.b16 %v118
  %v123 = vunpack.c.h.b16 %v118
  %v124 = vunpack.c.l.b16 %v119
  %v125 = vunpack.c.h.b16 %v119
  %v126 = vpack.c.b16 %v122, %v122
  %v127 = vpack.c.b16 %v123, %v123
  %v128 = vpack.c.b16 %v124, %v124
  %v129 = vpack.c.b16 %v125, %v125
  %vm134 = vcmask 125952
  %135 = vst.msk [vmem:[%s4] sm:$0xf] %vm134, %v126
  %136 = vst.msk [vmem:[%s4 + $0x4] sm:$0xf] %vm134, %v127
  %137 = vst.msk [vmem:[%s4 + $0x8] sm:$0xf] %vm134, %v128
  %138 = vst.msk [vmem:[%s4 + $0xc] sm:$0xf] %vm134, %v129
  // Predicated region
  $region18: #{forward.19} parent=0 // pred_check
    _
  $region19: #{forward.19} parent=0 // pred_check_branch
    %140 = sbr.rel (0) target = $region21
  $region20: #{forward.19} parent=0 // pred_region
    _
  $region21: #{forward.19} parent=0 // pred_fallthru
    _
  // Predicated region
  $region22: #{forward.19} parent=0 // pred_check
    _
  $region23: #{forward.19} parent=0 // pred_check_branch
    %142 = sbr.rel (0) target = $region25
  $region24: #{forward.19} parent=0 // pred_region
    _
  $region25: #{forward.19} parent=0 // pred_fallthru
    _

// kernel: forward.20
$region0: #{forward.20}
  #allocation0 [shape = 'u32[]', space=smem, size = 0x4, offset = 0x4, fixed_abs, tag = 'smem constant byte address 0x4 - core index']
  #allocation1 [shape = 'u32[144,128]{1,0:T(1,128)}', space=vmem, size = 0x12000, scoped, tag = 'internal scratch']
  %s0 = inlined_call_operand.vmem [shape: bf16[2,42,16], index: 0, kind: input, shape index: {}]
  %s1 = inlined_call_operand.vmem [shape: bf16[3,16,24], index: 1, kind: input, shape index: {}]
  %s2 = inlined_call_operand.vmem [shape: bf16[2,24,8], index: 2, kind: output, shape index: {}]
  %s3 = sld [smem:[#allocation0]]
  $region41: #{forward.20} parent=0
    _
  %s5 = ssub.s32 1, %s3
  %s6 = scalar_select 0, %s5, %s3
  loop: start=0, step=1, limit=4
  $region2: #{forward.20} parent=0 // loop_pre_header
    _
  $region3: #{forward.20} parent=0 // loop_header
    %s8 = sphi 0, %s12
    %p9 = scmp.ge.s32.totalorder %s8, 4
    %s18 = sphi 0, %s20
    %s21 = sphi 0, %s18
    %s22 = sphi 0, %s21
    %s38 = sphi 0, %s22
    %s42 = sphi 0, %s42
    %s44 = sphi 0, %s42
    %s45 = sphi 0, %s44
    %s59 = sphi 0, %s45
    %s65 = sphi 0, %s67
    %s68 = sphi 0, %s65
    %s69 = sphi 0, %s68
    %s85 = sphi 0, %s69
  $region4: #{forward.20} parent=0 // loop_header_branch
    %11 = sbr.rel (%p9) target = $region8
  $region5: #{forward.20} parent=0 // loop_body
    %s13 = ssub.s32 %s8, 1
    %s14 = ssub.s32 %s8, 2
    %s15 = sadd.s32 %s8, 1
    %s16 = ssub.s32 %s8, %s15
    %p17 = scmp.eq.s32.totalorder %s16, 0
    %s19 = sadd.s32 %s18, 1
    %s20 = scalar_select %p17, %s18, %s19
    %p23 = pneg %p17
    %p24 = scmp.eq.s32.totalorder %s8, 1
    %p25 = por %p23, %p24
    %p26 = scmp.ne.s32.totalorder %s18, %s21
    %p27 = scmp.eq.s32.totalorder %s8, 0
    %p28 = por %p26, %p27
    %p29 = scmp.ne.s32.totalorder %s18, %s21
    %p30 = scmp.eq.s32.totalorder %s13, 1
    %p31 = por %p29, %p30
    %p32 = scmp.ne.s32.totalorder %s21, %s22
    %p33 = scmp.eq.s32.totalorder %s13, 0
    %p34 = por %p32, %p33
    %p35 = scmp.ne.s32.totalorder %s21, %s22
    %p36 = scmp.eq.s32.totalorder %s14, 1
    %p37 = por %p35, %p36
    %p39 = scmp.ne.s32.totalorder %s22, %s38
    %p40 = scmp.eq.s32.totalorder %s14, 0
    %p41 = por %p39, %p40
    %s43 = sadd.s32 %s42, 1
    %p46 = scmp.eq.s32.totalorder %s8, 1
    %p47 = scmp.ne.s32.totalorder %s42, %s44
    %p48 = scmp.eq.s32.totalorder %s8, 0
    %p49 = por %p47, %p48
    %p50 = scmp.ne.s32.totalorder %s42, %s44
    %p51 = scmp.eq.s32.totalorder %s13, 1
    %p52 = por %p50, %p51
    %p53 = scmp.ne.s32.totalorder %s44, %s45
    %p54 = scmp.eq.s32.totalorder %s13, 0
    %p55 = por %p53, %p54
    %p56 = scmp.ne.s32.totalorder %s44, %s45
    %p57 = scmp.eq.s32.totalorder %s14, 1
    %p58 = por %p56, %p57
    %p60 = scmp.ne.s32.totalorder %s45, %s59
    %p61 = scmp.eq.s32.totalorder %s14, 0
    %p62 = por %p60, %p61
    %s63 = ssub.s32 %s8, %s15
    %p64 = scmp.eq.s32.totalorder %s63, 0
    %s66 = sadd.s32 %s65, 1
    %s67 = scalar_select %p64, %s65, %s66
    %p70 = pneg %p64
    %p71 = scmp.eq.s32.totalorder %s8, 1
    %p72 = por %p70, %p71
    %p73 = scmp.ne.s32.totalorder %s65, %s68
    %p74 = scmp.eq.s32.totalorder %s8, 0
    %p75 = por %p73, %p74
    %p76 = scmp.ne.s32.totalorder %s65, %s68
    %p77 = scmp.eq.s32.totalorder %s13, 1
    %p78 = por %p76, %p77
    %p79 = scmp.ne.s32.totalorder %s68, %s69
    %p80 = scmp.eq.s32.totalorder %s13, 0
    %p81 = por %p79, %p80
    %p82 = scmp.ne.s32.totalorder %s68, %s69
    %p83 = scmp.eq.s32.totalorder %s14, 1
    %p84 = por %p82, %p83
    %p86 = scmp.ne.s32.totalorder %s69, %s85
    %p87 = scmp.eq.s32.totalorder %s14, 0
    %p88 = por %p86, %p87
    %p89 = scmp.le.s32.totalorder 1, %s8
    %p90 = scmp.lt.s32.totalorder %s8, 3
    %p91 = pnand %p89, %p90
    %p92 = pneg %p91
    // Predicated region
    $region9: #{forward.20} parent=5 // pred_check
      _
    $region10: #{forward.20} parent=5 // pred_check_branch
      %94 = sbr.rel (%p91) target = $region12
    $region11: #{forward.20} parent=5 // pred_region
      %s95 = ssub.s32 %s8, 1
      // Predicated region
      $region13: #{forward.20} parent=11 // pred_check
        %p96 = pneg %p55
      $region14: #{forward.20} parent=11 // pred_check_branch
        %98 = sbr.rel (%p96) target = $region16
      $region15: #{forward.20} parent=11 // pred_region
        _
      $region16: #{forward.20} parent=11 // pred_fallthru
        _
    $region12: #{forward.20} parent=5 // pred_fallthru
      _
    %p99 = scmp.lt.s32.totalorder %s8, 2
    // Predicated region
    $region17: #{forward.20} parent=5 // pred_check
      %p100 = pneg %p99
    $region18: #{forward.20} parent=5 // pred_check_branch
      %102 = sbr.rel (%p100) target = $region20
    $region19: #{forward.20} parent=5 // pred_region
      // Predicated region
      $region21: #{forward.20} parent=19 // pred_check
        %p103 = pneg %p28
      $region22: #{forward.20} parent=19 // pred_check_branch
        %105 = sbr.rel (%p103) target = $region24
      $region23: #{forward.20} parent=19 // pred_region
        %p106 = scmp.lt.s32.totalorder %s8, 1
        %s107 = scalar_select %p106, %s8, 1
        %s108 = smul.addr %s107, 6
        %s109 = smul.addr %s108, 4
        %s110 = scalar_lea.vmem %s0, %s109
      $region24: #{forward.20} parent=19 // pred_fallthru
        _
    $region20: #{forward.20} parent=5 // pred_fallthru
      _
    %p111 = scmp.le.s32.totalorder 1, %s8
    %p112 = scmp.lt.s32.totalorder %s8, 3
    %p113 = pnand %p111, %p112
    %p114 = pneg %p113
    // Predicated region
    $region25: #{forward.20} parent=5 // pred_check
      _
    $region26: #{forward.20} parent=5 // pred_check_branch
      %116 = sbr.rel (%p113) target = $region28
    $region27: #{forward.20} parent=5 // pred_region
      %s117 = ssub.s32 %s8, 1
      %p118 = scmp.lt.s32.totalorder %s13, 1
      %s119 = scalar_select %p118, %s13, 1
      %s120 = smul.addr %s119, 6
      %s121 = smul.addr %s120, 4
      %s122 = scalar_lea.vmem %s0, %s121
      %p123 = pneg %p34
      %p124 = pneg %p31
      %p125 = pneg %p55
      %p126 = pneg %p52
      %p127 = pneg %p81
      %p128 = pneg %p78
      %p129 = scmp.lt.s32.totalorder %s13, 1
      %s130 = scalar_select %p129, %s13, 1
      %s131 = smul.addr %s130, 3
      %s132 = smul.addr %s131, 4
      %s133 = scalar_lea.vmem %s2, %s132
      %p134 = scmp.lt.s32.totalorder %s13, 1
      %s135 = scalar_select %p134, %s13, 1
      %s136 = smul.addr %s135, 6
      %s137 = smul.addr %s136, 4
      %s138 = scalar_lea.vmem %s0, %s137
      %p139 = scmp.lt.s32.totalorder %s13, 1
      %s140 = scalar_select %p139, %s13, 1
      %s141 = smul.addr %s140, 3
      %s142 = smul.addr %s141, 4
      %s143 = scalar_lea.vmem %s2, %s142
      %v145 = vld [vmem:[%s138] sm:$0xf]
      %v146 = vld [vmem:[%s138 + $0x4] sm:$0xf]
      %v147 = vld [vmem:[%s138 + $0x8] sm:$0xf]
      %v148 = vld [vmem:[%s138 + $0xc] sm:$0x1]
      %v149 = vld [vmem:[%s1] sm:$0xf]
      %v150 = vld [vmem:[%s1 + $0x4] sm:$0xf]
      %v151 = vld [vmem:[%s138] sm:$0x8]
      %v152 = vld [vmem:[%s138 + $0xc] sm:$0xf]
      %s153 = scalar_lea.vmem %s1, 8
      %v154 = vld [vmem:[%s153] sm:$0xf]
      %v155 = vld [vmem:[%s153 + $0x4] sm:$0xf]
      %v160 = vunpack.c.l.b16 %v151
      %v161 = vunpack.c.l.b16 %v146
      %v162 = vunpack.c.l.b16 %v147
      %v163 = vunpack.c.l.b16 %v152
      %v164 = vpack.c.b16 %v161, %v160
      %v165 = vpack.c.b16 %v163, %v162
      %vm166 = vcmask 1044480
      %v167 = vrot.slane %v164, 3
      %v168 = vrot.slane %v165, 3
      %v169 = vsel %vm166, %v167, %v168
      %v172 = vunpack.c.l.b16 %v154
      %v173 = vunpack.c.l.b16 %v155
      %v174 = vpack.c.b16 %v173, %v172
      %vm176 = vcmask 130048
      %v178 = vsel %vm176, %v169, 0
      %v181 = vsel %vm176, %v168, 0
      %183 = vmatprep.subr.bf16.mxu0 0
      %184 = vmatpush1.bf16.msra.mxu0 0
      %185 = vmatprep.subr.bf16.mxu0 0
      %186 = vmatpush1.bf16.msra.mxu0 0
      %187 = vmatprep.subr.bf16.mxu0 0
      %188 = vmatpush1.bf16.msra.mxu0 0
      %189 = vmatprep.subr.bf16.mxu0 0
      %190 = vmatpush1.bf16.msra.mxu0 0
      %191 = vmatprep.subr.bf16.mxu0 0
      %192 = vmatpush1.bf16.msra.mxu0 0
      %193 = vmatprep.subr.bf16.mxu0 0
      %194 = vmatpush1.bf16.msra.mxu0 0
      %195 = vmatprep.subr.bf16.mxu0 0
      %196 = vmatpush1.bf16.msra.mxu0 0
      %197 = vmatprep.subr.bf16.mxu0 0
      %198 = vmatpush1.bf16.msra.mxu0 %v174
      %199 = vmatprep.subr.bf16.mxu0 0
      %200 = vmatpush2.bf16.msra.mxu0 0
      %201 = vmatprep.subr.bf16.mxu0 0
      %202 = vmatpush2.bf16.msra.mxu0 0
      %203 = vmatprep.subr.bf16.mxu0 0
      %204 = vmatpush2.bf16.msra.mxu0 0
      %205 = vmatprep.subr.bf16.mxu0 0
      %206 = vmatpush2.bf16.msra.mxu0 0
      %207 = vmatprep.subr.bf16.mxu0 0
      %208 = vmatpush2.bf16.msra.mxu0 0
      %209 = vmatprep.subr.bf16.mxu0 0
      %210 = vmatpush2.bf16.msra.mxu0 0
      %211 = vmatprep.subr.bf16.mxu0 0
      %212 = vmatpush2.bf16.msra.mxu0 0
      %213 = vmatprep.subr.bf16.mxu0 0
      %214 = vmatpush2.bf16.msra.mxu0 0
      %215 = vmatprep.mubr.bf16.mxu0 0
      %216 = vmatmul.mubr.bf16.gmra.mxu0 %v178
      %v217 = vpop.f32.mrf.mxu0
      %v218 = vadd.f32 0.0, %v217
      %v219 = vpop.f32.mrf.mxu0
      %v220 = vpop.f32.mrf.mxu0
      %v221 = vadd.f32 0.0, %v220
      %v222 = vpop.f32.mrf.mxu0
      %223 = vmatprep.mubr.bf16.mxu0 0
      %224 = vmatmul.mubr.bf16.gmra.mxu0 %v181
      %v225 = vpop.f32.mrf.mxu0
      %v226 = vadd.f32 0.0, %v225
      %v227 = vpop.f32.mrf.mxu0
      %v228 = vpop.f32.mrf.mxu0
      %v229 = vadd.f32 0.0, %v228
      %v230 = vpop.f32.mrf.mxu0
      %231 = vdwg.mxu0
      %v234 = vunpack.c.l.b16 %v145
      %v235 = vunpack.c.l.b16 %v148
      %v236 = vpack.c.b16 %v161, %v234
      %v237 = vpack.c.b16 %v235, %v162
      %v240 = vunpack.c.l.b16 %v149
      %v241 = vunpack.c.l.b16 %v150
      %v242 = vpack.c.b16 %v241, %v240
      %v245 = vsel %vm176, %v236, 0
      %v248 = vsel %vm176, %v237, 0
      %250 = vmatprep.subr.bf16.mxu0 0
      %251 = vmatpush1.bf16.msra.mxu0 0
      %252 = vmatprep.subr.bf16.mxu0 0
      %253 = vmatpush1.bf16.msra.mxu0 0
      %254 = vmatprep.subr.bf16.mxu0 0
      %255 = vmatpush1.bf16.msra.mxu0 0
      %256 = vmatprep.subr.bf16.mxu0 0
      %257 = vmatpush1.bf16.msra.mxu0 0
      %258 = vmatprep.subr.bf16.mxu0 0
      %259 = vmatpush1.bf16.msra.mxu0 0
      %260 = vmatprep.subr.bf16.mxu0 0
      %261 = vmatpush1.bf16.msra.mxu0 0
      %262 = vmatprep.subr.bf16.mxu0 0
      %263 = vmatpush1.bf16.msra.mxu0 0
      %264 = vmatprep.subr.bf16.mxu0 0
      %265 = vmatpush1.bf16.msra.mxu0 %v242
      %266 = vmatprep.subr.bf16.mxu0 0
      %267 = vmatpush2.bf16.msra.mxu0 0
      %268 = vmatprep.subr.bf16.mxu0 0
      %269 = vmatpush2.bf16.msra.mxu0 0
      %270 = vmatprep.subr.bf16.mxu0 0
      %271 = vmatpush2.bf16.msra.mxu0 0
      %272 = vmatprep.subr.bf16.mxu0 0
      %273 = vmatpush2.bf16.msra.mxu0 0
      %274 = vmatprep.subr.bf16.mxu0 0
      %275 = vmatpush2.bf16.msra.mxu0 0
      %276 = vmatprep.subr.bf16.mxu0 0
      %277 = vmatpush2.bf16.msra.mxu0 0
      %278 = vmatprep.subr.bf16.mxu0 0
      %279 = vmatpush2.bf16.msra.mxu0 0
      %280 = vmatprep.subr.bf16.mxu0 0
      %281 = vmatpush2.bf16.msra.mxu0 0
      %282 = vmatprep.mubr.bf16.mxu0 0
      %283 = vmatmul.mubr.bf16.gmra.mxu0 %v245
      %v284 = vpop.f32.mrf.mxu0
      %v285 = vadd.f32 %v218, %v284
      %v286 = vpop.f32.mrf.mxu0
      %v287 = vpop.f32.mrf.mxu0
      %v288 = vadd.f32 %v221, %v287
      %v289 = vpop.f32.mrf.mxu0
      %290 = vmatprep.mubr.bf16.mxu0 0
      %291 = vmatmul.mubr.bf16.gmra.mxu0 %v248
      %v292 = vpop.f32.mrf.mxu0
      %v293 = vadd.f32 %v226, %v292
      %v294 = vpop.f32.mrf.mxu0
      %v295 = vpop.f32.mrf.mxu0
      %v296 = vadd.f32 %v229, %v295
      %v297 = vpop.f32.mrf.mxu0
      %298 = vdwg.mxu0
      %v299 = vld [vmem:[%s138 + $0x4] sm:$0xc]
      %v300 = vld [vmem:[%s138 + $0x8] sm:$0xf]
      %v301 = vld [vmem:[%s138 + $0xc] sm:$0xf]
      %v302 = vld [vmem:[%s138 + $0x10] sm:$0x7]
      %s303 = scalar_lea.vmem %s1, 16
      %v304 = vld [vmem:[%s303] sm:$0xf]
      %v305 = vld [vmem:[%s303 + $0x4] sm:$0xf]
      %v310 = vunpack.c.l.b16 %v299
      %v311 = vunpack.c.l.b16 %v300
      %v312 = vunpack.c.l.b16 %v301
      %v313 = vunpack.c.l.b16 %v302
      %v314 = vpack.c.b16 %v311, %v310
      %v315 = vpack.c.b16 %v313, %v312
      %vm316 = vcmask 1045504
      %v317 = vrot.slane %v314, 2
      %v318 = vrot.slane %v315, 2
      %v319 = vsel %vm316, %v317, %v318
      %v322 = vunpack.c.l.b16 %v304
      %v323 = vunpack.c.l.b16 %v305
      %v324 = vpack.c.b16 %v323, %v322
      %v327 = vsel %vm176, %v319, 0
      %v330 = vsel %vm176, %v318, 0
      %332 = vmatprep.subr.bf16.mxu0 0
      %333 = vmatpush1.bf16.msra.mxu0 0
      %334 = vmatprep.subr.bf16.mxu0 0
      %335 = vmatpush1.bf16.msra.mxu0 0
      %336 = vmatprep.subr.bf16.mxu0 0
      %337 = vmatpush1.bf16.msra.mxu0 0
      %338 = vmatprep.subr.bf16.mxu0 0
      %339 = vmatpush1.bf16.msra.mxu0 0
      %340 = vmatprep.subr.bf16.mxu0 0
      %341 = vmatpush1.bf16.msra.mxu0 0
      %342 = vmatprep.subr.bf16.mxu0 0
      %343 = vmatpush1.bf16.msra.mxu0 0
      %344 = vmatprep.subr.bf16.mxu0 0
      %345 = vmatpush1.bf16.msra.mxu0 0
      %346 = vmatprep.subr.bf16.mxu0 0
      %347 = vmatpush1.bf16.msra.mxu0 %v324
      %348 = vmatprep.subr.bf16.mxu0 0
      %349 = vmatpush2.bf16.msra.mxu0 0
      %350 = vmatprep.subr.bf16.mxu0 0
      %351 = vmatpush2.bf16.msra.mxu0 0
      %352 = vmatprep.subr.bf16.mxu0 0
      %353 = vmatpush2.bf16.msra.mxu0 0
      %354 = vmatprep.subr.bf16.mxu0 0
      %355 = vmatpush2.bf16.msra.mxu0 0
      %356 = vmatprep.subr.bf16.mxu0 0
      %357 = vmatpush2.bf16.msra.mxu0 0
      %358 = vmatprep.subr.bf16.mxu0 0
      %359 = vmatpush2.bf16.msra.mxu0 0
      %360 = vmatprep.subr.bf16.mxu0 0
      %361 = vmatpush2.bf16.msra.mxu0 0
      %362 = vmatprep.subr.bf16.mxu0 0
      %363 = vmatpush2.bf16.msra.mxu0 0
      %364 = vmatprep.mubr.bf16.mxu0 0
      %365 = vmatmul.mubr.bf16.gmra.mxu0 %v327
      %v366 = vpop.f32.mrf.mxu0
      %v367 = vadd.f32 0.0, %v366
      %v368 = vpop.f32.mrf.mxu0
      %v369 = vpop.f32.mrf.mxu0
      %v370 = vadd.f32 0.0, %v369
      %v371 = vpop.f32.mrf.mxu0
      %372 = vmatprep.mubr.bf16.mxu0 0
      %373 = vmatmul.mubr.bf16.gmra.mxu0 %v330
      %v374 = vpop.f32.mrf.mxu0
      %v375 = vadd.f32 0.0, %v374
      %v376 = vpop.f32.mrf.mxu0
      %v377 = vpop.f32.mrf.mxu0
      %v378 = vadd.f32 0.0, %v377
      %v379 = vpop.f32.mrf.mxu0
      %380 = vdwg.mxu0
      %v381 = vadd.f32 %v285, %v367
      %v382 = vadd.f32 %v288, %v370
      %v383 = vadd.f32 %v293, %v375
      %v384 = vadd.f32 %v296, %v378
      %vm389 = vcmask 1046528
      %v390 = vrot.slane %v381, 1
      %v391 = vrot.slane %v382, 1
      %v392 = vsel %vm389, %v390, %v391
      %v393 = vrot.slane %v383, 1
      %v394 = vsel %vm389, %v391, %v393
      %v395 = vrot.slane %v384, 1
      %v396 = vsel %vm389, %v393, %v395
      %397 = vrot.lane.b32.xlu0 %v392, 120
      %v398 = vpop.permute.xlu0 %397
      %399 = vrot.lane.b32.xlu0 %v394, 120
      %v400 = vpop.permute.xlu0 %399
      %401 = vrot.lane.b32.xlu0 %v396, 120
      %v402 = vpop.permute.xlu0 %401
      %v406 = vadd.f32 %v381, %v398
      %v407 = vadd.f32 %v382, %v400
      %v408 = vadd.f32 %v383, %v402
      %vm409 = vcmask 1045504
      %v410 = vrot.slane %v381, 2
      %v411 = vrot.slane %v382, 2
      %v412 = vsel %vm409, %v410, %v411
      %v413 = vrot.slane %v383, 2
      %v414 = vsel %vm409, %v411, %v413
      %v415 = vrot.slane %v384, 2
      %v416 = vsel %vm409, %v413, %v415
      %417 = vrot.lane.b32.xlu0 %v412, 112
      %v418 = vpop.permute.xlu0 %417
      %419 = vrot.lane.b32.xlu0 %v414, 112
      %v420 = vpop.permute.xlu0 %419
      %421 = vrot.lane.b32.xlu0 %v416, 112
      %v422 = vpop.permute.xlu0 %421
      %v426 = vadd.f32 %v406, %v418
      %v427 = vadd.f32 %v407, %v420
      %v428 = vadd.f32 %v408, %v422
      %v429 = vpack.c.bf16 %v427, %v426
      %v430 = vpack.c.bf16 %v428, %v428
      %v433 = vunpack.c.l.b16 %v429
      %v434 = vunpack.c.h.b16 %v429
      %v435 = vunpack.c.l.b16 %v430
      %v436 = vpack.c.b16 %v433, %v433
      %v437 = vpack.c.b16 %v434, %v434
      %v438 = vpack.c.b16 %v435, %v435
      %vm442 = vcmask 60416
      %443 = vst.msk [vmem:[%s143] sm:$0xf] %vm442, %v436
      %444 = vst.msk [vmem:[%s143 + $0x4] sm:$0xf] %vm442, %v437
      %445 = vst.msk [vmem:[%s143 + $0x8] sm:$0xf] %vm442, %v438
      %p446 = scmp.lt.s32.totalorder %s13, 1
      %s447 = scalar_select %p446, %s13, 1
      %s448 = smul.addr %s447, 3
      %s449 = smul.addr %s448, 4
      %s450 = scalar_lea.vmem %s2, %s449
      // Predicated region
      $region29: #{forward.20} parent=27 // pred_check
        %p451 = pneg %p78
      $region30: #{forward.20} parent=27 // pred_check_branch
        %453 = sbr.rel (%p451) target = $region32
      $region31: #{forward.20} parent=27 // pred_region
        _
      $region32: #{forward.20} parent=27 // pred_fallthru
        _
    $region28: #{forward.20} parent=5 // pred_fallthru
      _
    %p454 = scmp.le.s32.totalorder 2, %s8
    // Predicated region
    $region33: #{forward.20} parent=5 // pred_check
      %p455 = pneg %p454
    $region34: #{forward.20} parent=5 // pred_check_branch
      %457 = sbr.rel (%p455) target = $region36
    $region35: #{forward.20} parent=5 // pred_region
      %s458 = ssub.s32 %s8, 2
      // Predicated region
      $region37: #{forward.20} parent=35 // pred_check
        %p459 = pneg %p84
      $region38: #{forward.20} parent=35 // pred_check_branch
        %461 = sbr.rel (%p459) target = $region40
      $region39: #{forward.20} parent=35 // pred_region
        %p462 = scmp.lt.s32.totalorder %s14, 1
        %s463 = scalar_select %p462, %s14, 1
        %s464 = smul.addr %s463, 3
        %s465 = smul.addr %s464, 4
        %s466 = scalar_lea.vmem %s2, %s465
      $region40: #{forward.20} parent=35 // pred_fallthru
        _
    $region36: #{forward.20} parent=5 // pred_fallthru
      _
  $region6: #{forward.20} parent=0 // loop_footer
    %s12 = sadd.s32 1, %s8
  $region7: #{forward.20} parent=0 // loop_footer_branch
    %7 = sbr.rel target = $region3
  $region8: #{forward.20} parent=0 // loop_exit
    _

// kernel: forward.21
$region0: #{forward.21}
  #allocation0 [shape = 'u32[]', space=smem, size = 0x4, offset = 0x4, fixed_abs, tag = 'smem constant byte address 0x4 - core index']
  #allocation1 [shape = 'u32[144,128]{1,0:T(1,128)}', space=vmem, size = 0x12000, scoped, tag = 'internal scratch']
  %s0 = inlined_call_operand.vmem [shape: bf16[32,24], index: 0, kind: input, shape index: {}]
  %s1 = inlined_call_operand.vmem [shape: f32[1,24], index: 1, kind: input, shape index: {}]
  %s2 = inlined_call_operand.vmem [shape: bf16[24,16], index: 2, kind: input, shape index: {}]
  %s3 = inlined_call_operand.vmem [shape: f32[1,16], index: 3, kind: input, shape index: {}]
  %s4 = inlined_call_operand.vmem [shape: bf16[32,16], index: 4, kind: output, shape index: {}]
  %s5 = sld [smem:[#allocation0]]
  $region26: #{forward.21} parent=0
    _
  %s7 = ssub.s32 1, %s5
  %s8 = scalar_select 0, %s7, %s5
  // Predicated region
  $region2: #{forward.21} parent=0 // pred_check
    _
  $region3: #{forward.21} parent=0 // pred_check_branch
    %10 = sbr.rel (0) target = $region5
  $region4: #{forward.21} parent=0 // pred_region
    _
  $region5: #{forward.21} parent=0 // pred_fallthru
    _
  // Predicated region
  $region6: #{forward.21} parent=0 // pred_check
    _
  $region7: #{forward.21} parent=0 // pred_check_branch
    %12 = sbr.rel (0) target = $region9
  $region8: #{forward.21} parent=0 // pred_region
    _
  $region9: #{forward.21} parent=0 // pred_fallthru
    _
  // Predicated region
  $region10: #{forward.21} parent=0 // pred_check
    _
  $region11: #{forward.21} parent=0 // pred_check_branch
    %14 = sbr.rel (0) target = $region13
  $region12: #{forward.21} parent=0 // pred_region
    _
  $region13: #{forward.21} parent=0 // pred_fallthru
    _
  // Predicated region
  $region14: #{forward.21} parent=0 // pred_check
    _
  $region15: #{forward.21} parent=0 // pred_check_branch
    %16 = sbr.rel (0) target = $region17
  $region16: #{forward.21} parent=0 // pred_region
    _
  $region17: #{forward.21} parent=0 // pred_fallthru
    _
  %v18 = vld [vmem:[%s0] sm:$0xf]
  %v19 = vld [vmem:[%s0 + $0x4] sm:$0xf]
  %v20 = vld [vmem:[%s0 + $0x8] sm:$0xf]
  %v21 = vld [vmem:[%s0 + $0xc] sm:$0xf]
  %v22 = vunpack.c.l.bf16 %v18
  %v23 = vunpack.c.l.bf16 %v19
  %v24 = vunpack.c.l.bf16 %v20
  %v25 = vunpack.c.l.bf16 %v21
  %v26 = vld [vmem:[%s1] sm:$0x1]
  %v28 = vlaneseq
  %v29 = vshrl.u32 %v28, 7
  %v30 = vsub.s32 0, %v29
  %v31 = vrot.slane %v26, %v30
  %v33 = vadd.f32 %v22, %v31
  %v34 = vadd.f32 %v23, %v31
  %v35 = vadd.f32 %v24, %v31
  %v36 = vadd.f32 %v25, %v31
  %v37 = vmax.f32 %v33, 0.0
  %v38 = vmax.f32 %v34, 0.0
  %v39 = vmax.f32 %v35, 0.0
  %v40 = vmax.f32 %v36, 0.0
  %v41 = vpack.c.bf16 %v38, %v37
  %v42 = vpack.c.bf16 %v40, %v39
  %v43 = vld [vmem:[%s2] sm:$0xf]
  %v44 = vld [vmem:[%s2 + $0x4] sm:$0xf]
  %v45 = vld [vmem:[%s2 + $0x8] sm:$0xf]
  %v46 = vld [vmem:[%s3] sm:$0x1]
  %v48 = vlaneseq
  %v49 = vshrl.u32 %v48, 7
  %v50 = vsub.s32 0, %v49
  %v51 = vrot.slane %v46, %v50
  %v56 = vunpack.c.l.b16 %v43
  %v57 = vunpack.c.l.b16 %v44
  %v58 = vunpack.c.l.b16 %v45
  %v59 = vpack.c.b16 %v57, %v56
  %v60 = vpack.c.b16 %v58, %v58
  %vm62 = vcmask 195584
  %v64 = vsel %vm62, %v41, 0
  %v67 = vsel %vm62, %v42, 0
  %vm69 = vcmask 1043456
  %v71 = vsel %vm69, %v60, 0
  %73 = vmatprep.subr.bf16.mxu0 0
  %74 = vmatpush1.bf16.msra.mxu0 0
  %75 = vmatprep.subr.bf16.mxu0 0
  %76 = vmatpush1.bf16.msra.mxu0 0
  %77 = vmatprep.subr.bf16.mxu0 0
  %78 = vmatpush1.bf16.msra.mxu0 0
  %79 = vmatprep.subr.bf16.mxu0 0
  %80 = vmatpush1.bf16.msra.mxu0 0
  %81 = vmatprep.subr.bf16.mxu0 0
  %82 = vmatpush1.bf16.msra.mxu0 0
  %83 = vmatprep.subr.bf16.mxu0 0
  %84 = vmatpush1.bf16.msra.mxu0 0
  %85 = vmatprep.subr.bf16.mxu0 0
  %86 = vmatpush1.bf16.msra.mxu0 %v71
  %87 = vmatprep.subr.bf16.mxu0 0
  %88 = vmatpush1.bf16.msra.mxu0 %v59
  %89 = vmatprep.subr.bf16.mxu0 0
  %90 = vmatpush2.bf16.msra.mxu0 0
  %91 = vmatprep.subr.bf16.mxu0 0
  %92 = vmatpush2.bf16.msra.mxu0 0
  %93 = vmatprep.subr.bf16.mxu0 0
  %94 = vmatpush2.bf16.msra.mxu0 0
  %95 = vmatprep.subr.bf16.mxu0 0
  %96 = vmatpush2.bf16.msra.mxu0 0
  %97 = vmatprep.subr.bf16.mxu0 0
  %98 = vmatpush2.bf16.msra.mxu0 0
  %99 = vmatprep.subr.bf16.mxu0 0
  %100 = vmatpush2.bf16.msra.mxu0 0
  %101 = vmatprep.subr.bf16.mxu0 0
  %102 = vmatpush2.bf16.msra.mxu0 0
  %103 = vmatprep.subr.bf16.mxu0 0
  %104 = vmatpush2.bf16.msra.mxu0 0
  %105 = vmatprep.mubr.bf16.mxu0 0
  %106 = vmatmul.mubr.bf16.gmra.mxu0 %v64
  %v107 = vpop.f32.mrf.mxu0
  %v108 = vadd.f32 %v51, %v107
  %v109 = vpop.f32.mrf.mxu0
  %v110 = vpop.f32.mrf.mxu0
  %v111 = vadd.f32 %v51, %v110
  %v112 = vpop.f32.mrf.mxu0
  %113 = vmatprep.mubr.bf16.mxu0 0
  %114 = vmatmul.mubr.bf16.gmra.mxu0 %v67
  %v115 = vpop.f32.mrf.mxu0
  %v116 = vadd.f32 %v51, %v115
  %v117 = vpop.f32.mrf.mxu0
  %v118 = vpop.f32.mrf.mxu0
  %v119 = vadd.f32 %v51, %v118
  %v120 = vpop.f32.mrf.mxu0
  %121 = vdwg.mxu0
  %v122 = vmax.f32 %v108, 0.0
  %v123 = vmax.f32 %v111, 0.0
  %v124 = vmax.f32 %v116, 0.0
  %v125 = vmax.f32 %v119, 0.0
  %v126 = vpack.c.bf16 %v123, %v122
  %v127 = vpack.c.bf16 %v125, %v124
  %v130 = vunpack.c.l.b16 %v126
  %v131 = vunpack.c.h.b16 %v126
  %v132 = vunpack.c.l.b16 %v127
  %v133 = vunpack.c.h.b16 %v127
  %v134 = vpack.c.b16 %v130, %v130
  %v135 = vpack.c.b16 %v131, %v131
  %v136 = vpack.c.b16 %v132, %v132
  %v137 = vpack.c.b16 %v133, %v133
  %vm142 = vcmask 125952
  %143 = vst.msk [vmem:[%s4] sm:$0xf] %vm142, %v134
  %144 = vst.msk [vmem:[%s4 + $0x4] sm:$0xf] %vm142, %v135
  %145 = vst.msk [vmem:[%s4 + $0x8] sm:$0xf] %vm142, %v136
  %146 = vst.msk [vmem:[%s4 + $0xc] sm:$0xf] %vm142, %v137
  // Predicated region
  $region18: #{forward.21} parent=0 // pred_check
    _
  $region19: #{forward.21} parent=0 // pred_check_branch
    %148 = sbr.rel (0) target = $region21
  $region20: #{forward.21} parent=0 // pred_region
    _
  $region21: #{forward.21} parent=0 // pred_fallthru
    _
  // Predicated region
  $region22: #{forward.21} parent=0 // pred_check
    _
  $region23: #{forward.21} parent=0 // pred_check_branch
    %150 = sbr.rel (0) target = $region25
  $region24: #{forward.21} parent=0 // pred_region
    _
  $region25: #{forward.21} parent=0 // pred_fallthru
    _

// kernel: forward.23
$region0: #{forward.23}
  #allocation0 [shape = 'u32[]', space=smem, size = 0x4, offset = 0x4, fixed_abs, tag = 'smem constant byte address 0x4 - core index']
  #allocation1 [shape = 'u32[144,128]{1,0:T(1,128)}', space=vmem, size = 0x12000, scoped, tag = 'internal scratch']
  %s0 = inlined_call_operand.vmem [shape: bf16[2,16,32], index: 0, kind: input, shape index: {}]
  %s1 = inlined_call_operand.vmem [shape: f32[1,1,32], index: 1, kind: input, shape index: {}]
  %s2 = inlined_call_operand.vmem [shape: bf16[32,128], index: 2, kind: input, shape index: {}]
  %s3 = inlined_call_operand.vmem [shape: f32[1,128], index: 3, kind: input, shape index: {}]
  %s4 = inlined_call_operand.vmem [shape: f32[2,1,128], index: 4, kind: output, shape index: {}]
  %s5 = sld [smem:[#allocation0]]
  $region49: #{forward.23} parent=0
    _
  %s7 = ssub.s32 1, %s5
  %s8 = scalar_select 0, %s7, %s5
  loop: start=0, step=1, limit=4
  $region2: #{forward.23} parent=0 // loop_pre_header
    _
  $region3: #{forward.23} parent=0 // loop_header
    %s10 = sphi 0, %s14
    %p11 = scmp.ge.s32.totalorder %s10, 4
    %s20 = sphi 0, %s22
    %s23 = sphi 0, %s20
    %s24 = sphi 0, %s23
    %s40 = sphi 0, %s24
    %s44 = sphi 0, %s44
    %s46 = sphi 0, %s44
    %s47 = sphi 0, %s46
    %s61 = sphi 0, %s47
    %s65 = sphi 0, %s65
    %s67 = sphi 0, %s65
    %s68 = sphi 0, %s67
    %s82 = sphi 0, %s68
    %s86 = sphi 0, %s86
    %s88 = sphi 0, %s86
    %s89 = sphi 0, %s88
    %s103 = sphi 0, %s89
    %s109 = sphi 0, %s111
    %s112 = sphi 0, %s109
    %s113 = sphi 0, %s112
    %s129 = sphi 0, %s113
  $region4: #{forward.23} parent=0 // loop_header_branch
    %13 = sbr.rel (%p11) target = $region8
  $region5: #{forward.23} parent=0 // loop_body
    %s15 = ssub.s32 %s10, 1
    %s16 = ssub.s32 %s10, 2
    %s17 = sadd.s32 %s10, 1
    %s18 = ssub.s32 %s10, %s17
    %p19 = scmp.eq.s32.totalorder %s18, 0
    %s21 = sadd.s32 %s20, 1
    %s22 = scalar_select %p19, %s20, %s21
    %p25 = pneg %p19
    %p26 = scmp.eq.s32.totalorder %s10, 1
    %p27 = por %p25, %p26
    %p28 = scmp.ne.s32.totalorder %s20, %s23
    %p29 = scmp.eq.s32.totalorder %s10, 0
    %p30 = por %p28, %p29
    %p31 = scmp.ne.s32.totalorder %s20, %s23
    %p32 = scmp.eq.s32.totalorder %s15, 1
    %p33 = por %p31, %p32
    %p34 = scmp.ne.s32.totalorder %s23, %s24
    %p35 = scmp.eq.s32.totalorder %s15, 0
    %p36 = por %p34, %p35
    %p37 = scmp.ne.s32.totalorder %s23, %s24
    %p38 = scmp.eq.s32.totalorder %s16, 1
    %p39 = por %p37, %p38
    %p41 = scmp.ne.s32.totalorder %s24, %s40
    %p42 = scmp.eq.s32.totalorder %s16, 0
    %p43 = por %p41, %p42
    %s45 = sadd.s32 %s44, 1
    %p48 = scmp.eq.s32.totalorder %s10, 1
    %p49 = scmp.ne.s32.totalorder %s44, %s46
    %p50 = scmp.eq.s32.totalorder %s10, 0
    %p51 = por %p49, %p50
    %p52 = scmp.ne.s32.totalorder %s44, %s46
    %p53 = scmp.eq.s32.totalorder %s15, 1
    %p54 = por %p52, %p53
    %p55 = scmp.ne.s32.totalorder %s46, %s47
    %p56 = scmp.eq.s32.totalorder %s15, 0
    %p57 = por %p55, %p56
    %p58 = scmp.ne.s32.totalorder %s46, %s47
    %p59 = scmp.eq.s32.totalorder %s16, 1
    %p60 = por %p58, %p59
    %p62 = scmp.ne.s32.totalorder %s47, %s61
    %p63 = scmp.eq.s32.totalorder %s16, 0
    %p64 = por %p62, %p63
    %s66 = sadd.s32 %s65, 1
    %p69 = scmp.eq.s32.totalorder %s10, 1
    %p70 = scmp.ne.s32.totalorder %s65, %s67
    %p71 = scmp.eq.s32.totalorder %s10, 0
    %p72 = por %p70, %p71
    %p73 = scmp.ne.s32.totalorder %s65, %s67
    %p74 = scmp.eq.s32.totalorder %s15, 1
    %p75 = por %p73, %p74
    %p76 = scmp.ne.s32.totalorder %s67, %s68
    %p77 = scmp.eq.s32.totalorder %s15, 0
    %p78 = por %p76, %p77
    %p79 = scmp.ne.s32.totalorder %s67, %s68
    %p80 = scmp.eq.s32.totalorder %s16, 1
    %p81 = por %p79, %p80
    %p83 = scmp.ne.s32.totalorder %s68, %s82
    %p84 = scmp.eq.s32.totalorder %s16, 0
    %p85 = por %p83, %p84
    %s87 = sadd.s32 %s86, 1
    %p90 = scmp.eq.s32.totalorder %s10, 1
    %p91 = scmp.ne.s32.totalorder %s86, %s88
    %p92 = scmp.eq.s32.totalorder %s10, 0
    %p93 = por %p91, %p92
    %p94 = scmp.ne.s32.totalorder %s86, %s88
    %p95 = scmp.eq.s32.totalorder %s15, 1
    %p96 = por %p94, %p95
    %p97 = scmp.ne.s32.totalorder %s88, %s89
    %p98 = scmp.eq.s32.totalorder %s15, 0
    %p99 = por %p97, %p98
    %p100 = scmp.ne.s32.totalorder %s88, %s89
    %p101 = scmp.eq.s32.totalorder %s16, 1
    %p102 = por %p100, %p101
    %p104 = scmp.ne.s32.totalorder %s89, %s103
    %p105 = scmp.eq.s32.totalorder %s16, 0
    %p106 = por %p104, %p105
    %s107 = ssub.s32 %s10, %s17
    %p108 = scmp.eq.s32.totalorder %s107, 0
    %s110 = sadd.s32 %s109, 1
    %s111 = scalar_select %p108, %s109, %s110
    %p114 = pneg %p108
    %p115 = scmp.eq.s32.totalorder %s10, 1
    %p116 = por %p114, %p115
    %p117 = scmp.ne.s32.totalorder %s109, %s112
    %p118 = scmp.eq.s32.totalorder %s10, 0
    %p119 = por %p117, %p118
    %p120 = scmp.ne.s32.totalorder %s109, %s112
    %p121 = scmp.eq.s32.totalorder %s15, 1
    %p122 = por %p120, %p121
    %p123 = scmp.ne.s32.totalorder %s112, %s113
    %p124 = scmp.eq.s32.totalorder %s15, 0
    %p125 = por %p123, %p124
    %p126 = scmp.ne.s32.totalorder %s112, %s113
    %p127 = scmp.eq.s32.totalorder %s16, 1
    %p128 = por %p126, %p127
    %p130 = scmp.ne.s32.totalorder %s113, %s129
    %p131 = scmp.eq.s32.totalorder %s16, 0
    %p132 = por %p130, %p131
    %p133 = scmp.le.s32.totalorder 1, %s10
    %p134 = scmp.lt.s32.totalorder %s10, 3
    %p135 = pnand %p133, %p134
    %p136 = pneg %p135
    // Predicated region
    $region9: #{forward.23} parent=5 // pred_check
      _
    $region10: #{forward.23} parent=5 // pred_check_branch
      %138 = sbr.rel (%p135) target = $region12
    $region11: #{forward.23} parent=5 // pred_region
      %s139 = ssub.s32 %s10, 1
      // Predicated region
      $region13: #{forward.23} parent=11 // pred_check
        %p140 = pneg %p57
      $region14: #{forward.23} parent=11 // pred_check_branch
        %142 = sbr.rel (%p140) target = $region16
      $region15: #{forward.23} parent=11 // pred_region
        _
      $region16: #{forward.23} parent=11 // pred_fallthru
        _
      // Predicated region
      $region17: #{forward.23} parent=11 // pred_check
        %p143 = pneg %p78
      $region18: #{forward.23} parent=11 // pred_check_branch
        %145 = sbr.rel (%p143) target = $region20
      $region19: #{forward.23} parent=11 // pred_region
        _
      $region20: #{forward.23} parent=11 // pred_fallthru
        _
      // Predicated region
      $region21: #{forward.23} parent=11 // pred_check
        %p146 = pneg %p99
      $region22: #{forward.23} parent=11 // pred_check_branch
        %148 = sbr.rel (%p146) target = $region24
      $region23: #{forward.23} parent=11 // pred_region
        _
      $region24: #{forward.23} parent=11 // pred_fallthru
        _
    $region12: #{forward.23} parent=5 // pred_fallthru
      _
    %p149 = scmp.lt.s32.totalorder %s10, 2
    // Predicated region
    $region25: #{forward.23} parent=5 // pred_check
      %p150 = pneg %p149
    $region26: #{forward.23} parent=5 // pred_check_branch
      %152 = sbr.rel (%p150) target = $region28
    $region27: #{forward.23} parent=5 // pred_region
      // Predicated region
      $region29: #{forward.23} parent=27 // pred_check
        %p153 = pneg %p30
      $region30: #{forward.23} parent=27 // pred_check_branch
        %155 = sbr.rel (%p153) target = $region32
      $region31: #{forward.23} parent=27 // pred_region
        %p156 = scmp.lt.s32.totalorder %s10, 1
        %s157 = scalar_select %p156, %s10, 1
        %s158 = smul.addr %s157, 2
        %s159 = smul.addr %s158, 4
        %s160 = scalar_lea.vmem %s0, %s159
      $region32: #{forward.23} parent=27 // pred_fallthru
        _
    $region28: #{forward.23} parent=5 // pred_fallthru
      _
    %p161 = scmp.le.s32.totalorder 1, %s10
    %p162 = scmp.lt.s32.totalorder %s10, 3
    %p163 = pnand %p161, %p162
    %p164 = pneg %p163
    // Predicated region
    $region33: #{forward.23} parent=5 // pred_check
      _
    $region34: #{forward.23} parent=5 // pred_check_branch
      %166 = sbr.rel (%p163) target = $region36
    $region35: #{forward.23} parent=5 // pred_region
      %s167 = ssub.s32 %s10, 1
      %p168 = scmp.lt.s32.totalorder %s15, 1
      %s169 = scalar_select %p168, %s15, 1
      %s170 = smul.addr %s169, 2
      %s171 = smul.addr %s170, 4
      %s172 = scalar_lea.vmem %s0, %s171
      %p173 = pneg %p36
      %p174 = pneg %p33
      %p175 = pneg %p57
      %p176 = pneg %p54
      %p177 = pneg %p78
      %p178 = pneg %p75
      %p179 = pneg %p99
      %p180 = pneg %p96
      %p181 = pneg %p125
      %p182 = pneg %p122
      %p183 = scmp.lt.s32.totalorder %s15, 1
      %s184 = scalar_select %p183, %s15, 1
      %s185 = scalar_lea.vmem %s4, %s184
      %p186 = scmp.lt.s32.totalorder %s15, 1
      %s187 = scalar_select %p186, %s15, 1
      %s188 = smul.addr %s187, 2
      %s189 = smul.addr %s188, 4
      %s190 = scalar_lea.vmem %s0, %s189
      %p191 = scmp.lt.s32.totalorder %s15, 1
      %s192 = scalar_select %p191, %s15, 1
      %s193 = scalar_lea.vmem %s4, %s192
      %v195 = vld [vmem:[%s190] sm:$0xf]
      %v196 = vld [vmem:[%s190 + $0x4] sm:$0xf]
      %v197 = vunpack.c.l.bf16 %v195
      %v198 = vunpack.c.l.bf16 %v196
      %v199 = vld [vmem:[%s1] sm:$0x1]
      %v201 = vlaneseq
      %v202 = vshrl.u32 %v201, 7
      %v203 = vsub.s32 0, %v202
      %v204 = vrot.slane %v199, %v203
      %v206 = vadd.f32 %v197, %v204
      %v207 = vadd.f32 %v198, %v204
      %v208 = vmax.f32 %v206, 0.0
      %v209 = vmax.f32 %v207, 0.0
      %vm210 = vcmask 261120
      %v211 = vsel %vm210, %v208, 0.0
      %v212 = vsel %vm210, %v209, 0.0
      %v213 = vadd.f32 %v211, %v212
      %v214 = vrot.slane %v213, 4
      %v215 = vadd.f32 %v213, %v214
      %v216 = vrot.slane %v215, 2
      %v217 = vadd.f32 %v215, %v216
      %v218 = vrot.slane %v217, 1
      %v219 = vadd.f32 %v217, %v218
      %v220 = vrcp.pop 16.0
      %v221 = vmul.f32 %v219, %v220
      %v222 = vpack.c.bf16 %v221, %v221
      %v223 = vld [vmem:[%s2] sm:$0xf]
      %v224 = vld [vmem:[%s2 + $0x4] sm:$0xf]
      %v225 = vld [vmem:[%s2 + $0x8] sm:$0xf]
      %v226 = vld [vmem:[%s2 + $0xc] sm:$0xf]
      %v227 = vld [vmem:[%s3] sm:$0x1]
      %v232 = vunpack.c.l.b16 %v223
      %v233 = vunpack.c.l.b16 %v224
      %v234 = vunpack.c.l.b16 %v225
      %v235 = vunpack.c.l.b16 %v226
      %v236 = vpack.c.b16 %v233, %v232
      %v237 = vpack.c.b16 %v235, %v234
      %v241 = vsel %vm210, %v222, 0
      %243 = vmatprep.subr.bf16.mxu0 0
      %244 = vmatpush1.bf16.msra.mxu0 0
      %245 = vmatprep.subr.bf16.mxu0 0
      %246 = vmatpush1.bf16.msra.mxu0 0
      %247 = vmatprep.subr.bf16.mxu0 0
      %248 = vmatpush1.bf16.msra.mxu0 0
      %249 = vmatprep.subr.bf16.mxu0 0
      %250 = vmatpush1.bf16.msra.mxu0 0
      %251 = vmatprep.subr.bf16.mxu0 0
      %252 = vmatpush1.bf16.msra.mxu0 0
      %253 = vmatprep.subr.bf16.mxu0 0
      %254 = vmatpush1.bf16.msra.mxu0 0
      %255 = vmatprep.subr.bf16.mxu0 0
      %256 = vmatpush1.bf16.msra.mxu0 %v237
      %257 = vmatprep.subr.bf16.mxu0 0
      %258 = vmatpush1.bf16.msra.mxu0 %v236
      %259 = vmatprep.subr.bf16.mxu0 0
      %260 = vmatpush2.bf16.msra.mxu0 0
      %261 = vmatprep.subr.bf16.mxu0 0
      %262 = vmatpush2.bf16.msra.mxu0 0
      %263 = vmatprep.subr.bf16.mxu0 0
      %264 = vmatpush2.bf16.msra.mxu0 0
      %265 = vmatprep.subr.bf16.mxu0 0
      %266 = vmatpush2.bf16.msra.mxu0 0
      %267 = vmatprep.subr.bf16.mxu0 0
      %268 = vmatpush2.bf16.msra.mxu0 0
      %269 = vmatprep.subr.bf16.mxu0 0
      %270 = vmatpush2.bf16.msra.mxu0 0
      %271 = vmatprep.subr.bf16.mxu0 0
      %272 = vmatpush2.bf16.msra.mxu0 0
      %273 = vmatprep.subr.bf16.mxu0 0
      %274 = vmatpush2.bf16.msra.mxu0 0
      %275 = vmatprep.mubr.bf16.mxu0 0
      %276 = vmatmul.mubr.bf16.gmra.mxu0 %v241
      %v277 = vpop.f32.mrf.mxu0
      %v278 = vadd.f32 %v227, %v277
      %v279 = vpop.f32.mrf.mxu0
      %v280 = vpop.f32.mrf.mxu0
      %v281 = vpop.f32.mrf.mxu0
      %282 = vdwg.mxu0
      %283 = vst [vmem:[%s193] sm:$0x1] %v278
      %p284 = scmp.lt.s32.totalorder %s15, 1
      %s285 = scalar_select %p284, %s15, 1
      %s286 = scalar_lea.vmem %s4, %s285
      // Predicated region
      $region37: #{forward.23} parent=35 // pred_check
        %p287 = pneg %p122
      $region38: #{forward.23} parent=35 // pred_check_branch
        %289 = sbr.rel (%p287) target = $region40
      $region39: #{forward.23} parent=35 // pred_region
        _
      $region40: #{forward.23} parent=35 // pred_fallthru
        _
    $region36: #{forward.23} parent=5 // pred_fallthru
      _
    %p290 = scmp.le.s32.totalorder 2, %s10
    // Predicated region
    $region41: #{forward.23} parent=5 // pred_check
      %p291 = pneg %p290
    $region42: #{forward.23} parent=5 // pred_check_branch
      %293 = sbr.rel (%p291) target = $region44
    $region43: #{forward.23} parent=5 // pred_region
      %s294 = ssub.s32 %s10, 2
      // Predicated region
      $region45: #{forward.23} parent=43 // pred_check
        %p295 = pneg %p128
      $region46: #{forward.23} parent=43 // pred_check_branch
        %297 = sbr.rel (%p295) target = $region48
      $region47: #{forward.23} parent=43 // pred_region
        %p298 = scmp.lt.s32.totalorder %s16, 1
        %s299 = scalar_select %p298, %s16, 1
        %s300 = scalar_lea.vmem %s4, %s299
      $region48: #{forward.23} parent=43 // pred_fallthru
        _
    $region44: #{forward.23} parent=5 // pred_fallthru
      _
  $region6: #{forward.23} parent=0 // loop_footer
    %s14 = sadd.s32 1, %s10
  $region7: #{forward.23} parent=0 // loop_footer_branch
    %9 = sbr.rel target = $region3
  $region8: #{forward.23} parent=0 // loop_exit
    _

</llo_original>
